<compile_context>
chip_gen: v7x
topology: tpu7x:2x2x1
jax: 0.10.0
libtpu: 0.0.40
codegen_flags: <defaults>
</compile_context>

<pallas_src>
import functools

import jax
import jax.numpy as jnp
from jax import lax
from jax.experimental import pallas as pl
from jax.experimental.pallas import tpu as pltpu

HIDDEN_DIMS = (128, 512)   # PatchEncoder(in_channels, out_channels, [128, 512])
BN_EPS = 1e-5


# ----------------------------------------------------------------------------
# KNNGrouper (glue: data-dependent sampling / top-k / gather stay in plain JAX)
# ----------------------------------------------------------------------------
def farthest_point_sampling(coords, num_samples):
    """coords: [B, N, 3] -> indices [B, num_samples] (first point = index 0)."""
    B, N, _ = coords.shape
    gather_pt = jax.vmap(lambda pts, i: pts[i])

    def body(i, state):
        idxs, dists, last = state
        last_pt = gather_pt(coords, last)                              # [B, 3]
        d = jnp.sum((coords - last_pt[:, None, :]) ** 2, axis=-1)      # [B, N]
        dists = jnp.minimum(dists, d)
        nxt = jnp.argmax(dists, axis=-1).astype(jnp.int32)             # [B]
        idxs = idxs.at[:, i].set(nxt)
        return idxs, dists, nxt

    idxs = jnp.zeros((B, num_samples), jnp.int32)
    dists = jnp.full((B, N), jnp.inf, jnp.float32)
    last = jnp.zeros((B,), jnp.int32)
    idxs, _, _ = lax.fori_loop(1, num_samples, body, (idxs, dists, last))
    return idxs


def knn_group(coords, features, num_patches, patch_size,
              radius=None, centralize_features=False):
    """KNNGrouper.forward: returns dict(features, centers, knn_idx, fps_idx)."""
    gather = jax.vmap(lambda pts, idx: pts[idx])

    fps_idx = farthest_point_sampling(coords, num_patches)              # [B, L]
    centers = gather(coords, fps_idx)                                   # [B, L, 3]

    # pairwise squared distances centers -> all points: [B, L, N]
    d = (jnp.sum(centers ** 2, axis=-1)[..., None]
         + jnp.sum(coords ** 2, axis=-1)[:, None, :]
         - 2.0 * jnp.einsum("blc,bnc->bln", centers, coords))
    _, knn_idx = lax.top_k(-d, patch_size)                              # [B, L, K]

    nbr_coords = gather(coords, knn_idx)                                # [B, L, K, 3]
    nbr_feats = gather(features, knn_idx)                               # [B, L, K, Cf]

    nbr_coords = nbr_coords - centers[:, :, None, :]
    if radius is not None:
        nbr_coords = nbr_coords / radius
    if centralize_features:
        center_feats = gather(features, fps_idx)                        # [B, L, Cf]
        nbr_feats = nbr_feats - center_feats[:, :, None, :]

    patch_features = jnp.concatenate([nbr_coords, nbr_feats], axis=-1)  # [B, L, K, 3+Cf]
    return {"features": patch_features, "centers": centers,
            "knn_idx": knn_idx, "fps_idx": fps_idx}


# ----------------------------------------------------------------------------
# PatchEncoder parameters (deterministic synthetic init; eval-mode BN folded
# INTO the conv weights so the kernel only does matmul + bias + relu + max)
# ----------------------------------------------------------------------------
def init_patch_encoder_params(key, in_channels, out_channels, hidden_dims=HIDDEN_DIMS):
    d1, d2 = hidden_dims
    ks = jax.random.split(key, 13)

    def w(k, shape, fan_in):
        return jax.random.normal(k, shape, jnp.float32) / jnp.sqrt(float(fan_in))

    def v(k, n):
        return 0.1 * jax.random.normal(k, (n,), jnp.float32)

    # conv1: Conv1d(Cin, d1, 1) -> BN(d1) -> ReLU -> Conv1d(d1, d2, 1)
    w1, b1 = w(ks[0], (in_channels, d1), in_channels), v(ks[1], d1)
    g1, beta1 = 1.0 + v(ks[2], d1), v(ks[3], d1)
    sc1 = g1 / jnp.sqrt(1.0 + BN_EPS)           # eval-mode BN, running stats (0, 1)
    c1 = b1 * sc1 + beta1                       # conv bias folded into BN shift

    w2, b2 = w(ks[4], (d1, d2), d1), v(ks[5], d2)

    # conv2: Conv1d(2*d2, d2, 1) -> BN(d2) -> ReLU -> Conv1d(d2, out_channels, 1)
    # the 2*d2 input is cat([global_max_feature, local_feature]); split the weight.
    w3g = w(ks[6], (d2, d2), 2 * d2)            # acts on the global half of the cat
    w3l = w(ks[7], (d2, d2), 2 * d2)            # acts on the local half of the cat
    b3 = v(ks[8], d2)
    g2, beta2 = 1.0 + v(ks[9], d2), v(ks[10], d2)
    sc2 = g2 / jnp.sqrt(1.0 + BN_EPS)
    c2 = b3 * sc2 + beta2

    w4, b4 = w(ks[11], (d2, out_channels), d2), v(ks[12], out_channels)

    # Fold the BN scales directly into the weight columns (perf review):
    #   relu((x @ w1) * sc1 + c1)              == relu(x @ (w1 * sc1) + c1)
    #   relu((h @ w3l + g @ w3g) * sc2 + c2)   == relu(h @ (w3l*sc2) + g @ (w3g*sc2) + c2)
    return {
        "w1": w1 * sc1[None, :], "c1": c1.reshape(1, d1),
        "w2": w2, "b2": b2.reshape(1, d2),
        "w3g": w3g * sc2[None, :], "w3l": w3l * sc2[None, :], "c2": c2.reshape(1, d2),
        "w4": w4, "b4": b4.reshape(1, out_channels),
    }


# ----------------------------------------------------------------------------
# PatchEncoder Pallas kernel (the hot path): TP patches of K points per step
# ----------------------------------------------------------------------------
def _patch_encoder_kernel(x_ref, w1_ref, c1_ref, w2_ref, b2_ref,
                          w3g_ref, w3l_ref, c2_ref, w4_ref, b4_ref,
                          o_ref, *, tp, k):
    # in-kernel cast to bf16 (rides the VPU slot; no wrapper HBM cast pass)
    x = x_ref[...].astype(jnp.bfloat16)                             # [TP*K, Cin]

    # first_conv: 1x1 conv (BN scale folded into w1) -> ReLU -> 1x1 conv
    h1 = jnp.dot(x, w1_ref[...], preferred_element_type=jnp.float32)
    h1 = jnp.maximum(h1 + c1_ref[...], 0.0)                         # [TP*K, d1] f32
    h2 = jnp.dot(h1.astype(jnp.bfloat16), w2_ref[...],
                 preferred_element_type=jnp.float32) + b2_ref[...]  # [TP*K, d2] f32

    d2 = h2.shape[-1]
    # SEGMENTED per-patch max over the K neighbors (do NOT mix patches).
    g = jnp.max(h2.reshape(tp, k, d2), axis=1)                      # [TP, d2]

    # second_conv on cat([global, local]) = split matmuls (BN scale folded);
    # the global branch broadcasts its per-patch row over that patch's K points.
    zl = jnp.dot(h2.astype(jnp.bfloat16), w3l_ref[...],
                 preferred_element_type=jnp.float32)                # [TP*K, d2]
    zg = jnp.dot(g.astype(jnp.bfloat16), w3g_ref[...],
                 preferred_element_type=jnp.float32)                # [TP, d2]
    z = jnp.maximum(zl.reshape(tp, k, d2) + zg[:, None, :] + c2_ref[...], 0.0)
    h4 = jnp.dot(z.reshape(tp * k, d2).astype(jnp.bfloat16), w4_ref[...],
                 preferred_element_type=jnp.float32) + b4_ref[...]  # [TP*K, Cout]

    # final per-patch max-pool; lane-dense [TP, Cout] store (full sublanes)
    cout = h4.shape[-1]
    o_ref[...] = jnp.max(h4.reshape(tp, k, cout), axis=1).astype(o_ref.dtype)


def _auto_tile(BL):
    """Per-generation (tp, vmem_limit_bytes).

    tp is the number of patches processed per grid step.  We want per-step MXU
    work >> the ~0.35 us fixed step overhead, while (a) respecting v7x's 64 MiB
    per-TensorCore VMEM and (b) keeping grid >= 2 so v7x's two TensorCores can
    both be used via the "parallel" grid axis.
    """
    try:
        vmem_cap = int(pltpu.get_tpu_info().vmem_capacity_bytes)
    except Exception:
        try:
            kind = jax.devices()[0].device_kind.lower()
            vmem_cap = (64 << 20) if "v7" in kind else (128 << 20)
        except Exception:
            vmem_cap = 128 << 20
    if vmem_cap >= (100 << 20):          # v5e / v6e: 128 MiB VMEM
        tp, vmem_limit = 128, 64 << 20
    else:                                # v7x: 64 MiB per TensorCore
        tp, vmem_limit = 64, 44 << 20
    if BL >= 16:                         # keep grid >= 2 (both TCs on v7x)
        tp = min(tp, max(8, (BL // 2) // 8 * 8))
    return tp, vmem_limit


def patch_encoder_pallas(x_patches, params, *, tp=None):
    """x_patches: [B, L, K, Cin] -> embeddings [B, L, Cout]."""
    B, L, K, Cin = x_patches.shape
    assert K % 8 == 0, (
        "patch_size (K) must be a multiple of 8 so the in-kernel [TP*K, d] -> "
        "[TP, K, d] segmented-max reshape is a free sublane relayout")
    # TODO(synk): support K % 8 != 0 via in-kernel -inf masking of padded neighbors.
    d1 = params["w1"].shape[1]
    d2 = params["w2"].shape[1]
    Cout = params["w4"].shape[1]
    BL = B * L

    auto_tp, vmem_limit = _auto_tile(BL)
    if tp is None:
        tp = auto_tp
    tp = min(tp, BL)
    if tp != BL and tp % 8:
        tp = max(8, (tp // 8) * 8)        # keep the output block sublane-aligned
    grid = pl.cdiv(BL, tp)

    # Free reshape only — no wrapper-side pad or bf16 materialization.  The
    # ragged last block (when tp does not divide B*L) is handled by Pallas edge
    # masking: garbage trailing patches only ever reach masked-out output rows
    # because the per-patch max is segmented.
    x_flat = x_patches.reshape(BL * K, Cin).astype(jnp.float32)

    bf16 = lambda a: a.astype(jnp.bfloat16)
    w1, w2, w3g, w3l, w4 = (bf16(params[n]) for n in ("w1", "w2", "w3g", "w3l", "w4"))
    c1, b2, c2, b4 = (params[n].astype(jnp.float32) for n in ("c1", "b2", "c2", "b4"))

    full = lambda arr: pl.BlockSpec(arr.shape, lambda i: (0,) * arr.ndim)

    rows = grid * tp * K
    flops = rows * 2 * (Cin * d1 + d1 * d2 + d2 * d2 + d2 * Cout) + grid * tp * 2 * d2 * d2
    weight_bytes = (sum(int(a.size) * 2 for a in (w1, w2, w3g, w3l, w4))
                    + sum(int(a.size) * 4 for a in (c1, b2, c2, b4)))
    bytes_accessed = int(x_flat.size) * 4 + BL * Cout * 4 + weight_bytes

    out = pl.pallas_call(
        functools.partial(_patch_encoder_kernel, tp=tp, k=K),
        out_shape=jax.ShapeDtypeStruct((BL, Cout), jnp.float32),
        grid_spec=pltpu.PrefetchScalarGridSpec(
            num_scalar_prefetch=0,
            grid=(grid,),
            in_specs=[
                # [TP*K, Cin] input slab for the current group of TP patches
                pl.BlockSpec((tp * K, Cin), lambda i: (i, 0)),
                full(w1), full(c1),                       # first conv (BN folded)
                full(w2), full(b2),
                full(w3g), full(w3l), full(c2),           # second conv (split cat, BN folded)
                full(w4), full(b4),
            ],
            out_specs=pl.BlockSpec((tp, Cout), lambda i: (i, 0)),
        ),
        compiler_params=pltpu.CompilerParams(
            dimension_semantics=("parallel",),
            vmem_limit_bytes=int(vmem_limit)),
        cost_estimate=pl.CostEstimate(flops=int(flops), transcendentals=0,
                                      bytes_accessed=int(bytes_accessed)),
    )(x_flat, w1, c1, w2, b2, w3g, w3l, c2, w4, b4)

    return out.reshape(B, L, Cout)


# ----------------------------------------------------------------------------
# Pure-JAX references (for checking the Pallas kernel)
# ----------------------------------------------------------------------------
def patch_encoder_ref(x_patches, p):
    """f32 reference of the PyTorch encoder semantics (BN scales pre-folded)."""
    B, L, K, Cin = x_patches.shape
    xf = x_patches.reshape(B * L, K, Cin).astype(jnp.float32)
    h1 = jnp.maximum(xf @ p["w1"] + p["c1"], 0.0)
    h2 = h1 @ p["w2"] + p["b2"]
    g = jnp.max(h2, axis=1, keepdims=True)
    z = jnp.maximum(h2 @ p["w3l"] + g @ p["w3g"] + p["c2"], 0.0)
    h4 = z @ p["w4"] + p["b4"]
    return jnp.max(h4, axis=1).reshape(B, L, -1)


def patch_encoder_ref_bf16(x_patches, p):
    """Reference using the same bf16-operand / f32-accumulate casts as the kernel."""
    B, L, K, Cin = x_patches.shape
    bf = lambda a: a.astype(jnp.bfloat16)
    x = bf(x_patches.reshape(B * L, K, Cin).astype(jnp.float32))
    h1 = jnp.einsum("pki,id->pkd", x, bf(p["w1"]),
                    preferred_element_type=jnp.float32)
    h1 = jnp.maximum(h1 + p["c1"], 0.0)
    h2 = jnp.einsum("pkd,de->pke", bf(h1), bf(p["w2"]),
                    preferred_element_type=jnp.float32) + p["b2"]
    g = jnp.max(h2, axis=1)                                         # [BL, d2]
    zl = jnp.einsum("pke,ef->pkf", bf(h2), bf(p["w3l"]),
                    preferred_element_type=jnp.float32)
    zg = jnp.einsum("pe,ef->pf", bf(g), bf(p["w3g"]),
                    preferred_element_type=jnp.float32)
    z = jnp.maximum(zl + zg[:, None, :] + p["c2"], 0.0)
    h4 = jnp.einsum("pkf,fo->pko", bf(z), bf(p["w4"]),
                    preferred_element_type=jnp.float32) + p["b4"]
    return jnp.max(h4, axis=1).reshape(B, L, -1)


# ----------------------------------------------------------------------------
# PatchEmbed.forward
# ----------------------------------------------------------------------------
def patch_embed_forward(coords, features, params, num_patches, patch_size,
                        radius=None, centralize_features=False, tp=None):
    patches = knn_group(coords, features, num_patches, patch_size,
                        radius=radius, centralize_features=centralize_features)
    patches["embeddings"] = patch_encoder_pallas(patches["features"], params, tp=tp)
    return patches


if __name__ == "__main__":
    key = jax.random.PRNGKey(0)
    kc, kf, kp = jax.random.split(key, 3)

    B, N, C_feat = 2, 64, 3            # small point cloud: 2 clouds x 64 points
    num_patches, patch_size = 12, 16   # B*L = 24
    in_channels = 3 + C_feat           # centered coords + point features
    out_channels = 128

    coords = jax.random.normal(kc, (B, N, 3), jnp.float32)
    features = jax.random.normal(kf, (B, N, C_feat), jnp.float32)
    params = init_patch_encoder_params(kp, in_channels, out_channels)

    patches = patch_embed_forward(coords, features, params,
                                  num_patches, patch_size,
                                  radius=None, centralize_features=False)
    emb = jax.block_until_ready(patches["embeddings"])
    assert emb.shape == (B, num_patches, out_channels), emb.shape

    # tight check against a reference with identical bf16 casts + BN folding:
    # verifies the batched tiling / segmented per-patch max logic of the kernel.
    ref_bf16 = patch_encoder_ref_bf16(patches["features"], params)
    assert jnp.allclose(emb, ref_bf16, atol=5e-3, rtol=5e-3), \
        "Pallas kernel mismatch vs bf16-consistent reference"

    # loose check against the pure-f32 PyTorch-equivalent path (bf16 matmul
    # operands with f32 accumulation -> ~1e-2 relative is expected).
    ref_f32 = patch_encoder_ref(patches["features"], params)
    assert jnp.allclose(emb, ref_f32, atol=5e-2, rtol=2e-2), \
        "Pallas kernel mismatch vs f32 reference"

    # ragged-edge path: tp=16 does not divide B*L=24, so the last output block
    # is partially masked and trailing garbage patches must stay masked out.
    emb_ragged = jax.block_until_ready(
        patch_encoder_pallas(patches["features"], params, tp=16))
    assert emb_ragged.shape == (B, num_patches, out_channels), emb_ragged.shape
    assert jnp.allclose(emb_ragged, ref_bf16, atol=5e-3, rtol=5e-3), \
        "Pallas kernel mismatch on ragged last block"

    print("KERNEL_OK")
</pallas_src>

<mosaic_0001>
module attributes {stable_mosaic.version = 11 : i64} {
  func.func @_patch_encoder_kernel(%arg0: i32, %arg1: memref<128x6xf32, #tpu.memory_space<vmem>>, %arg2: memref<6x128xbf16, #tpu.memory_space<vmem>>, %arg3: memref<1x128xf32, #tpu.memory_space<vmem>>, %arg4: memref<128x512xbf16, #tpu.memory_space<vmem>>, %arg5: memref<1x512xf32, #tpu.memory_space<vmem>>, %arg6: memref<512x512xbf16, #tpu.memory_space<vmem>>, %arg7: memref<512x512xbf16, #tpu.memory_space<vmem>>, %arg8: memref<1x512xf32, #tpu.memory_space<vmem>>, %arg9: memref<512x128xbf16, #tpu.memory_space<vmem>>, %arg10: memref<1x128xf32, #tpu.memory_space<vmem>>, %arg11: memref<8x128xf32, #tpu.memory_space<vmem>>) attributes {dimension_semantics = [#tpu.dimension_semantics<parallel>], iteration_bounds = array<i64: 3>, scalar_prefetch = 0 : i64, scratch_operands = 0 : i64, tpu.core_type = #tpu.core_type<tc>, window_params = [{transform_indices = @transform_0, window_bounds = array<i64: 128, 6>}, {pipeline_mode = #tpu.pipeline_mode<synchronous>, transform_indices = @transform_1, window_bounds = array<i64: 6, 128>}, {pipeline_mode = #tpu.pipeline_mode<synchronous>, transform_indices = @transform_2, window_bounds = array<i64: 1, 128>}, {pipeline_mode = #tpu.pipeline_mode<synchronous>, transform_indices = @transform_3, window_bounds = array<i64: 128, 512>}, {pipeline_mode = #tpu.pipeline_mode<synchronous>, transform_indices = @transform_4, window_bounds = array<i64: 1, 512>}, {pipeline_mode = #tpu.pipeline_mode<synchronous>, transform_indices = @transform_5, window_bounds = array<i64: 512, 512>}, {pipeline_mode = #tpu.pipeline_mode<synchronous>, transform_indices = @transform_6, window_bounds = array<i64: 512, 512>}, {pipeline_mode = #tpu.pipeline_mode<synchronous>, transform_indices = @transform_7, window_bounds = array<i64: 1, 512>}, {pipeline_mode = #tpu.pipeline_mode<synchronous>, transform_indices = @transform_8, window_bounds = array<i64: 512, 128>}, {pipeline_mode = #tpu.pipeline_mode<synchronous>, transform_indices = @transform_9, window_bounds = array<i64: 1, 128>}, {transform_indices = @transform_10, window_bounds = array<i64: 8, 128>}]} {
    %c0 = arith.constant 0 : index
    %c0_0 = arith.constant 0 : index
    %0 = vector.load %arg1[%c0, %c0_0] : memref<128x6xf32, #tpu.memory_space<vmem>>, vector<128x6xf32>
    %1 = arith.truncf %0 : vector<128x6xf32> to vector<128x6xbf16>
    %c0_1 = arith.constant 0 : index
    %c0_2 = arith.constant 0 : index
    %2 = vector.load %arg2[%c0_1, %c0_2] : memref<6x128xbf16, #tpu.memory_space<vmem>>, vector<6x128xbf16>
    %cst = arith.constant dense<0.000000e+00> : vector<128x128xf32>
    %3 = tpu.matmul %1, %2, %cst {dimension_numbers = #tpu.dot_dimension_numbers<[1], [0], [0], [1], [0, 0, 1, 1], [], []>} : vector<128x6xbf16>, vector<6x128xbf16>, vector<128x128xf32> -> vector<128x128xf32>
    %c0_3 = arith.constant 0 : index
    %c0_4 = arith.constant 0 : index
    %4 = vector.load %arg3[%c0_3, %c0_4] : memref<1x128xf32, #tpu.memory_space<vmem>>, vector<1x128xf32>
    %5 = vector.broadcast %4 : vector<1x128xf32> to vector<128x128xf32>
    %6 = arith.addf %3, %5 : vector<128x128xf32>
    %cst_5 = arith.constant 0.000000e+00 : f32
    %7 = vector.broadcast %cst_5 : f32 to vector<128x128xf32>
    %8 = arith.maximumf %6, %7 : vector<128x128xf32>
    %9 = arith.truncf %8 : vector<128x128xf32> to vector<128x128xbf16>
    %c0_6 = arith.constant 0 : index
    %c0_7 = arith.constant 0 : index
    %10 = vector.load %arg4[%c0_6, %c0_7] : memref<128x512xbf16, #tpu.memory_space<vmem>>, vector<128x512xbf16>
    %cst_8 = arith.constant dense<0.000000e+00> : vector<128x512xf32>
    %11 = tpu.matmul %9, %10, %cst_8 {dimension_numbers = #tpu.dot_dimension_numbers<[1], [0], [0], [1], [0, 0, 1, 1], [], []>} : vector<128x128xbf16>, vector<128x512xbf16>, vector<128x512xf32> -> vector<128x512xf32>
    %c0_9 = arith.constant 0 : index
    %c0_10 = arith.constant 0 : index
    %12 = vector.load %arg5[%c0_9, %c0_10] : memref<1x512xf32, #tpu.memory_space<vmem>>, vector<1x512xf32>
    %13 = vector.broadcast %12 : vector<1x512xf32> to vector<128x512xf32>
    %14 = arith.addf %11, %13 : vector<128x512xf32>
    %15 = vector.shape_cast %14 : vector<128x512xf32> to vector<8x16x512xf32>
    %cst_11 = arith.constant dense<0xFF800000> : vector<8x512xf32>
    %16 = vector.multi_reduction <maximumf>, %15, %cst_11 [1] : vector<8x16x512xf32> to vector<8x512xf32>
    %17 = arith.truncf %14 : vector<128x512xf32> to vector<128x512xbf16>
    %c0_12 = arith.constant 0 : index
    %c0_13 = arith.constant 0 : index
    %18 = vector.load %arg7[%c0_12, %c0_13] : memref<512x512xbf16, #tpu.memory_space<vmem>>, vector<512x512xbf16>
    %cst_14 = arith.constant dense<0.000000e+00> : vector<128x512xf32>
    %19 = tpu.matmul %17, %18, %cst_14 {dimension_numbers = #tpu.dot_dimension_numbers<[1], [0], [0], [1], [0, 0, 1, 1], [], []>} : vector<128x512xbf16>, vector<512x512xbf16>, vector<128x512xf32> -> vector<128x512xf32>
    %20 = arith.truncf %16 : vector<8x512xf32> to vector<8x512xbf16>
    %c0_15 = arith.constant 0 : index
    %c0_16 = arith.constant 0 : index
    %21 = vector.load %arg6[%c0_15, %c0_16] : memref<512x512xbf16, #tpu.memory_space<vmem>>, vector<512x512xbf16>
    %cst_17 = arith.constant dense<0.000000e+00> : vector<8x512xf32>
    %22 = tpu.matmul %20, %21, %cst_17 {dimension_numbers = #tpu.dot_dimension_numbers<[1], [0], [0], [1], [0, 0, 1, 1], [], []>} : vector<8x512xbf16>, vector<512x512xbf16>, vector<8x512xf32> -> vector<8x512xf32>
    %23 = vector.shape_cast %19 : vector<128x512xf32> to vector<8x16x512xf32>
    %24 = vector.shape_cast %22 : vector<8x512xf32> to vector<8x1x512xf32>
    %25 = vector.broadcast %24 : vector<8x1x512xf32> to vector<8x16x512xf32>
    %26 = arith.addf %23, %25 : vector<8x16x512xf32>
    %c0_18 = arith.constant 0 : index
    %c0_19 = arith.constant 0 : index
    %27 = vector.load %arg8[%c0_18, %c0_19] : memref<1x512xf32, #tpu.memory_space<vmem>>, vector<1x512xf32>
    %28 = vector.shape_cast %27 : vector<1x512xf32> to vector<1x1x512xf32>
    %29 = vector.broadcast %28 : vector<1x1x512xf32> to vector<8x16x512xf32>
    %30 = arith.addf %26, %29 : vector<8x16x512xf32>
    %cst_20 = arith.constant 0.000000e+00 : f32
    %31 = vector.broadcast %cst_20 : f32 to vector<8x16x512xf32>
    %32 = arith.maximumf %30, %31 : vector<8x16x512xf32>
    %33 = vector.shape_cast %32 : vector<8x16x512xf32> to vector<128x512xf32>
    %34 = arith.truncf %33 : vector<128x512xf32> to vector<128x512xbf16>
    %c0_21 = arith.constant 0 : index
    %c0_22 = arith.constant 0 : index
    %35 = vector.load %arg9[%c0_21, %c0_22] : memref<512x128xbf16, #tpu.memory_space<vmem>>, vector<512x128xbf16>
    %cst_23 = arith.constant dense<0.000000e+00> : vector<128x128xf32>
    %36 = tpu.matmul %34, %35, %cst_23 {dimension_numbers = #tpu.dot_dimension_numbers<[1], [0], [0], [1], [0, 0, 1, 1], [], []>} : vector<128x512xbf16>, vector<512x128xbf16>, vector<128x128xf32> -> vector<128x128xf32>
    %c0_24 = arith.constant 0 : index
    %c0_25 = arith.constant 0 : index
    %37 = vector.load %arg10[%c0_24, %c0_25] : memref<1x128xf32, #tpu.memory_space<vmem>>, vector<1x128xf32>
    %38 = vector.broadcast %37 : vector<1x128xf32> to vector<128x128xf32>
    %39 = arith.addf %36, %38 : vector<128x128xf32>
    %40 = vector.shape_cast %39 : vector<128x128xf32> to vector<8x16x128xf32>
    %cst_26 = arith.constant dense<0xFF800000> : vector<8x128xf32>
    %41 = vector.multi_reduction <maximumf>, %40, %cst_26 [1] : vector<8x16x128xf32> to vector<8x128xf32>
    %c0_27 = arith.constant 0 : index
    %c0_28 = arith.constant 0 : index
    %42 = vector.load %arg11[%c0_27, %c0_28] : memref<8x128xf32, #tpu.memory_space<vmem>>, vector<8x128xf32>
    tpu.vector_store %arg11[%c0_27, %c0_28], %41 {strides = array<i32>} : memref<8x128xf32, #tpu.memory_space<vmem>>, vector<8x128xf32>,
    return
  }
  func.func @transform_0(%arg0: i32) -> (i32, i32) {
    %c0_i32 = arith.constant 0 : i32
    %c0_i32_0 = arith.constant 0 : i32
    return %arg0, %c0_i32 : i32, i32
  }
  func.func @transform_1(%arg0: i32) -> (i32, i32) {
    %c0_i32 = arith.constant 0 : i32
    %c0_i32_0 = arith.constant 0 : i32
    %c0_i32_1 = arith.constant 0 : i32
    return %c0_i32, %c0_i32_0 : i32, i32
  }
  func.func @transform_2(%arg0: i32) -> (i32, i32) {
    %c0_i32 = arith.constant 0 : i32
    %c0_i32_0 = arith.constant 0 : i32
    %c0_i32_1 = arith.constant 0 : i32
    return %c0_i32, %c0_i32_0 : i32, i32
  }
  func.func @transform_3(%arg0: i32) -> (i32, i32) {
    %c0_i32 = arith.constant 0 : i32
    %c0_i32_0 = arith.constant 0 : i32
    %c0_i32_1 = arith.constant 0 : i32
    return %c0_i32, %c0_i32_0 : i32, i32
  }
  func.func @transform_4(%arg0: i32) -> (i32, i32) {
    %c0_i32 = arith.constant 0 : i32
    %c0_i32_0 = arith.constant 0 : i32
    %c0_i32_1 = arith.constant 0 : i32
    return %c0_i32, %c0_i32_0 : i32, i32
  }
  func.func @transform_5(%arg0: i32) -> (i32, i32) {
    %c0_i32 = arith.constant 0 : i32
    %c0_i32_0 = arith.constant 0 : i32
    %c0_i32_1 = arith.constant 0 : i32
    return %c0_i32, %c0_i32_0 : i32, i32
  }
  func.func @transform_6(%arg0: i32) -> (i32, i32) {
    %c0_i32 = arith.constant 0 : i32
    %c0_i32_0 = arith.constant 0 : i32
    %c0_i32_1 = arith.constant 0 : i32
    return %c0_i32, %c0_i32_0 : i32, i32
  }
  func.func @transform_7(%arg0: i32) -> (i32, i32) {
    %c0_i32 = arith.constant 0 : i32
    %c0_i32_0 = arith.constant 0 : i32
    %c0_i32_1 = arith.constant 0 : i32
    return %c0_i32, %c0_i32_0 : i32, i32
  }
  func.func @transform_8(%arg0: i32) -> (i32, i32) {
    %c0_i32 = arith.constant 0 : i32
    %c0_i32_0 = arith.constant 0 : i32
    %c0_i32_1 = arith.constant 0 : i32
    return %c0_i32, %c0_i32_0 : i32, i32
  }
  func.func @transform_9(%arg0: i32) -> (i32, i32) {
    %c0_i32 = arith.constant 0 : i32
    %c0_i32_0 = arith.constant 0 : i32
    %c0_i32_1 = arith.constant 0 : i32
    return %c0_i32, %c0_i32_0 : i32, i32
  }
  func.func @transform_10(%arg0: i32) -> (i32, i32) {
    %c0_i32 = arith.constant 0 : i32
    %c0_i32_0 = arith.constant 0 : i32
    return %arg0, %c0_i32 : i32, i32
  }
}

</mosaic_0001>

<llo_original>
// kernel: tpu_custom_call.1
$region0: #{tpu_custom_call.1}
  #allocation0 [shape = 'u32[]', space=smem, size = 0x4, offset = 0x4, fixed_abs, tag = 'smem constant byte address 0x4 - core index']
  #allocation1 [shape = 'u32[144,128]{1,0:T(1,128)}', space=vmem, size = 0x12000, scoped, tag = 'internal scratch']
  %s0 = inlined_call_operand.hbm [shape: f32[384,6], index: 0, kind: input, shape index: {}]
  %s1 = inlined_call_operand.hbm [shape: bf16[6,128], index: 1, kind: input, shape index: {}]
  %s2 = inlined_call_operand.hbm [shape: f32[1,128], index: 2, kind: input, shape index: {}]
  %s3 = inlined_call_operand.hbm [shape: bf16[128,512], index: 3, kind: input, shape index: {}]
  %s4 = inlined_call_operand.hbm [shape: f32[1,512], index: 4, kind: input, shape index: {}]
  %s5 = inlined_call_operand.hbm [shape: bf16[512,512], index: 5, kind: input, shape index: {}]
  %s6 = inlined_call_operand.hbm [shape: bf16[512,512], index: 6, kind: input, shape index: {}]
  %s7 = inlined_call_operand.hbm [shape: f32[1,512], index: 7, kind: input, shape index: {}]
  %s8 = inlined_call_operand.hbm [shape: bf16[512,128], index: 8, kind: input, shape index: {}]
  %s9 = inlined_call_operand.hbm [shape: f32[1,128], index: 9, kind: input, shape index: {}]
  %s10 = inlined_call_operand.hbm [shape: f32[24,128], index: 10, kind: output, shape index: {}]
  %s11 = sld [smem:[#allocation0]]
  $region113: #{tpu_custom_call.1} parent=0
    _
  %s13 = ssub.s32 1, %s11
  %s14 = scalar_select 0, %s13, %s11
  $region1: #{tpu_custom_call.1} parent=0
    #allocation2 [shape = 'u8[131072]{0}', space=vmem, size = 0x20000, scoped, tag = 'input window, operand 0']
    #allocation3 [shape = 's32[2]{0}', space=sflag, size = 0x8, scoped, tag = 'scoped memory for tpu_custom_call.1']
    #allocation4 [shape = 's32[2]{0}', space=sflag, size = 0x8, scoped, tag = 'scoped memory for tpu_custom_call.1']
    #allocation5 [shape = 'u8[2048]{0}', space=vmem, size = 0x800, scoped, tag = 'input window, operand 1, single buffered']
    #allocation6 [shape = 's32[1]{0}', space=sflag, size = 0x4, scoped, tag = 'scoped memory for tpu_custom_call.1']
    #allocation7 [shape = 'u8[512]{0}', space=vmem, size = 0x400, scoped, tag = 'input window, operand 2, single buffered']
    #allocation8 [shape = 'u8[131072]{0}', space=vmem, size = 0x20000, scoped, tag = 'input window, operand 3, single buffered']
    #allocation9 [shape = 's32[1]{0}', space=sflag, size = 0x4, scoped, tag = 'scoped memory for tpu_custom_call.1']
    #allocation10 [shape = 'u8[2048]{0}', space=vmem, size = 0x800, scoped, tag = 'input window, operand 4, single buffered']
    #allocation11 [shape = 'u8[524288]{0}', space=vmem, size = 0x80000, scoped, tag = 'input window, operand 5, single buffered']
    #allocation12 [shape = 's32[1]{0}', space=sflag, size = 0x4, scoped, tag = 'scoped memory for tpu_custom_call.1']
    #allocation13 [shape = 'u8[524288]{0}', space=vmem, size = 0x80000, scoped, tag = 'input window, operand 6, single buffered']
    #allocation14 [shape = 'u8[2048]{0}', space=vmem, size = 0x800, scoped, tag = 'input window, operand 7, single buffered']
    #allocation15 [shape = 's32[1]{0}', space=sflag, size = 0x4, scoped, tag = 'scoped memory for tpu_custom_call.1']
    #allocation16 [shape = 'u8[131072]{0}', space=vmem, size = 0x20000, scoped, tag = 'input window, operand 8, single buffered']
    #allocation17 [shape = 'u8[512]{0}', space=vmem, size = 0x400, scoped, tag = 'input window, operand 9, single buffered']
    #allocation18 [shape = 's32[1]{0}', space=sflag, size = 0x4, scoped, tag = 'scoped memory for tpu_custom_call.1']
    #allocation19 [shape = 'u8[8192]{0}', space=vmem, size = 0x2000, scoped, tag = 'output window, operand 0']
    %15 = vsyncpa [#allocation3], 0
    %s16 = scalar_lea.sflag [#allocation3], 1
    %17 = vsyncpa %s16, 0
    %18 = vsyncpa [#allocation6], 0
    %19 = vsyncpa [#allocation9], 0
    %20 = vsyncpa [#allocation12], 0
    %21 = vsyncpa [#allocation15], 0
    %22 = vsyncpa [#allocation18], 0
    %23 = vsyncpa [#allocation4], 0
    %s24 = scalar_lea.sflag [#allocation4], 1
    %25 = vsyncpa %s24, 0
    loop: start=0, step=1, limit=5
    $region2: #{tpu_custom_call.1} parent=1 // loop_pre_header
      _
    $region3: #{tpu_custom_call.1} parent=1 // loop_header
      %s27 = sphi 0, %s31
      %p28 = scmp.ge.s32.totalorder %s27, 5
      %s37 = sphi 0, %s39
      %s40 = sphi 0, %s37
      %s41 = sphi 0, %s40
      %s57 = sphi 0, %s41
      %s61 = sphi 0, %s61
      %s63 = sphi 0, %s61
      %s64 = sphi 0, %s63
      %s78 = sphi 0, %s64
      %s82 = sphi 0, %s82
      %s84 = sphi 0, %s82
      %s85 = sphi 0, %s84
      %s99 = sphi 0, %s85
      %s103 = sphi 0, %s103
      %s105 = sphi 0, %s103
      %s106 = sphi 0, %s105
      %s120 = sphi 0, %s106
      %s124 = sphi 0, %s124
      %s126 = sphi 0, %s124
      %s127 = sphi 0, %s126
      %s141 = sphi 0, %s127
      %s145 = sphi 0, %s145
      %s147 = sphi 0, %s145
      %s148 = sphi 0, %s147
      %s162 = sphi 0, %s148
      %s166 = sphi 0, %s166
      %s168 = sphi 0, %s166
      %s169 = sphi 0, %s168
      %s183 = sphi 0, %s169
      %s187 = sphi 0, %s187
      %s189 = sphi 0, %s187
      %s190 = sphi 0, %s189
      %s204 = sphi 0, %s190
      %s208 = sphi 0, %s208
      %s210 = sphi 0, %s208
      %s211 = sphi 0, %s210
      %s225 = sphi 0, %s211
      %s229 = sphi 0, %s229
      %s231 = sphi 0, %s229
      %s232 = sphi 0, %s231
      %s246 = sphi 0, %s232
      %s252 = sphi 0, %s254
      %s255 = sphi 0, %s252
      %s256 = sphi 0, %s255
      %s272 = sphi 0, %s256
    $region4: #{tpu_custom_call.1} parent=1 // loop_header_branch
      %30 = sbr.rel (%p28) target = $region8
    $region5: #{tpu_custom_call.1} parent=1 // loop_body
      %s32 = ssub.s32 %s27, 1
      %s33 = ssub.s32 %s27, 2
      %s34 = sadd.s32 %s27, 1
      %s35 = ssub.s32 %s27, %s34
      %p36 = scmp.eq.s32.totalorder %s35, 0
      %s38 = sadd.s32 %s37, 1
      %s39 = scalar_select %p36, %s37, %s38
      %p42 = pneg %p36
      %p43 = scmp.eq.s32.totalorder %s27, 2
      %p44 = por %p42, %p43
      %p45 = scmp.ne.s32.totalorder %s37, %s40
      %p46 = scmp.eq.s32.totalorder %s27, 0
      %p47 = por %p45, %p46
      %p48 = scmp.ne.s32.totalorder %s37, %s40
      %p49 = scmp.eq.s32.totalorder %s32, 2
      %p50 = por %p48, %p49
      %p51 = scmp.ne.s32.totalorder %s40, %s41
      %p52 = scmp.eq.s32.totalorder %s32, 0
      %p53 = por %p51, %p52
      %p54 = scmp.ne.s32.totalorder %s40, %s41
      %p55 = scmp.eq.s32.totalorder %s33, 2
      %p56 = por %p54, %p55
      %p58 = scmp.ne.s32.totalorder %s41, %s57
      %p59 = scmp.eq.s32.totalorder %s33, 0
      %p60 = por %p58, %p59
      %s62 = sadd.s32 %s61, 1
      %p65 = scmp.eq.s32.totalorder %s27, 2
      %p66 = scmp.ne.s32.totalorder %s61, %s63
      %p67 = scmp.eq.s32.totalorder %s27, 0
      %p68 = por %p66, %p67
      %p69 = scmp.ne.s32.totalorder %s61, %s63
      %p70 = scmp.eq.s32.totalorder %s32, 2
      %p71 = por %p69, %p70
      %p72 = scmp.ne.s32.totalorder %s63, %s64
      %p73 = scmp.eq.s32.totalorder %s32, 0
      %p74 = por %p72, %p73
      %p75 = scmp.ne.s32.totalorder %s63, %s64
      %p76 = scmp.eq.s32.totalorder %s33, 2
      %p77 = por %p75, %p76
      %p79 = scmp.ne.s32.totalorder %s64, %s78
      %p80 = scmp.eq.s32.totalorder %s33, 0
      %p81 = por %p79, %p80
      %s83 = sadd.s32 %s82, 1
      %p86 = scmp.eq.s32.totalorder %s27, 2
      %p87 = scmp.ne.s32.totalorder %s82, %s84
      %p88 = scmp.eq.s32.totalorder %s27, 0
      %p89 = por %p87, %p88
      %p90 = scmp.ne.s32.totalorder %s82, %s84
      %p91 = scmp.eq.s32.totalorder %s32, 2
      %p92 = por %p90, %p91
      %p93 = scmp.ne.s32.totalorder %s84, %s85
      %p94 = scmp.eq.s32.totalorder %s32, 0
      %p95 = por %p93, %p94
      %p96 = scmp.ne.s32.totalorder %s84, %s85
      %p97 = scmp.eq.s32.totalorder %s33, 2
      %p98 = por %p96, %p97
      %p100 = scmp.ne.s32.totalorder %s85, %s99
      %p101 = scmp.eq.s32.totalorder %s33, 0
      %p102 = por %p100, %p101
      %s104 = sadd.s32 %s103, 1
      %p107 = scmp.eq.s32.totalorder %s27, 2
      %p108 = scmp.ne.s32.totalorder %s103, %s105
      %p109 = scmp.eq.s32.totalorder %s27, 0
      %p110 = por %p108, %p109
      %p111 = scmp.ne.s32.totalorder %s103, %s105
      %p112 = scmp.eq.s32.totalorder %s32, 2
      %p113 = por %p111, %p112
      %p114 = scmp.ne.s32.totalorder %s105, %s106
      %p115 = scmp.eq.s32.totalorder %s32, 0
      %p116 = por %p114, %p115
      %p117 = scmp.ne.s32.totalorder %s105, %s106
      %p118 = scmp.eq.s32.totalorder %s33, 2
      %p119 = por %p117, %p118
      %p121 = scmp.ne.s32.totalorder %s106, %s120
      %p122 = scmp.eq.s32.totalorder %s33, 0
      %p123 = por %p121, %p122
      %s125 = sadd.s32 %s124, 1
      %p128 = scmp.eq.s32.totalorder %s27, 2
      %p129 = scmp.ne.s32.totalorder %s124, %s126
      %p130 = scmp.eq.s32.totalorder %s27, 0
      %p131 = por %p129, %p130
      %p132 = scmp.ne.s32.totalorder %s124, %s126
      %p133 = scmp.eq.s32.totalorder %s32, 2
      %p134 = por %p132, %p133
      %p135 = scmp.ne.s32.totalorder %s126, %s127
      %p136 = scmp.eq.s32.totalorder %s32, 0
      %p137 = por %p135, %p136
      %p138 = scmp.ne.s32.totalorder %s126, %s127
      %p139 = scmp.eq.s32.totalorder %s33, 2
      %p140 = por %p138, %p139
      %p142 = scmp.ne.s32.totalorder %s127, %s141
      %p143 = scmp.eq.s32.totalorder %s33, 0
      %p144 = por %p142, %p143
      %s146 = sadd.s32 %s145, 1
      %p149 = scmp.eq.s32.totalorder %s27, 2
      %p150 = scmp.ne.s32.totalorder %s145, %s147
      %p151 = scmp.eq.s32.totalorder %s27, 0
      %p152 = por %p150, %p151
      %p153 = scmp.ne.s32.totalorder %s145, %s147
      %p154 = scmp.eq.s32.totalorder %s32, 2
      %p155 = por %p153, %p154
      %p156 = scmp.ne.s32.totalorder %s147, %s148
      %p157 = scmp.eq.s32.totalorder %s32, 0
      %p158 = por %p156, %p157
      %p159 = scmp.ne.s32.totalorder %s147, %s148
      %p160 = scmp.eq.s32.totalorder %s33, 2
      %p161 = por %p159, %p160
      %p163 = scmp.ne.s32.totalorder %s148, %s162
      %p164 = scmp.eq.s32.totalorder %s33, 0
      %p165 = por %p163, %p164
      %s167 = sadd.s32 %s166, 1
      %p170 = scmp.eq.s32.totalorder %s27, 2
      %p171 = scmp.ne.s32.totalorder %s166, %s168
      %p172 = scmp.eq.s32.totalorder %s27, 0
      %p173 = por %p171, %p172
      %p174 = scmp.ne.s32.totalorder %s166, %s168
      %p175 = scmp.eq.s32.totalorder %s32, 2
      %p176 = por %p174, %p175
      %p177 = scmp.ne.s32.totalorder %s168, %s169
      %p178 = scmp.eq.s32.totalorder %s32, 0
      %p179 = por %p177, %p178
      %p180 = scmp.ne.s32.totalorder %s168, %s169
      %p181 = scmp.eq.s32.totalorder %s33, 2
      %p182 = por %p180, %p181
      %p184 = scmp.ne.s32.totalorder %s169, %s183
      %p185 = scmp.eq.s32.totalorder %s33, 0
      %p186 = por %p184, %p185
      %s188 = sadd.s32 %s187, 1
      %p191 = scmp.eq.s32.totalorder %s27, 2
      %p192 = scmp.ne.s32.totalorder %s187, %s189
      %p193 = scmp.eq.s32.totalorder %s27, 0
      %p194 = por %p192, %p193
      %p195 = scmp.ne.s32.totalorder %s187, %s189
      %p196 = scmp.eq.s32.totalorder %s32, 2
      %p197 = por %p195, %p196
      %p198 = scmp.ne.s32.totalorder %s189, %s190
      %p199 = scmp.eq.s32.totalorder %s32, 0
      %p200 = por %p198, %p199
      %p201 = scmp.ne.s32.totalorder %s189, %s190
      %p202 = scmp.eq.s32.totalorder %s33, 2
      %p203 = por %p201, %p202
      %p205 = scmp.ne.s32.totalorder %s190, %s204
      %p206 = scmp.eq.s32.totalorder %s33, 0
      %p207 = por %p205, %p206
      %s209 = sadd.s32 %s208, 1
      %p212 = scmp.eq.s32.totalorder %s27, 2
      %p213 = scmp.ne.s32.totalorder %s208, %s210
      %p214 = scmp.eq.s32.totalorder %s27, 0
      %p215 = por %p213, %p214
      %p216 = scmp.ne.s32.totalorder %s208, %s210
      %p217 = scmp.eq.s32.totalorder %s32, 2
      %p218 = por %p216, %p217
      %p219 = scmp.ne.s32.totalorder %s210, %s211
      %p220 = scmp.eq.s32.totalorder %s32, 0
      %p221 = por %p219, %p220
      %p222 = scmp.ne.s32.totalorder %s210, %s211
      %p223 = scmp.eq.s32.totalorder %s33, 2
      %p224 = por %p222, %p223
      %p226 = scmp.ne.s32.totalorder %s211, %s225
      %p227 = scmp.eq.s32.totalorder %s33, 0
      %p228 = por %p226, %p227
      %s230 = sadd.s32 %s229, 1
      %p233 = scmp.eq.s32.totalorder %s27, 2
      %p234 = scmp.ne.s32.totalorder %s229, %s231
      %p235 = scmp.eq.s32.totalorder %s27, 0
      %p236 = por %p234, %p235
      %p237 = scmp.ne.s32.totalorder %s229, %s231
      %p238 = scmp.eq.s32.totalorder %s32, 2
      %p239 = por %p237, %p238
      %p240 = scmp.ne.s32.totalorder %s231, %s232
      %p241 = scmp.eq.s32.totalorder %s32, 0
      %p242 = por %p240, %p241
      %p243 = scmp.ne.s32.totalorder %s231, %s232
      %p244 = scmp.eq.s32.totalorder %s33, 2
      %p245 = por %p243, %p244
      %p247 = scmp.ne.s32.totalorder %s232, %s246
      %p248 = scmp.eq.s32.totalorder %s33, 0
      %p249 = por %p247, %p248
      %s250 = ssub.s32 %s27, %s34
      %p251 = scmp.eq.s32.totalorder %s250, 0
      %s253 = sadd.s32 %s252, 1
      %s254 = scalar_select %p251, %s252, %s253
      %p257 = pneg %p251
      %p258 = scmp.eq.s32.totalorder %s27, 2
      %p259 = por %p257, %p258
      %p260 = scmp.ne.s32.totalorder %s252, %s255
      %p261 = scmp.eq.s32.totalorder %s27, 0
      %p262 = por %p260, %p261
      %p263 = scmp.ne.s32.totalorder %s252, %s255
      %p264 = scmp.eq.s32.totalorder %s32, 2
      %p265 = por %p263, %p264
      %p266 = scmp.ne.s32.totalorder %s255, %s256
      %p267 = scmp.eq.s32.totalorder %s32, 0
      %p268 = por %p266, %p267
      %p269 = scmp.ne.s32.totalorder %s255, %s256
      %p270 = scmp.eq.s32.totalorder %s33, 2
      %p271 = por %p269, %p270
      %p273 = scmp.ne.s32.totalorder %s256, %s272
      %p274 = scmp.eq.s32.totalorder %s33, 0
      %p275 = por %p273, %p274
      %p276 = scmp.le.s32.totalorder 1, %s27
      %p277 = scmp.lt.s32.totalorder %s27, 4
      %p278 = pnand %p276, %p277
      %p279 = pneg %p278
      // Predicated region
      $region9: #{tpu_custom_call.1} parent=5 // pred_check
        _
      $region10: #{tpu_custom_call.1} parent=5 // pred_check_branch
        %281 = sbr.rel (%p278) target = $region12
      $region11: #{tpu_custom_call.1} parent=5 // pred_region
        %s282 = ssub.s32 %s27, 1
        // Predicated region
        $region13: #{tpu_custom_call.1} parent=11 // pred_check
          %p283 = pneg %p74
        $region14: #{tpu_custom_call.1} parent=11 // pred_check_branch
          %285 = sbr.rel (%p283) target = $region16
        $region15: #{tpu_custom_call.1} parent=11 // pred_region
          %s287 = ssub.s32 64, 64
          %288 = vsyncadd [#allocation6], %s287
          %s290 = sshll.u32 [#allocation5], 4
          %s291 = int_to_ptr.vmem [resolvable:$true] %s290
          %293 = dma.hbm_to_vmem [thread:$0]  %s1, 64, %s291, [#allocation6]
        $region16: #{tpu_custom_call.1} parent=11 // pred_fallthru
          _
        // Predicated region
        $region17: #{tpu_custom_call.1} parent=11 // pred_check
          %p294 = pneg %p95
        $region18: #{tpu_custom_call.1} parent=11 // pred_check_branch
          %296 = sbr.rel (%p294) target = $region20
        $region19: #{tpu_custom_call.1} parent=11 // pred_region
          %s298 = ssub.s32 16, 16
          %299 = vsyncadd [#allocation6], %s298
          %s301 = sshll.u32 [#allocation7], 4
          %s302 = int_to_ptr.vmem [resolvable:$true] %s301
          %304 = dma.hbm_to_vmem [thread:$0]  %s2, 16, %s302, [#allocation6]
        $region20: #{tpu_custom_call.1} parent=11 // pred_fallthru
          _
        // Predicated region
        $region21: #{tpu_custom_call.1} parent=11 // pred_check
          %p305 = pneg %p116
        $region22: #{tpu_custom_call.1} parent=11 // pred_check_branch
          %307 = sbr.rel (%p305) target = $region24
        $region23: #{tpu_custom_call.1} parent=11 // pred_region
          %s309 = ssub.s32 4096, 4096
          %310 = vsyncadd [#allocation9], %s309
          %s311 = sshll.u32 [#allocation8], 4
          %s312 = int_to_ptr.vmem [resolvable:$true] %s311
          %317 = dma.hbm_to_vmem [thread:$0]  %s3, 4096, %s312, [#allocation9], 256, 256, 16
        $region24: #{tpu_custom_call.1} parent=11 // pred_fallthru
          _
        // Predicated region
        $region25: #{tpu_custom_call.1} parent=11 // pred_check
          %p318 = pneg %p137
        $region26: #{tpu_custom_call.1} parent=11 // pred_check_branch
          %320 = sbr.rel (%p318) target = $region28
        $region27: #{tpu_custom_call.1} parent=11 // pred_region
          %s322 = ssub.s32 64, 64
          %323 = vsyncadd [#allocation9], %s322
          %s325 = sshll.u32 [#allocation10], 4
          %s326 = int_to_ptr.vmem [resolvable:$true] %s325
          %328 = dma.hbm_to_vmem [thread:$0]  %s4, 64, %s326, [#allocation9]
        $region28: #{tpu_custom_call.1} parent=11 // pred_fallthru
          _
        // Predicated region
        $region29: #{tpu_custom_call.1} parent=11 // pred_check
          %p329 = pneg %p158
        $region30: #{tpu_custom_call.1} parent=11 // pred_check_branch
          %331 = sbr.rel (%p329) target = $region32
        $region31: #{tpu_custom_call.1} parent=11 // pred_region
          %s333 = ssub.s32 16384, 16384
          %334 = vsyncadd [#allocation12], %s333
          %s335 = sshll.u32 [#allocation11], 4
          %s336 = int_to_ptr.vmem [resolvable:$true] %s335
          %341 = dma.hbm_to_vmem [thread:$0]  %s5, 16384, %s336, [#allocation12], 256, 256, 16
        $region32: #{tpu_custom_call.1} parent=11 // pred_fallthru
          _
        // Predicated region
        $region33: #{tpu_custom_call.1} parent=11 // pred_check
          %p342 = pneg %p179
        $region34: #{tpu_custom_call.1} parent=11 // pred_check_branch
          %344 = sbr.rel (%p342) target = $region36
        $region35: #{tpu_custom_call.1} parent=11 // pred_region
          %s346 = ssub.s32 16384, 16384
          %347 = vsyncadd [#allocation12], %s346
          %s348 = sshll.u32 [#allocation13], 4
          %s349 = int_to_ptr.vmem [resolvable:$true] %s348
          %354 = dma.hbm_to_vmem [thread:$0]  %s6, 16384, %s349, [#allocation12], 256, 256, 16
        $region36: #{tpu_custom_call.1} parent=11 // pred_fallthru
          _
        // Predicated region
        $region37: #{tpu_custom_call.1} parent=11 // pred_check
          %p355 = pneg %p200
        $region38: #{tpu_custom_call.1} parent=11 // pred_check_branch
          %357 = sbr.rel (%p355) target = $region40
        $region39: #{tpu_custom_call.1} parent=11 // pred_region
          %s359 = ssub.s32 64, 64
          %360 = vsyncadd [#allocation15], %s359
          %s362 = sshll.u32 [#allocation14], 4
          %s363 = int_to_ptr.vmem [resolvable:$true] %s362
          %365 = dma.hbm_to_vmem [thread:$0]  %s7, 64, %s363, [#allocation15]
        $region40: #{tpu_custom_call.1} parent=11 // pred_fallthru
          _
        // Predicated region
        $region41: #{tpu_custom_call.1} parent=11 // pred_check
          %p366 = pneg %p221
        $region42: #{tpu_custom_call.1} parent=11 // pred_check_branch
          %368 = sbr.rel (%p366) target = $region44
        $region43: #{tpu_custom_call.1} parent=11 // pred_region
          %s370 = ssub.s32 4096, 4096
          %371 = vsyncadd [#allocation15], %s370
          %s372 = sshll.u32 [#allocation16], 4
          %s373 = int_to_ptr.vmem [resolvable:$true] %s372
          %378 = dma.hbm_to_vmem [thread:$0]  %s8, 4096, %s373, [#allocation15], 64, 64, 4
        $region44: #{tpu_custom_call.1} parent=11 // pred_fallthru
          _
        // Predicated region
        $region45: #{tpu_custom_call.1} parent=11 // pred_check
          %p379 = pneg %p242
        $region46: #{tpu_custom_call.1} parent=11 // pred_check_branch
          %381 = sbr.rel (%p379) target = $region48
        $region47: #{tpu_custom_call.1} parent=11 // pred_region
          %s383 = ssub.s32 16, 16
          %384 = vsyncadd [#allocation18], %s383
          %s386 = sshll.u32 [#allocation17], 4
          %s387 = int_to_ptr.vmem [resolvable:$true] %s386
          %389 = dma.hbm_to_vmem [thread:$0]  %s9, 16, %s387, [#allocation18]
        $region48: #{tpu_custom_call.1} parent=11 // pred_fallthru
          _
      $region12: #{tpu_custom_call.1} parent=5 // pred_fallthru
        _
      %p390 = scmp.lt.s32.totalorder %s27, 3
      // Predicated region
      $region49: #{tpu_custom_call.1} parent=5 // pred_check
        %p391 = pneg %p390
      $region50: #{tpu_custom_call.1} parent=5 // pred_check_branch
        %393 = sbr.rel (%p391) target = $region52
      $region51: #{tpu_custom_call.1} parent=5 // pred_region
        // Predicated region
        $region53: #{tpu_custom_call.1} parent=51 // pred_check
          %p394 = pneg %p47
        $region54: #{tpu_custom_call.1} parent=51 // pred_check_branch
          %396 = sbr.rel (%p394) target = $region56
        $region55: #{tpu_custom_call.1} parent=51 // pred_region
          %s397 = sand.u32 %s37, 1
          %s398 = scalar_lea.sflag [#allocation3], %s397
          %s399 = sand.u32 %s37, 1
          %s400 = smul.addr %s399, 128
          %s401 = scalar_lea.vmem [#allocation2], %s400
          %s402 = smul.u32 16, %s27
          %s404 = ssub.s32 2048, 2048
          %405 = vsyncadd %s398, %s404
          %s406 = smul.addr %s402, 128
          %s407 = scalar_lea.hbm %s0, %s406
          %s408 = sshll.u32 %s401, 4
          %s409 = int_to_ptr.vmem [resolvable:$true] %s408
          %414 = dma.hbm_to_vmem [thread:$0]  %s407, 2048, %s409, %s398, 128, 128, 8
        $region56: #{tpu_custom_call.1} parent=51 // pred_fallthru
          _
      $region52: #{tpu_custom_call.1} parent=5 // pred_fallthru
        _
      %p415 = scmp.le.s32.totalorder 1, %s27
      %p416 = scmp.lt.s32.totalorder %s27, 4
      %p417 = pnand %p415, %p416
      %p418 = pneg %p417
      // Predicated region
      $region57: #{tpu_custom_call.1} parent=5 // pred_check
        _
      $region58: #{tpu_custom_call.1} parent=5 // pred_check_branch
        %420 = sbr.rel (%p417) target = $region60
      $region59: #{tpu_custom_call.1} parent=5 // pred_region
        %s421 = ssub.s32 %s27, 1
        %s422 = sand.u32 %s40, 1
        %s423 = scalar_lea.sflag [#allocation3], %s422
        %s424 = sand.u32 %s40, 1
        %s425 = smul.addr %s424, 128
        %s426 = scalar_lea.vmem [#allocation2], %s425
        // Predicated region
        $region61: #{tpu_custom_call.1} parent=59 // pred_check
          %p427 = pneg %p53
        $region62: #{tpu_custom_call.1} parent=59 // pred_check_branch
          %429 = sbr.rel (%p427) target = $region64
        $region63: #{tpu_custom_call.1} parent=59 // pred_region
          %430 = dma.done %s423, 2048
        $region64: #{tpu_custom_call.1} parent=59 // pred_fallthru
          _
        // Predicated region
        $region65: #{tpu_custom_call.1} parent=59 // pred_check
          %p431 = pneg %p74
        $region66: #{tpu_custom_call.1} parent=59 // pred_check_branch
          %433 = sbr.rel (%p431) target = $region68
        $region67: #{tpu_custom_call.1} parent=59 // pred_region
          %434 = dma.done [#allocation6], 64
        $region68: #{tpu_custom_call.1} parent=59 // pred_fallthru
          _
        // Predicated region
        $region69: #{tpu_custom_call.1} parent=59 // pred_check
          %p435 = pneg %p95
        $region70: #{tpu_custom_call.1} parent=59 // pred_check_branch
          %437 = sbr.rel (%p435) target = $region72
        $region71: #{tpu_custom_call.1} parent=59 // pred_region
          %438 = dma.done [#allocation6], 16
        $region72: #{tpu_custom_call.1} parent=59 // pred_fallthru
          _
        // Predicated region
        $region73: #{tpu_custom_call.1} parent=59 // pred_check
          %p439 = pneg %p116
        $region74: #{tpu_custom_call.1} parent=59 // pred_check_branch
          %441 = sbr.rel (%p439) target = $region76
        $region75: #{tpu_custom_call.1} parent=59 // pred_region
          %442 = dma.done [#allocation9], 4096
        $region76: #{tpu_custom_call.1} parent=59 // pred_fallthru
          _
        // Predicated region
        $region77: #{tpu_custom_call.1} parent=59 // pred_check
          %p443 = pneg %p137
        $region78: #{tpu_custom_call.1} parent=59 // pred_check_branch
          %445 = sbr.rel (%p443) target = $region80
        $region79: #{tpu_custom_call.1} parent=59 // pred_region
          %446 = dma.done [#allocation9], 64
        $region80: #{tpu_custom_call.1} parent=59 // pred_fallthru
          _
        // Predicated region
        $region81: #{tpu_custom_call.1} parent=59 // pred_check
          %p447 = pneg %p158
        $region82: #{tpu_custom_call.1} parent=59 // pred_check_branch
          %449 = sbr.rel (%p447) target = $region84
        $region83: #{tpu_custom_call.1} parent=59 // pred_region
          %450 = dma.done [#allocation12], 16384
        $region84: #{tpu_custom_call.1} parent=59 // pred_fallthru
          _
        // Predicated region
        $region85: #{tpu_custom_call.1} parent=59 // pred_check
          %p451 = pneg %p179
        $region86: #{tpu_custom_call.1} parent=59 // pred_check_branch
          %453 = sbr.rel (%p451) target = $region88
        $region87: #{tpu_custom_call.1} parent=59 // pred_region
          %454 = dma.done [#allocation12], 16384
        $region88: #{tpu_custom_call.1} parent=59 // pred_fallthru
          _
        // Predicated region
        $region89: #{tpu_custom_call.1} parent=59 // pred_check
          %p455 = pneg %p200
        $region90: #{tpu_custom_call.1} parent=59 // pred_check_branch
          %457 = sbr.rel (%p455) target = $region92
        $region91: #{tpu_custom_call.1} parent=59 // pred_region
          %458 = dma.done [#allocation15], 64
        $region92: #{tpu_custom_call.1} parent=59 // pred_fallthru
          _
        // Predicated region
        $region93: #{tpu_custom_call.1} parent=59 // pred_check
          %p459 = pneg %p221
        $region94: #{tpu_custom_call.1} parent=59 // pred_check_branch
          %461 = sbr.rel (%p459) target = $region96
        $region95: #{tpu_custom_call.1} parent=59 // pred_region
          %462 = dma.done [#allocation15], 4096
        $region96: #{tpu_custom_call.1} parent=59 // pred_fallthru
          _
        // Predicated region
        $region97: #{tpu_custom_call.1} parent=59 // pred_check
          %p463 = pneg %p242
        $region98: #{tpu_custom_call.1} parent=59 // pred_check_branch
          %465 = sbr.rel (%p463) target = $region100
        $region99: #{tpu_custom_call.1} parent=59 // pred_region
          %466 = dma.done [#allocation18], 16
        $region100: #{tpu_custom_call.1} parent=59 // pred_fallthru
          _
        %s467 = sand.u32 %s40, 1
        %s468 = scalar_lea.sflag [#allocation3], %s467
        %s469 = sand.u32 %s40, 1
        %s470 = smul.addr %s469, 128
        %s471 = scalar_lea.vmem [#allocation2], %s470
        %p472 = pneg %p53
        %p473 = pneg %p50
        %p474 = pneg %p74
        %p475 = pneg %p71
        %p476 = pneg %p95
        %p477 = pneg %p92
        %p478 = pneg %p116
        %p479 = pneg %p113
        %p480 = pneg %p137
        %p481 = pneg %p134
        %p482 = pneg %p158
        %p483 = pneg %p155
        %p484 = pneg %p179
        %p485 = pneg %p176
        %p486 = pneg %p200
        %p487 = pneg %p197
        %p488 = pneg %p221
        %p489 = pneg %p218
        %p490 = pneg %p242
        %p491 = pneg %p239
        %p492 = pneg %p268
        %p493 = pneg %p265
        %s494 = sand.u32 %s255, 1
        %s495 = scalar_lea.sflag [#allocation4], %s494
        %s496 = sand.u32 %s255, 1
        %s497 = smul.addr %s496, 8
        %s498 = scalar_lea.vmem [#allocation19], %s497
        %s499 = smul.u32 16, %s32
        %v501 = vld [vmem:[%s426] sm:$0xff]
        %v502 = vld [vmem:[%s426 + $0x8] sm:$0xff]
        %v503 = vld [vmem:[%s426 + $0x10] sm:$0xff]
        %v504 = vld [vmem:[%s426 + $0x18] sm:$0xff]
        %v505 = vld [vmem:[%s426 + $0x20] sm:$0xff]
        %v506 = vld [vmem:[%s426 + $0x28] sm:$0xff]
        %v507 = vld [vmem:[%s426 + $0x30] sm:$0xff]
        %v508 = vld [vmem:[%s426 + $0x38] sm:$0xff]
        %v509 = vld [vmem:[%s426 + $0x40] sm:$0xff]
        %v510 = vld [vmem:[%s426 + $0x48] sm:$0xff]
        %v511 = vld [vmem:[%s426 + $0x50] sm:$0xff]
        %v512 = vld [vmem:[%s426 + $0x58] sm:$0xff]
        %v513 = vld [vmem:[%s426 + $0x60] sm:$0xff]
        %v514 = vld [vmem:[%s426 + $0x68] sm:$0xff]
        %v515 = vld [vmem:[%s426 + $0x70] sm:$0xff]
        %v516 = vld [vmem:[%s426 + $0x78] sm:$0xff]
        %v517 = vpack.c.bf16 %v502, %v501
        %v518 = vpack.c.bf16 %v504, %v503
        %v519 = vpack.c.bf16 %v506, %v505
        %v520 = vpack.c.bf16 %v508, %v507
        %v521 = vpack.c.bf16 %v510, %v509
        %v522 = vpack.c.bf16 %v512, %v511
        %v523 = vpack.c.bf16 %v514, %v513
        %v524 = vpack.c.bf16 %v516, %v515
        %v525 = vld [vmem:[#allocation5] sm:$0x7]
        %v526 = vld [vmem:[#allocation7] sm:$0x1]
        %v528 = vlaneseq
        %v529 = vshrl.u32 %v528, 7
        %v530 = vsub.s32 0, %v529
        %v531 = vrot.slane %v526, %v530
        %vm533 = vcmask 48128
        %v535 = vsel %vm533, %v517, 0
        %v538 = vsel %vm533, %v518, 0
        %v541 = vsel %vm533, %v519, 0
        %v544 = vsel %vm533, %v520, 0
        %v547 = vsel %vm533, %v521, 0
        %v550 = vsel %vm533, %v522, 0
        %v553 = vsel %vm533, %v523, 0
        %v556 = vsel %vm533, %v524, 0
        %vm558 = vcmask 1042432
        %v560 = vsel %vm558, %v525, 0
        %562 = vmatprep.subr.bf16.mxu0 0
        %563 = vmatpush1.bf16.msra.mxu0 %v560
        %564 = vmatprep.subr.bf16.mxu0 0
        %565 = vmatpush1.bf16.msra.mxu0 0
        %566 = vmatprep.subr.bf16.mxu0 0
        %567 = vmatpush1.bf16.msra.mxu0 0
        %568 = vmatprep.subr.bf16.mxu0 0
        %569 = vmatpush1.bf16.msra.mxu0 0
        %570 = vmatprep.subr.bf16.mxu0 0
        %571 = vmatpush1.bf16.msra.mxu0 0
        %572 = vmatprep.subr.bf16.mxu0 0
        %573 = vmatpush1.bf16.msra.mxu0 0
        %574 = vmatprep.subr.bf16.mxu0 0
        %575 = vmatpush1.bf16.msra.mxu0 0
        %576 = vmatprep.subr.bf16.mxu0 0
        %577 = vmatpush1.bf16.msra.mxu0 0
        %578 = vmatprep.subr.bf16.mxu0 0
        %579 = vmatpush1.bf16.msra.mxu0 0
        %580 = vmatprep.subr.bf16.mxu0 0
        %581 = vmatpush1.bf16.msra.mxu0 0
        %582 = vmatprep.subr.bf16.mxu0 0
        %583 = vmatpush1.bf16.msra.mxu0 0
        %584 = vmatprep.subr.bf16.mxu0 0
        %585 = vmatpush1.bf16.msra.mxu0 0
        %586 = vmatprep.subr.bf16.mxu0 0
        %587 = vmatpush1.bf16.msra.mxu0 0
        %588 = vmatprep.subr.bf16.mxu0 0
        %589 = vmatpush1.bf16.msra.mxu0 0
        %590 = vmatprep.subr.bf16.mxu0 0
        %591 = vmatpush1.bf16.msra.mxu0 0
        %592 = vmatprep.subr.bf16.mxu0 0
        %593 = vmatpush1.bf16.msra.mxu0 0
        %594 = vmatprep.mubr.bf16.mxu0 0
        %595 = vmatmul.mubr.bf16.gmra.mrb[0].mxu0 %v535
        %v596 = vpop.f32.mrb[0].mxu0
        %v597 = vadd.f32 %v531, %v596
        %v598 = vpop.f32.mrb[0].mxu0
        %v599 = vpop.f32.mrb[0].mxu0
        %v600 = vadd.f32 %v531, %v599
        %v601 = vpop.f32.mrb[0].mxu0
        %602 = vmatprep.mubr.bf16.mxu0 0
        %603 = vmatmul.mubr.bf16.gmra.mrb[0].mxu0 %v538
        %v604 = vpop.f32.mrb[0].mxu0
        %v605 = vadd.f32 %v531, %v604
        %v606 = vpop.f32.mrb[0].mxu0
        %v607 = vpop.f32.mrb[0].mxu0
        %v608 = vadd.f32 %v531, %v607
        %v609 = vpop.f32.mrb[0].mxu0
        %610 = vmatprep.mubr.bf16.mxu0 0
        %611 = vmatmul.mubr.bf16.gmra.mrb[0].mxu0 %v541
        %v612 = vpop.f32.mrb[0].mxu0
        %v613 = vadd.f32 %v531, %v612
        %v614 = vpop.f32.mrb[0].mxu0
        %v615 = vpop.f32.mrb[0].mxu0
        %v616 = vadd.f32 %v531, %v615
        %v617 = vpop.f32.mrb[0].mxu0
        %618 = vmatprep.mubr.bf16.mxu0 0
        %619 = vmatmul.mubr.bf16.gmra.mrb[0].mxu0 %v544
        %v620 = vpop.f32.mrb[0].mxu0
        %v621 = vadd.f32 %v531, %v620
        %v622 = vpop.f32.mrb[0].mxu0
        %v623 = vpop.f32.mrb[0].mxu0
        %v624 = vadd.f32 %v531, %v623
        %v625 = vpop.f32.mrb[0].mxu0
        %626 = vmatprep.mubr.bf16.mxu0 0
        %627 = vmatmul.mubr.bf16.gmra.mrb[0].mxu0 %v547
        %v628 = vpop.f32.mrb[0].mxu0
        %v629 = vadd.f32 %v531, %v628
        %v630 = vpop.f32.mrb[0].mxu0
        %v631 = vpop.f32.mrb[0].mxu0
        %v632 = vadd.f32 %v531, %v631
        %v633 = vpop.f32.mrb[0].mxu0
        %634 = vmatprep.mubr.bf16.mxu0 0
        %635 = vmatmul.mubr.bf16.gmra.mrb[0].mxu0 %v550
        %v636 = vpop.f32.mrb[0].mxu0
        %v637 = vadd.f32 %v531, %v636
        %v638 = vpop.f32.mrb[0].mxu0
        %v639 = vpop.f32.mrb[0].mxu0
        %v640 = vadd.f32 %v531, %v639
        %v641 = vpop.f32.mrb[0].mxu0
        %642 = vmatprep.mubr.bf16.mxu0 0
        %643 = vmatmul.mubr.bf16.gmra.mrb[0].mxu0 %v553
        %v644 = vpop.f32.mrb[0].mxu0
        %v645 = vadd.f32 %v531, %v644
        %v646 = vpop.f32.mrb[0].mxu0
        %v647 = vpop.f32.mrb[0].mxu0
        %v648 = vadd.f32 %v531, %v647
        %v649 = vpop.f32.mrb[0].mxu0
        %650 = vmatprep.mubr.bf16.mxu0 0
        %651 = vmatmul.mubr.bf16.gmra.mrb[0].mxu0 %v556
        %v652 = vpop.f32.mrb[0].mxu0
        %v653 = vadd.f32 %v531, %v652
        %v654 = vpop.f32.mrb[0].mxu0
        %v655 = vpop.f32.mrb[0].mxu0
        %v656 = vadd.f32 %v531, %v655
        %v657 = vpop.f32.mrb[0].mxu0
        %658 = vdwg.mxu0
        %v659 = vmax.f32 %v597, 0.0
        %v660 = vmax.f32 %v600, 0.0
        %v661 = vmax.f32 %v605, 0.0
        %v662 = vmax.f32 %v608, 0.0
        %v663 = vmax.f32 %v613, 0.0
        %v664 = vmax.f32 %v616, 0.0
        %v665 = vmax.f32 %v621, 0.0
        %v666 = vmax.f32 %v624, 0.0
        %v667 = vmax.f32 %v629, 0.0
        %v668 = vmax.f32 %v632, 0.0
        %v669 = vmax.f32 %v637, 0.0
        %v670 = vmax.f32 %v640, 0.0
        %v671 = vmax.f32 %v645, 0.0
        %v672 = vmax.f32 %v648, 0.0
        %v673 = vmax.f32 %v653, 0.0
        %v674 = vmax.f32 %v656, 0.0
        %v675 = vpack.c.bf16 %v660, %v659
        %v676 = vpack.c.bf16 %v662, %v661
        %v677 = vpack.c.bf16 %v664, %v663
        %v678 = vpack.c.bf16 %v666, %v665
        %v679 = vpack.c.bf16 %v668, %v667
        %v680 = vpack.c.bf16 %v670, %v669
        %v681 = vpack.c.bf16 %v672, %v671
        %v682 = vpack.c.bf16 %v674, %v673
        %v683 = vld [vmem:[#allocation8] sm:$0xff]
        %v684 = vld [vmem:[#allocation8 + $0x8] sm:$0xff]
        %v685 = vld [vmem:[#allocation8 + $0x10] sm:$0xff]
        %v686 = vld [vmem:[#allocation8 + $0x18] sm:$0xff]
        %v687 = vld [vmem:[#allocation8 + $0x20] sm:$0xff]
        %v688 = vld [vmem:[#allocation8 + $0x28] sm:$0xff]
        %v689 = vld [vmem:[#allocation8 + $0x30] sm:$0xff]
        %v690 = vld [vmem:[#allocation8 + $0x38] sm:$0xff]
        %v691 = vld [vmem:[#allocation8 + $0x40] sm:$0xff]
        %v692 = vld [vmem:[#allocation8 + $0x48] sm:$0xff]
        %v693 = vld [vmem:[#allocation8 + $0x50] sm:$0xff]
        %v694 = vld [vmem:[#allocation8 + $0x58] sm:$0xff]
        %v695 = vld [vmem:[#allocation8 + $0x60] sm:$0xff]
        %v696 = vld [vmem:[#allocation8 + $0x68] sm:$0xff]
        %v697 = vld [vmem:[#allocation8 + $0x70] sm:$0xff]
        %v698 = vld [vmem:[#allocation8 + $0x78] sm:$0xff]
        %v699 = vld [vmem:[#allocation8 + $0x80] sm:$0xff]
        %v700 = vld [vmem:[#allocation8 + $0x88] sm:$0xff]
        %v701 = vld [vmem:[#allocation8 + $0x90] sm:$0xff]
        %v702 = vld [vmem:[#allocation8 + $0x98] sm:$0xff]
        %v703 = vld [vmem:[#allocation8 + $0xa0] sm:$0xff]
        %v704 = vld [vmem:[#allocation8 + $0xa8] sm:$0xff]
        %v705 = vld [vmem:[#allocation8 + $0xb0] sm:$0xff]
        %v706 = vld [vmem:[#allocation8 + $0xb8] sm:$0xff]
        %v707 = vld [vmem:[#allocation8 + $0xc0] sm:$0xff]
        %v708 = vld [vmem:[#allocation8 + $0xc8] sm:$0xff]
        %v709 = vld [vmem:[#allocation8 + $0xd0] sm:$0xff]
        %v710 = vld [vmem:[#allocation8 + $0xd8] sm:$0xff]
        %v711 = vld [vmem:[#allocation8 + $0xe0] sm:$0xff]
        %v712 = vld [vmem:[#allocation8 + $0xe8] sm:$0xff]
        %v713 = vld [vmem:[#allocation8 + $0xf0] sm:$0xff]
        %v714 = vld [vmem:[#allocation8 + $0xf8] sm:$0xff]
        %v715 = vld [vmem:[#allocation10] sm:$0xf]
        %v717 = vlaneseq
        %v718 = vshrl.u32 %v717, 7
        %v719 = vsub.s32 0, %v718
        %v720 = vrot.slane %v715, %v719
        %v721 = vlaneseq
        %v722 = vshrl.u32 %v721, 7
        %v723 = vsub.s32 1, %v722
        %v724 = vrot.slane %v715, %v723
        %v725 = vlaneseq
        %v726 = vshrl.u32 %v725, 7
        %v727 = vsub.s32 2, %v726
        %v728 = vrot.slane %v715, %v727
        %v729 = vlaneseq
        %v730 = vshrl.u32 %v729, 7
        %v731 = vsub.s32 3, %v730
        %v732 = vrot.slane %v715, %v731
        %v769 = vunpack.c.l.b16 %v683
        %v770 = vunpack.c.h.b16 %v683
        %v771 = vunpack.c.l.b16 %v684
        %v772 = vunpack.c.h.b16 %v684
        %v773 = vunpack.c.l.b16 %v685
        %v774 = vunpack.c.h.b16 %v685
        %v775 = vunpack.c.l.b16 %v686
        %v776 = vunpack.c.h.b16 %v686
        %v777 = vunpack.c.l.b16 %v687
        %v778 = vunpack.c.h.b16 %v687
        %v779 = vunpack.c.l.b16 %v688
        %v780 = vunpack.c.h.b16 %v688
        %v781 = vunpack.c.l.b16 %v689
        %v782 = vunpack.c.h.b16 %v689
        %v783 = vunpack.c.l.b16 %v690
        %v784 = vunpack.c.h.b16 %v690
        %v785 = vunpack.c.l.b16 %v691
        %v786 = vunpack.c.h.b16 %v691
        %v787 = vunpack.c.l.b16 %v692
        %v788 = vunpack.c.h.b16 %v692
        %v789 = vunpack.c.l.b16 %v693
        %v790 = vunpack.c.h.b16 %v693
        %v791 = vunpack.c.l.b16 %v694
        %v792 = vunpack.c.h.b16 %v694
        %v793 = vunpack.c.l.b16 %v695
        %v794 = vunpack.c.h.b16 %v695
        %v795 = vunpack.c.l.b16 %v696
        %v796 = vunpack.c.h.b16 %v696
        %v797 = vunpack.c.l.b16 %v697
        %v798 = vunpack.c.h.b16 %v697
        %v799 = vunpack.c.l.b16 %v698
        %v800 = vunpack.c.h.b16 %v698
        %v801 = vunpack.c.l.b16 %v699
        %v802 = vunpack.c.h.b16 %v699
        %v803 = vunpack.c.l.b16 %v700
        %v804 = vunpack.c.h.b16 %v700
        %v805 = vunpack.c.l.b16 %v701
        %v806 = vunpack.c.h.b16 %v701
        %v807 = vunpack.c.l.b16 %v702
        %v808 = vunpack.c.h.b16 %v702
        %v809 = vunpack.c.l.b16 %v703
        %v810 = vunpack.c.h.b16 %v703
        %v811 = vunpack.c.l.b16 %v704
        %v812 = vunpack.c.h.b16 %v704
        %v813 = vunpack.c.l.b16 %v705
        %v814 = vunpack.c.h.b16 %v705
        %v815 = vunpack.c.l.b16 %v706
        %v816 = vunpack.c.h.b16 %v706
        %v817 = vunpack.c.l.b16 %v707
        %v818 = vunpack.c.h.b16 %v707
        %v819 = vunpack.c.l.b16 %v708
        %v820 = vunpack.c.h.b16 %v708
        %v821 = vunpack.c.l.b16 %v709
        %v822 = vunpack.c.h.b16 %v709
        %v823 = vunpack.c.l.b16 %v710
        %v824 = vunpack.c.h.b16 %v710
        %v825 = vunpack.c.l.b16 %v711
        %v826 = vunpack.c.h.b16 %v711
        %v827 = vunpack.c.l.b16 %v712
        %v828 = vunpack.c.h.b16 %v712
        %v829 = vunpack.c.l.b16 %v713
        %v830 = vunpack.c.h.b16 %v713
        %v831 = vunpack.c.l.b16 %v714
        %v832 = vunpack.c.h.b16 %v714
        %v833 = vpack.c.b16 %v773, %v769
        %v834 = vpack.c.b16 %v774, %v770
        %v835 = vpack.c.b16 %v775, %v771
        %v836 = vpack.c.b16 %v776, %v772
        %v837 = vpack.c.b16 %v781, %v777
        %v838 = vpack.c.b16 %v782, %v778
        %v839 = vpack.c.b16 %v783, %v779
        %v840 = vpack.c.b16 %v784, %v780
        %v841 = vpack.c.b16 %v789, %v785
        %v842 = vpack.c.b16 %v790, %v786
        %v843 = vpack.c.b16 %v791, %v787
        %v844 = vpack.c.b16 %v792, %v788
        %v845 = vpack.c.b16 %v797, %v793
        %v846 = vpack.c.b16 %v798, %v794
        %v847 = vpack.c.b16 %v799, %v795
        %v848 = vpack.c.b16 %v800, %v796
        %v849 = vpack.c.b16 %v805, %v801
        %v850 = vpack.c.b16 %v806, %v802
        %v851 = vpack.c.b16 %v807, %v803
        %v852 = vpack.c.b16 %v808, %v804
        %v853 = vpack.c.b16 %v813, %v809
        %v854 = vpack.c.b16 %v814, %v810
        %v855 = vpack.c.b16 %v815, %v811
        %v856 = vpack.c.b16 %v816, %v812
        %v857 = vpack.c.b16 %v821, %v817
        %v858 = vpack.c.b16 %v822, %v818
        %v859 = vpack.c.b16 %v823, %v819
        %v860 = vpack.c.b16 %v824, %v820
        %v861 = vpack.c.b16 %v829, %v825
        %v862 = vpack.c.b16 %v830, %v826
        %v863 = vpack.c.b16 %v831, %v827
        %v864 = vpack.c.b16 %v832, %v828
        %897 = vmatprep.subr.bf16.mxu0 %v834
        %898 = vmatpush1.bf16.msra.mxu0 %v833
        %899 = vmatprep.subr.bf16.mxu0 %v838
        %900 = vmatpush1.bf16.msra.mxu0 %v837
        %901 = vmatprep.subr.bf16.mxu0 %v842
        %902 = vmatpush1.bf16.msra.mxu0 %v841
        %903 = vmatprep.subr.bf16.mxu0 %v846
        %904 = vmatpush1.bf16.msra.mxu0 %v845
        %905 = vmatprep.subr.bf16.mxu0 %v850
        %906 = vmatpush1.bf16.msra.mxu0 %v849
        %907 = vmatprep.subr.bf16.mxu0 %v854
        %908 = vmatpush1.bf16.msra.mxu0 %v853
        %909 = vmatprep.subr.bf16.mxu0 %v858
        %910 = vmatpush1.bf16.msra.mxu0 %v857
        %911 = vmatprep.subr.bf16.mxu0 %v862
        %912 = vmatpush1.bf16.msra.mxu0 %v861
        %913 = vmatprep.subr.bf16.mxu0 0
        %914 = vmatpush1.bf16.msra.mxu0 0
        %915 = vmatprep.subr.bf16.mxu0 0
        %916 = vmatpush1.bf16.msra.mxu0 0
        %917 = vmatprep.subr.bf16.mxu0 0
        %918 = vmatpush1.bf16.msra.mxu0 0
        %919 = vmatprep.subr.bf16.mxu0 0
        %920 = vmatpush1.bf16.msra.mxu0 0
        %921 = vmatprep.subr.bf16.mxu0 0
        %922 = vmatpush1.bf16.msra.mxu0 0
        %923 = vmatprep.subr.bf16.mxu0 0
        %924 = vmatpush1.bf16.msra.mxu0 0
        %925 = vmatprep.subr.bf16.mxu0 0
        %926 = vmatpush1.bf16.msra.mxu0 0
        %927 = vmatprep.subr.bf16.mxu0 0
        %928 = vmatpush1.bf16.msra.mxu0 0
        %929 = vmatprep.mubr.bf16.mxu0 0
        %930 = vmatmul.mubr.bf16.gmra.mrb[0].mxu0 %v675
        %v931 = vpop.f32.mrb[0].mxu0
        %v932 = vadd.f32 %v720, %v931
        %v933 = vpop.f32.mrb[0].mxu0
        %v934 = vadd.f32 %v724, %v933
        %v935 = vpop.f32.mrb[0].mxu0
        %v936 = vadd.f32 %v720, %v935
        %v937 = vpop.f32.mrb[0].mxu0
        %v938 = vadd.f32 %v724, %v937
        %939 = vmatprep.mubr.bf16.mxu0 0
        %940 = vmatmul.mubr.bf16.gmra.mrb[0].mxu0 %v676
        %v941 = vpop.f32.mrb[0].mxu0
        %v942 = vadd.f32 %v720, %v941
        %v943 = vpop.f32.mrb[0].mxu0
        %v944 = vadd.f32 %v724, %v943
        %v945 = vpop.f32.mrb[0].mxu0
        %v946 = vadd.f32 %v720, %v945
        %v947 = vpop.f32.mrb[0].mxu0
        %v948 = vadd.f32 %v724, %v947
        %949 = vmatprep.mubr.bf16.mxu0 0
        %950 = vmatmul.mubr.bf16.gmra.mrb[0].mxu0 %v677
        %v951 = vpop.f32.mrb[0].mxu0
        %v952 = vadd.f32 %v720, %v951
        %v953 = vpop.f32.mrb[0].mxu0
        %v954 = vadd.f32 %v724, %v953
        %v955 = vpop.f32.mrb[0].mxu0
        %v956 = vadd.f32 %v720, %v955
        %v957 = vpop.f32.mrb[0].mxu0
        %v958 = vadd.f32 %v724, %v957
        %959 = vmatprep.mubr.bf16.mxu0 0
        %960 = vmatmul.mubr.bf16.gmra.mrb[0].mxu0 %v678
        %v961 = vpop.f32.mrb[0].mxu0
        %v962 = vadd.f32 %v720, %v961
        %v963 = vpop.f32.mrb[0].mxu0
        %v964 = vadd.f32 %v724, %v963
        %v965 = vpop.f32.mrb[0].mxu0
        %v966 = vadd.f32 %v720, %v965
        %v967 = vpop.f32.mrb[0].mxu0
        %v968 = vadd.f32 %v724, %v967
        %969 = vmatprep.mubr.bf16.mxu0 0
        %970 = vmatmul.mubr.bf16.gmra.mrb[0].mxu0 %v679
        %v971 = vpop.f32.mrb[0].mxu0
        %v972 = vadd.f32 %v720, %v971
        %v973 = vpop.f32.mrb[0].mxu0
        %v974 = vadd.f32 %v724, %v973
        %v975 = vpop.f32.mrb[0].mxu0
        %v976 = vadd.f32 %v720, %v975
        %v977 = vpop.f32.mrb[0].mxu0
        %v978 = vadd.f32 %v724, %v977
        %979 = vmatprep.mubr.bf16.mxu0 0
        %980 = vmatmul.mubr.bf16.gmra.mrb[0].mxu0 %v680
        %v981 = vpop.f32.mrb[0].mxu0
        %v982 = vadd.f32 %v720, %v981
        %v983 = vpop.f32.mrb[0].mxu0
        %v984 = vadd.f32 %v724, %v983
        %v985 = vpop.f32.mrb[0].mxu0
        %v986 = vadd.f32 %v720, %v985
        %v987 = vpop.f32.mrb[0].mxu0
        %v988 = vadd.f32 %v724, %v987
        %989 = vmatprep.mubr.bf16.mxu0 0
        %990 = vmatmul.mubr.bf16.gmra.mrb[0].mxu0 %v681
        %v991 = vpop.f32.mrb[0].mxu0
        %v992 = vadd.f32 %v720, %v991
        %v993 = vpop.f32.mrb[0].mxu0
        %v994 = vadd.f32 %v724, %v993
        %v995 = vpop.f32.mrb[0].mxu0
        %v996 = vadd.f32 %v720, %v995
        %v997 = vpop.f32.mrb[0].mxu0
        %v998 = vadd.f32 %v724, %v997
        %999 = vmatprep.mubr.bf16.mxu0 0
        %1000 = vmatmul.mubr.bf16.gmra.mrb[0].mxu0 %v682
        %v1001 = vpop.f32.mrb[0].mxu0
        %v1002 = vadd.f32 %v720, %v1001
        %v1003 = vpop.f32.mrb[0].mxu0
        %v1004 = vadd.f32 %v724, %v1003
        %v1005 = vpop.f32.mrb[0].mxu0
        %v1006 = vadd.f32 %v720, %v1005
        %v1007 = vpop.f32.mrb[0].mxu0
        %v1008 = vadd.f32 %v724, %v1007
        %1009 = vdwg.mxu0
        %1010 = vmatprep.subr.bf16.mxu0 %v836
        %1011 = vmatpush1.bf16.msra.mxu0 %v835
        %1012 = vmatprep.subr.bf16.mxu0 %v840
        %1013 = vmatpush1.bf16.msra.mxu0 %v839
        %1014 = vmatprep.subr.bf16.mxu0 %v844
        %1015 = vmatpush1.bf16.msra.mxu0 %v843
        %1016 = vmatprep.subr.bf16.mxu0 %v848
        %1017 = vmatpush1.bf16.msra.mxu0 %v847
        %1018 = vmatprep.subr.bf16.mxu0 %v852
        %1019 = vmatpush1.bf16.msra.mxu0 %v851
        %1020 = vmatprep.subr.bf16.mxu0 %v856
        %1021 = vmatpush1.bf16.msra.mxu0 %v855
        %1022 = vmatprep.subr.bf16.mxu0 %v860
        %1023 = vmatpush1.bf16.msra.mxu0 %v859
        %1024 = vmatprep.subr.bf16.mxu0 %v864
        %1025 = vmatpush1.bf16.msra.mxu0 %v863
        %1026 = vmatprep.subr.bf16.mxu0 0
        %1027 = vmatpush1.bf16.msra.mxu0 0
        %1028 = vmatprep.subr.bf16.mxu0 0
        %1029 = vmatpush1.bf16.msra.mxu0 0
        %1030 = vmatprep.subr.bf16.mxu0 0
        %1031 = vmatpush1.bf16.msra.mxu0 0
        %1032 = vmatprep.subr.bf16.mxu0 0
        %1033 = vmatpush1.bf16.msra.mxu0 0
        %1034 = vmatprep.subr.bf16.mxu0 0
        %1035 = vmatpush1.bf16.msra.mxu0 0
        %1036 = vmatprep.subr.bf16.mxu0 0
        %1037 = vmatpush1.bf16.msra.mxu0 0
        %1038 = vmatprep.subr.bf16.mxu0 0
        %1039 = vmatpush1.bf16.msra.mxu0 0
        %1040 = vmatprep.subr.bf16.mxu0 0
        %1041 = vmatpush1.bf16.msra.mxu0 0
        %1042 = vmatprep.mubr.bf16.mxu0 0
        %1043 = vmatmul.mubr.bf16.gmra.mrb[0].mxu0 %v675
        %v1044 = vpop.f32.mrb[0].mxu0
        %v1045 = vadd.f32 %v728, %v1044
        %v1046 = vpop.f32.mrb[0].mxu0
        %v1047 = vadd.f32 %v732, %v1046
        %v1048 = vpop.f32.mrb[0].mxu0
        %v1049 = vadd.f32 %v728, %v1048
        %v1050 = vpop.f32.mrb[0].mxu0
        %v1051 = vadd.f32 %v732, %v1050
        %1052 = vmatprep.mubr.bf16.mxu0 0
        %1053 = vmatmul.mubr.bf16.gmra.mrb[0].mxu0 %v676
        %v1054 = vpop.f32.mrb[0].mxu0
        %v1055 = vadd.f32 %v728, %v1054
        %v1056 = vpop.f32.mrb[0].mxu0
        %v1057 = vadd.f32 %v732, %v1056
        %v1058 = vpop.f32.mrb[0].mxu0
        %v1059 = vadd.f32 %v728, %v1058
        %v1060 = vpop.f32.mrb[0].mxu0
        %v1061 = vadd.f32 %v732, %v1060
        %1062 = vmatprep.mubr.bf16.mxu0 0
        %1063 = vmatmul.mubr.bf16.gmra.mrb[0].mxu0 %v677
        %v1064 = vpop.f32.mrb[0].mxu0
        %v1065 = vadd.f32 %v728, %v1064
        %v1066 = vpop.f32.mrb[0].mxu0
        %v1067 = vadd.f32 %v732, %v1066
        %v1068 = vpop.f32.mrb[0].mxu0
        %v1069 = vadd.f32 %v728, %v1068
        %v1070 = vpop.f32.mrb[0].mxu0
        %v1071 = vadd.f32 %v732, %v1070
        %1072 = vmatprep.mubr.bf16.mxu0 0
        %1073 = vmatmul.mubr.bf16.gmra.mrb[0].mxu0 %v678
        %v1074 = vpop.f32.mrb[0].mxu0
        %v1075 = vadd.f32 %v728, %v1074
        %v1076 = vpop.f32.mrb[0].mxu0
        %v1077 = vadd.f32 %v732, %v1076
        %v1078 = vpop.f32.mrb[0].mxu0
        %v1079 = vadd.f32 %v728, %v1078
        %v1080 = vpop.f32.mrb[0].mxu0
        %v1081 = vadd.f32 %v732, %v1080
        %1082 = vmatprep.mubr.bf16.mxu0 0
        %1083 = vmatmul.mubr.bf16.gmra.mrb[0].mxu0 %v679
        %v1084 = vpop.f32.mrb[0].mxu0
        %v1085 = vadd.f32 %v728, %v1084
        %v1086 = vpop.f32.mrb[0].mxu0
        %v1087 = vadd.f32 %v732, %v1086
        %v1088 = vpop.f32.mrb[0].mxu0
        %v1089 = vadd.f32 %v728, %v1088
        %v1090 = vpop.f32.mrb[0].mxu0
        %v1091 = vadd.f32 %v732, %v1090
        %1092 = vmatprep.mubr.bf16.mxu0 0
        %1093 = vmatmul.mubr.bf16.gmra.mrb[0].mxu0 %v680
        %v1094 = vpop.f32.mrb[0].mxu0
        %v1095 = vadd.f32 %v728, %v1094
        %v1096 = vpop.f32.mrb[0].mxu0
        %v1097 = vadd.f32 %v732, %v1096
        %v1098 = vpop.f32.mrb[0].mxu0
        %v1099 = vadd.f32 %v728, %v1098
        %v1100 = vpop.f32.mrb[0].mxu0
        %v1101 = vadd.f32 %v732, %v1100
        %1102 = vmatprep.mubr.bf16.mxu0 0
        %1103 = vmatmul.mubr.bf16.gmra.mrb[0].mxu0 %v681
        %v1104 = vpop.f32.mrb[0].mxu0
        %v1105 = vadd.f32 %v728, %v1104
        %v1106 = vpop.f32.mrb[0].mxu0
        %v1107 = vadd.f32 %v732, %v1106
        %v1108 = vpop.f32.mrb[0].mxu0
        %v1109 = vadd.f32 %v728, %v1108
        %v1110 = vpop.f32.mrb[0].mxu0
        %v1111 = vadd.f32 %v732, %v1110
        %1112 = vmatprep.mubr.bf16.mxu0 0
        %1113 = vmatmul.mubr.bf16.gmra.mrb[0].mxu0 %v682
        %v1114 = vpop.f32.mrb[0].mxu0
        %v1115 = vadd.f32 %v728, %v1114
        %v1116 = vpop.f32.mrb[0].mxu0
        %v1117 = vadd.f32 %v732, %v1116
        %v1118 = vpop.f32.mrb[0].mxu0
        %v1119 = vadd.f32 %v728, %v1118
        %v1120 = vpop.f32.mrb[0].mxu0
        %v1121 = vadd.f32 %v732, %v1120
        %1122 = vdwg.mxu0
        %v1123 = vmax.f32 %v932, %v936
        %v1124 = vrot.slane %v1123, 4
        %v1125 = vmax.f32 %v1123, %v1124
        %v1126 = vrot.slane %v1125, 2
        %v1127 = vmax.f32 %v1125, %v1126
        %v1128 = vrot.slane %v1127, 1
        %v1129 = vmax.f32 %v1127, %v1128
        %v1130 = vmax.f32 %v934, %v938
        %v1131 = vrot.slane %v1130, 4
        %v1132 = vmax.f32 %v1130, %v1131
        %v1133 = vrot.slane %v1132, 2
        %v1134 = vmax.f32 %v1132, %v1133
        %v1135 = vrot.slane %v1134, 1
        %v1136 = vmax.f32 %v1134, %v1135
        %v1137 = vmax.f32 %v1045, %v1049
        %v1138 = vrot.slane %v1137, 4
        %v1139 = vmax.f32 %v1137, %v1138
        %v1140 = vrot.slane %v1139, 2
        %v1141 = vmax.f32 %v1139, %v1140
        %v1142 = vrot.slane %v1141, 1
        %v1143 = vmax.f32 %v1141, %v1142
        %v1144 = vmax.f32 %v1047, %v1051
        %v1145 = vrot.slane %v1144, 4
        %v1146 = vmax.f32 %v1144, %v1145
        %v1147 = vrot.slane %v1146, 2
        %v1148 = vmax.f32 %v1146, %v1147
        %v1149 = vrot.slane %v1148, 1
        %v1150 = vmax.f32 %v1148, %v1149
        %v1151 = vmax.f32 %v942, %v946
        %v1152 = vrot.slane %v1151, 4
        %v1153 = vmax.f32 %v1151, %v1152
        %v1154 = vrot.slane %v1153, 2
        %v1155 = vmax.f32 %v1153, %v1154
        %v1156 = vrot.slane %v1155, 1
        %v1157 = vmax.f32 %v1155, %v1156
        %v1158 = vmax.f32 %v944, %v948
        %v1159 = vrot.slane %v1158, 4
        %v1160 = vmax.f32 %v1158, %v1159
        %v1161 = vrot.slane %v1160, 2
        %v1162 = vmax.f32 %v1160, %v1161
        %v1163 = vrot.slane %v1162, 1
        %v1164 = vmax.f32 %v1162, %v1163
        %v1165 = vmax.f32 %v1055, %v1059
        %v1166 = vrot.slane %v1165, 4
        %v1167 = vmax.f32 %v1165, %v1166
        %v1168 = vrot.slane %v1167, 2
        %v1169 = vmax.f32 %v1167, %v1168
        %v1170 = vrot.slane %v1169, 1
        %v1171 = vmax.f32 %v1169, %v1170
        %v1172 = vmax.f32 %v1057, %v1061
        %v1173 = vrot.slane %v1172, 4
        %v1174 = vmax.f32 %v1172, %v1173
        %v1175 = vrot.slane %v1174, 2
        %v1176 = vmax.f32 %v1174, %v1175
        %v1177 = vrot.slane %v1176, 1
        %v1178 = vmax.f32 %v1176, %v1177
        %v1179 = vmax.f32 %v952, %v956
        %v1180 = vrot.slane %v1179, 4
        %v1181 = vmax.f32 %v1179, %v1180
        %v1182 = vrot.slane %v1181, 2
        %v1183 = vmax.f32 %v1181, %v1182
        %v1184 = vrot.slane %v1183, 1
        %v1185 = vmax.f32 %v1183, %v1184
        %v1186 = vmax.f32 %v954, %v958
        %v1187 = vrot.slane %v1186, 4
        %v1188 = vmax.f32 %v1186, %v1187
        %v1189 = vrot.slane %v1188, 2
        %v1190 = vmax.f32 %v1188, %v1189
        %v1191 = vrot.slane %v1190, 1
        %v1192 = vmax.f32 %v1190, %v1191
        %v1193 = vmax.f32 %v1065, %v1069
        %v1194 = vrot.slane %v1193, 4
        %v1195 = vmax.f32 %v1193, %v1194
        %v1196 = vrot.slane %v1195, 2
        %v1197 = vmax.f32 %v1195, %v1196
        %v1198 = vrot.slane %v1197, 1
        %v1199 = vmax.f32 %v1197, %v1198
        %v1200 = vmax.f32 %v1067, %v1071
        %v1201 = vrot.slane %v1200, 4
        %v1202 = vmax.f32 %v1200, %v1201
        %v1203 = vrot.slane %v1202, 2
        %v1204 = vmax.f32 %v1202, %v1203
        %v1205 = vrot.slane %v1204, 1
        %v1206 = vmax.f32 %v1204, %v1205
        %v1207 = vmax.f32 %v962, %v966
        %v1208 = vrot.slane %v1207, 4
        %v1209 = vmax.f32 %v1207, %v1208
        %v1210 = vrot.slane %v1209, 2
        %v1211 = vmax.f32 %v1209, %v1210
        %v1212 = vrot.slane %v1211, 1
        %v1213 = vmax.f32 %v1211, %v1212
        %v1214 = vmax.f32 %v964, %v968
        %v1215 = vrot.slane %v1214, 4
        %v1216 = vmax.f32 %v1214, %v1215
        %v1217 = vrot.slane %v1216, 2
        %v1218 = vmax.f32 %v1216, %v1217
        %v1219 = vrot.slane %v1218, 1
        %v1220 = vmax.f32 %v1218, %v1219
        %v1221 = vmax.f32 %v1075, %v1079
        %v1222 = vrot.slane %v1221, 4
        %v1223 = vmax.f32 %v1221, %v1222
        %v1224 = vrot.slane %v1223, 2
        %v1225 = vmax.f32 %v1223, %v1224
        %v1226 = vrot.slane %v1225, 1
        %v1227 = vmax.f32 %v1225, %v1226
        %v1228 = vmax.f32 %v1077, %v1081
        %v1229 = vrot.slane %v1228, 4
        %v1230 = vmax.f32 %v1228, %v1229
        %v1231 = vrot.slane %v1230, 2
        %v1232 = vmax.f32 %v1230, %v1231
        %v1233 = vrot.slane %v1232, 1
        %v1234 = vmax.f32 %v1232, %v1233
        %v1235 = vmax.f32 %v972, %v976
        %v1236 = vrot.slane %v1235, 4
        %v1237 = vmax.f32 %v1235, %v1236
        %v1238 = vrot.slane %v1237, 2
        %v1239 = vmax.f32 %v1237, %v1238
        %v1240 = vrot.slane %v1239, 1
        %v1241 = vmax.f32 %v1239, %v1240
        %v1242 = vmax.f32 %v974, %v978
        %v1243 = vrot.slane %v1242, 4
        %v1244 = vmax.f32 %v1242, %v1243
        %v1245 = vrot.slane %v1244, 2
        %v1246 = vmax.f32 %v1244, %v1245
        %v1247 = vrot.slane %v1246, 1
        %v1248 = vmax.f32 %v1246, %v1247
        %v1249 = vmax.f32 %v1085, %v1089
        %v1250 = vrot.slane %v1249, 4
        %v1251 = vmax.f32 %v1249, %v1250
        %v1252 = vrot.slane %v1251, 2
        %v1253 = vmax.f32 %v1251, %v1252
        %v1254 = vrot.slane %v1253, 1
        %v1255 = vmax.f32 %v1253, %v1254
        %v1256 = vmax.f32 %v1087, %v1091
        %v1257 = vrot.slane %v1256, 4
        %v1258 = vmax.f32 %v1256, %v1257
        %v1259 = vrot.slane %v1258, 2
        %v1260 = vmax.f32 %v1258, %v1259
        %v1261 = vrot.slane %v1260, 1
        %v1262 = vmax.f32 %v1260, %v1261
        %v1263 = vmax.f32 %v982, %v986
        %v1264 = vrot.slane %v1263, 4
        %v1265 = vmax.f32 %v1263, %v1264
        %v1266 = vrot.slane %v1265, 2
        %v1267 = vmax.f32 %v1265, %v1266
        %v1268 = vrot.slane %v1267, 1
        %v1269 = vmax.f32 %v1267, %v1268
        %v1270 = vmax.f32 %v984, %v988
        %v1271 = vrot.slane %v1270, 4
        %v1272 = vmax.f32 %v1270, %v1271
        %v1273 = vrot.slane %v1272, 2
        %v1274 = vmax.f32 %v1272, %v1273
        %v1275 = vrot.slane %v1274, 1
        %v1276 = vmax.f32 %v1274, %v1275
        %v1277 = vmax.f32 %v1095, %v1099
        %v1278 = vrot.slane %v1277, 4
        %v1279 = vmax.f32 %v1277, %v1278
        %v1280 = vrot.slane %v1279, 2
        %v1281 = vmax.f32 %v1279, %v1280
        %v1282 = vrot.slane %v1281, 1
        %v1283 = vmax.f32 %v1281, %v1282
        %v1284 = vmax.f32 %v1097, %v1101
        %v1285 = vrot.slane %v1284, 4
        %v1286 = vmax.f32 %v1284, %v1285
        %v1287 = vrot.slane %v1286, 2
        %v1288 = vmax.f32 %v1286, %v1287
        %v1289 = vrot.slane %v1288, 1
        %v1290 = vmax.f32 %v1288, %v1289
        %v1291 = vmax.f32 %v992, %v996
        %v1292 = vrot.slane %v1291, 4
        %v1293 = vmax.f32 %v1291, %v1292
        %v1294 = vrot.slane %v1293, 2
        %v1295 = vmax.f32 %v1293, %v1294
        %v1296 = vrot.slane %v1295, 1
        %v1297 = vmax.f32 %v1295, %v1296
        %v1298 = vmax.f32 %v994, %v998
        %v1299 = vrot.slane %v1298, 4
        %v1300 = vmax.f32 %v1298, %v1299
        %v1301 = vrot.slane %v1300, 2
        %v1302 = vmax.f32 %v1300, %v1301
        %v1303 = vrot.slane %v1302, 1
        %v1304 = vmax.f32 %v1302, %v1303
        %v1305 = vmax.f32 %v1105, %v1109
        %v1306 = vrot.slane %v1305, 4
        %v1307 = vmax.f32 %v1305, %v1306
        %v1308 = vrot.slane %v1307, 2
        %v1309 = vmax.f32 %v1307, %v1308
        %v1310 = vrot.slane %v1309, 1
        %v1311 = vmax.f32 %v1309, %v1310
        %v1312 = vmax.f32 %v1107, %v1111
        %v1313 = vrot.slane %v1312, 4
        %v1314 = vmax.f32 %v1312, %v1313
        %v1315 = vrot.slane %v1314, 2
        %v1316 = vmax.f32 %v1314, %v1315
        %v1317 = vrot.slane %v1316, 1
        %v1318 = vmax.f32 %v1316, %v1317
        %v1319 = vmax.f32 %v1002, %v1006
        %v1320 = vrot.slane %v1319, 4
        %v1321 = vmax.f32 %v1319, %v1320
        %v1322 = vrot.slane %v1321, 2
        %v1323 = vmax.f32 %v1321, %v1322
        %v1324 = vrot.slane %v1323, 1
        %v1325 = vmax.f32 %v1323, %v1324
        %v1326 = vmax.f32 %v1004, %v1008
        %v1327 = vrot.slane %v1326, 4
        %v1328 = vmax.f32 %v1326, %v1327
        %v1329 = vrot.slane %v1328, 2
        %v1330 = vmax.f32 %v1328, %v1329
        %v1331 = vrot.slane %v1330, 1
        %v1332 = vmax.f32 %v1330, %v1331
        %v1333 = vmax.f32 %v1115, %v1119
        %v1334 = vrot.slane %v1333, 4
        %v1335 = vmax.f32 %v1333, %v1334
        %v1336 = vrot.slane %v1335, 2
        %v1337 = vmax.f32 %v1335, %v1336
        %v1338 = vrot.slane %v1337, 1
        %v1339 = vmax.f32 %v1337, %v1338
        %v1340 = vmax.f32 %v1117, %v1121
        %v1341 = vrot.slane %v1340, 4
        %v1342 = vmax.f32 %v1340, %v1341
        %v1343 = vrot.slane %v1342, 2
        %v1344 = vmax.f32 %v1342, %v1343
        %v1345 = vrot.slane %v1344, 1
        %v1346 = vmax.f32 %v1344, %v1345
        %v1347 = vpack.c.bf16 %v936, %v932
        %v1348 = vpack.c.bf16 %v938, %v934
        %v1349 = vpack.c.bf16 %v1049, %v1045
        %v1350 = vpack.c.bf16 %v1051, %v1047
        %v1351 = vpack.c.bf16 %v946, %v942
        %v1352 = vpack.c.bf16 %v948, %v944
        %v1353 = vpack.c.bf16 %v1059, %v1055
        %v1354 = vpack.c.bf16 %v1061, %v1057
        %v1355 = vpack.c.bf16 %v956, %v952
        %v1356 = vpack.c.bf16 %v958, %v954
        %v1357 = vpack.c.bf16 %v1069, %v1065
        %v1358 = vpack.c.bf16 %v1071, %v1067
        %v1359 = vpack.c.bf16 %v966, %v962
        %v1360 = vpack.c.bf16 %v968, %v964
        %v1361 = vpack.c.bf16 %v1079, %v1075
        %v1362 = vpack.c.bf16 %v1081, %v1077
        %v1363 = vpack.c.bf16 %v976, %v972
        %v1364 = vpack.c.bf16 %v978, %v974
        %v1365 = vpack.c.bf16 %v1089, %v1085
        %v1366 = vpack.c.bf16 %v1091, %v1087
        %v1367 = vpack.c.bf16 %v986, %v982
        %v1368 = vpack.c.bf16 %v988, %v984
        %v1369 = vpack.c.bf16 %v1099, %v1095
        %v1370 = vpack.c.bf16 %v1101, %v1097
        %v1371 = vpack.c.bf16 %v996, %v992
        %v1372 = vpack.c.bf16 %v998, %v994
        %v1373 = vpack.c.bf16 %v1109, %v1105
        %v1374 = vpack.c.bf16 %v1111, %v1107
        %v1375 = vpack.c.bf16 %v1006, %v1002
        %v1376 = vpack.c.bf16 %v1008, %v1004
        %v1377 = vpack.c.bf16 %v1119, %v1115
        %v1378 = vpack.c.bf16 %v1121, %v1117
        %v1379 = vld [vmem:[#allocation13] sm:$0xff]
        %v1380 = vld [vmem:[#allocation13 + $0x8] sm:$0xff]
        %v1381 = vld [vmem:[#allocation13 + $0x10] sm:$0xff]
        %v1382 = vld [vmem:[#allocation13 + $0x18] sm:$0xff]
        %v1383 = vld [vmem:[#allocation13 + $0x20] sm:$0xff]
        %v1384 = vld [vmem:[#allocation13 + $0x28] sm:$0xff]
        %v1385 = vld [vmem:[#allocation13 + $0x30] sm:$0xff]
        %v1386 = vld [vmem:[#allocation13 + $0x38] sm:$0xff]
        %v1387 = vld [vmem:[#allocation13 + $0x40] sm:$0xff]
        %v1388 = vld [vmem:[#allocation13 + $0x48] sm:$0xff]
        %v1389 = vld [vmem:[#allocation13 + $0x50] sm:$0xff]
        %v1390 = vld [vmem:[#allocation13 + $0x58] sm:$0xff]
        %v1391 = vld [vmem:[#allocation13 + $0x60] sm:$0xff]
        %v1392 = vld [vmem:[#allocation13 + $0x68] sm:$0xff]
        %v1393 = vld [vmem:[#allocation13 + $0x70] sm:$0xff]
        %v1394 = vld [vmem:[#allocation13 + $0x78] sm:$0xff]
        %v1395 = vld [vmem:[#allocation13 + $0x80] sm:$0xff]
        %v1396 = vld [vmem:[#allocation13 + $0x88] sm:$0xff]
        %v1397 = vld [vmem:[#allocation13 + $0x90] sm:$0xff]
        %v1398 = vld [vmem:[#allocation13 + $0x98] sm:$0xff]
        %v1399 = vld [vmem:[#allocation13 + $0xa0] sm:$0xff]
        %v1400 = vld [vmem:[#allocation13 + $0xa8] sm:$0xff]
        %v1401 = vld [vmem:[#allocation13 + $0xb0] sm:$0xff]
        %v1402 = vld [vmem:[#allocation13 + $0xb8] sm:$0xff]
        %v1403 = vld [vmem:[#allocation13 + $0xc0] sm:$0xff]
        %v1404 = vld [vmem:[#allocation13 + $0xc8] sm:$0xff]
        %v1405 = vld [vmem:[#allocation13 + $0xd0] sm:$0xff]
        %v1406 = vld [vmem:[#allocation13 + $0xd8] sm:$0xff]
        %v1407 = vld [vmem:[#allocation13 + $0xe0] sm:$0xff]
        %v1408 = vld [vmem:[#allocation13 + $0xe8] sm:$0xff]
        %v1409 = vld [vmem:[#allocation13 + $0xf0] sm:$0xff]
        %v1410 = vld [vmem:[#allocation13 + $0xf8] sm:$0xff]
        %v1411 = vld [vmem:[#allocation13 + $0x100] sm:$0xff]
        %v1412 = vld [vmem:[#allocation13 + $0x108] sm:$0xff]
        %v1413 = vld [vmem:[#allocation13 + $0x110] sm:$0xff]
        %v1414 = vld [vmem:[#allocation13 + $0x118] sm:$0xff]
        %v1415 = vld [vmem:[#allocation13 + $0x120] sm:$0xff]
        %v1416 = vld [vmem:[#allocation13 + $0x128] sm:$0xff]
        %v1417 = vld [vmem:[#allocation13 + $0x130] sm:$0xff]
        %v1418 = vld [vmem:[#allocation13 + $0x138] sm:$0xff]
        %v1419 = vld [vmem:[#allocation13 + $0x140] sm:$0xff]
        %v1420 = vld [vmem:[#allocation13 + $0x148] sm:$0xff]
        %v1421 = vld [vmem:[#allocation13 + $0x150] sm:$0xff]
        %v1422 = vld [vmem:[#allocation13 + $0x158] sm:$0xff]
        %v1423 = vld [vmem:[#allocation13 + $0x160] sm:$0xff]
        %v1424 = vld [vmem:[#allocation13 + $0x168] sm:$0xff]
        %v1425 = vld [vmem:[#allocation13 + $0x170] sm:$0xff]
        %v1426 = vld [vmem:[#allocation13 + $0x178] sm:$0xff]
        %v1427 = vld [vmem:[#allocation13 + $0x180] sm:$0xff]
        %v1428 = vld [vmem:[#allocation13 + $0x188] sm:$0xff]
        %v1429 = vld [vmem:[#allocation13 + $0x190] sm:$0xff]
        %v1430 = vld [vmem:[#allocation13 + $0x198] sm:$0xff]
        %v1431 = vld [vmem:[#allocation13 + $0x1a0] sm:$0xff]
        %v1432 = vld [vmem:[#allocation13 + $0x1a8] sm:$0xff]
        %v1433 = vld [vmem:[#allocation13 + $0x1b0] sm:$0xff]
        %v1434 = vld [vmem:[#allocation13 + $0x1b8] sm:$0xff]
        %v1435 = vld [vmem:[#allocation13 + $0x1c0] sm:$0xff]
        %v1436 = vld [vmem:[#allocation13 + $0x1c8] sm:$0xff]
        %v1437 = vld [vmem:[#allocation13 + $0x1d0] sm:$0xff]
        %v1438 = vld [vmem:[#allocation13 + $0x1d8] sm:$0xff]
        %v1439 = vld [vmem:[#allocation13 + $0x1e0] sm:$0xff]
        %v1440 = vld [vmem:[#allocation13 + $0x1e8] sm:$0xff]
        %v1441 = vld [vmem:[#allocation13 + $0x1f0] sm:$0xff]
        %v1442 = vld [vmem:[#allocation13 + $0x1f8] sm:$0xff]
        %v1443 = vld [vmem:[#allocation13 + $0x200] sm:$0xff]
        %v1444 = vld [vmem:[#allocation13 + $0x208] sm:$0xff]
        %v1445 = vld [vmem:[#allocation13 + $0x210] sm:$0xff]
        %v1446 = vld [vmem:[#allocation13 + $0x218] sm:$0xff]
        %v1447 = vld [vmem:[#allocation13 + $0x220] sm:$0xff]
        %v1448 = vld [vmem:[#allocation13 + $0x228] sm:$0xff]
        %v1449 = vld [vmem:[#allocation13 + $0x230] sm:$0xff]
        %v1450 = vld [vmem:[#allocation13 + $0x238] sm:$0xff]
        %v1451 = vld [vmem:[#allocation13 + $0x240] sm:$0xff]
        %v1452 = vld [vmem:[#allocation13 + $0x248] sm:$0xff]
        %v1453 = vld [vmem:[#allocation13 + $0x250] sm:$0xff]
        %v1454 = vld [vmem:[#allocation13 + $0x258] sm:$0xff]
        %v1455 = vld [vmem:[#allocation13 + $0x260] sm:$0xff]
        %v1456 = vld [vmem:[#allocation13 + $0x268] sm:$0xff]
        %v1457 = vld [vmem:[#allocation13 + $0x270] sm:$0xff]
        %v1458 = vld [vmem:[#allocation13 + $0x278] sm:$0xff]
        %v1459 = vld [vmem:[#allocation13 + $0x280] sm:$0xff]
        %v1460 = vld [vmem:[#allocation13 + $0x288] sm:$0xff]
        %v1461 = vld [vmem:[#allocation13 + $0x290] sm:$0xff]
        %v1462 = vld [vmem:[#allocation13 + $0x298] sm:$0xff]
        %v1463 = vld [vmem:[#allocation13 + $0x2a0] sm:$0xff]
        %v1464 = vld [vmem:[#allocation13 + $0x2a8] sm:$0xff]
        %v1465 = vld [vmem:[#allocation13 + $0x2b0] sm:$0xff]
        %v1466 = vld [vmem:[#allocation13 + $0x2b8] sm:$0xff]
        %v1467 = vld [vmem:[#allocation13 + $0x2c0] sm:$0xff]
        %v1468 = vld [vmem:[#allocation13 + $0x2c8] sm:$0xff]
        %v1469 = vld [vmem:[#allocation13 + $0x2d0] sm:$0xff]
        %v1470 = vld [vmem:[#allocation13 + $0x2d8] sm:$0xff]
        %v1471 = vld [vmem:[#allocation13 + $0x2e0] sm:$0xff]
        %v1472 = vld [vmem:[#allocation13 + $0x2e8] sm:$0xff]
        %v1473 = vld [vmem:[#allocation13 + $0x2f0] sm:$0xff]
        %v1474 = vld [vmem:[#allocation13 + $0x2f8] sm:$0xff]
        %v1475 = vld [vmem:[#allocation13 + $0x300] sm:$0xff]
        %v1476 = vld [vmem:[#allocation13 + $0x308] sm:$0xff]
        %v1477 = vld [vmem:[#allocation13 + $0x310] sm:$0xff]
        %v1478 = vld [vmem:[#allocation13 + $0x318] sm:$0xff]
        %v1479 = vld [vmem:[#allocation13 + $0x320] sm:$0xff]
        %v1480 = vld [vmem:[#allocation13 + $0x328] sm:$0xff]
        %v1481 = vld [vmem:[#allocation13 + $0x330] sm:$0xff]
        %v1482 = vld [vmem:[#allocation13 + $0x338] sm:$0xff]
        %v1483 = vld [vmem:[#allocation13 + $0x340] sm:$0xff]
        %v1484 = vld [vmem:[#allocation13 + $0x348] sm:$0xff]
        %v1485 = vld [vmem:[#allocation13 + $0x350] sm:$0xff]
        %v1486 = vld [vmem:[#allocation13 + $0x358] sm:$0xff]
        %v1487 = vld [vmem:[#allocation13 + $0x360] sm:$0xff]
        %v1488 = vld [vmem:[#allocation13 + $0x368] sm:$0xff]
        %v1489 = vld [vmem:[#allocation13 + $0x370] sm:$0xff]
        %v1490 = vld [vmem:[#allocation13 + $0x378] sm:$0xff]
        %v1491 = vld [vmem:[#allocation13 + $0x380] sm:$0xff]
        %v1492 = vld [vmem:[#allocation13 + $0x388] sm:$0xff]
        %v1493 = vld [vmem:[#allocation13 + $0x390] sm:$0xff]
        %v1494 = vld [vmem:[#allocation13 + $0x398] sm:$0xff]
        %v1495 = vld [vmem:[#allocation13 + $0x3a0] sm:$0xff]
        %v1496 = vld [vmem:[#allocation13 + $0x3a8] sm:$0xff]
        %v1497 = vld [vmem:[#allocation13 + $0x3b0] sm:$0xff]
        %v1498 = vld [vmem:[#allocation13 + $0x3b8] sm:$0xff]
        %v1499 = vld [vmem:[#allocation13 + $0x3c0] sm:$0xff]
        %v1500 = vld [vmem:[#allocation13 + $0x3c8] sm:$0xff]
        %v1501 = vld [vmem:[#allocation13 + $0x3d0] sm:$0xff]
        %v1502 = vld [vmem:[#allocation13 + $0x3d8] sm:$0xff]
        %v1503 = vld [vmem:[#allocation13 + $0x3e0] sm:$0xff]
        %v1504 = vld [vmem:[#allocation13 + $0x3e8] sm:$0xff]
        %v1505 = vld [vmem:[#allocation13 + $0x3f0] sm:$0xff]
        %v1506 = vld [vmem:[#allocation13 + $0x3f8] sm:$0xff]
        %v1635 = vunpack.c.l.b16 %v1379
        %v1636 = vunpack.c.h.b16 %v1379
        %v1637 = vunpack.c.l.b16 %v1380
        %v1638 = vunpack.c.h.b16 %v1380
        %v1639 = vunpack.c.l.b16 %v1381
        %v1640 = vunpack.c.h.b16 %v1381
        %v1641 = vunpack.c.l.b16 %v1382
        %v1642 = vunpack.c.h.b16 %v1382
        %v1643 = vunpack.c.l.b16 %v1383
        %v1644 = vunpack.c.h.b16 %v1383
        %v1645 = vunpack.c.l.b16 %v1384
        %v1646 = vunpack.c.h.b16 %v1384
        %v1647 = vunpack.c.l.b16 %v1385
        %v1648 = vunpack.c.h.b16 %v1385
        %v1649 = vunpack.c.l.b16 %v1386
        %v1650 = vunpack.c.h.b16 %v1386
        %v1651 = vunpack.c.l.b16 %v1387
        %v1652 = vunpack.c.h.b16 %v1387
        %v1653 = vunpack.c.l.b16 %v1388
        %v1654 = vunpack.c.h.b16 %v1388
        %v1655 = vunpack.c.l.b16 %v1389
        %v1656 = vunpack.c.h.b16 %v1389
        %v1657 = vunpack.c.l.b16 %v1390
        %v1658 = vunpack.c.h.b16 %v1390
        %v1659 = vunpack.c.l.b16 %v1391
        %v1660 = vunpack.c.h.b16 %v1391
        %v1661 = vunpack.c.l.b16 %v1392
        %v1662 = vunpack.c.h.b16 %v1392
        %v1663 = vunpack.c.l.b16 %v1393
        %v1664 = vunpack.c.h.b16 %v1393
        %v1665 = vunpack.c.l.b16 %v1394
        %v1666 = vunpack.c.h.b16 %v1394
        %v1667 = vunpack.c.l.b16 %v1395
        %v1668 = vunpack.c.h.b16 %v1395
        %v1669 = vunpack.c.l.b16 %v1396
        %v1670 = vunpack.c.h.b16 %v1396
        %v1671 = vunpack.c.l.b16 %v1397
        %v1672 = vunpack.c.h.b16 %v1397
        %v1673 = vunpack.c.l.b16 %v1398
        %v1674 = vunpack.c.h.b16 %v1398
        %v1675 = vunpack.c.l.b16 %v1399
        %v1676 = vunpack.c.h.b16 %v1399
        %v1677 = vunpack.c.l.b16 %v1400
        %v1678 = vunpack.c.h.b16 %v1400
        %v1679 = vunpack.c.l.b16 %v1401
        %v1680 = vunpack.c.h.b16 %v1401
        %v1681 = vunpack.c.l.b16 %v1402
        %v1682 = vunpack.c.h.b16 %v1402
        %v1683 = vunpack.c.l.b16 %v1403
        %v1684 = vunpack.c.h.b16 %v1403
        %v1685 = vunpack.c.l.b16 %v1404
        %v1686 = vunpack.c.h.b16 %v1404
        %v1687 = vunpack.c.l.b16 %v1405
        %v1688 = vunpack.c.h.b16 %v1405
        %v1689 = vunpack.c.l.b16 %v1406
        %v1690 = vunpack.c.h.b16 %v1406
        %v1691 = vunpack.c.l.b16 %v1407
        %v1692 = vunpack.c.h.b16 %v1407
        %v1693 = vunpack.c.l.b16 %v1408
        %v1694 = vunpack.c.h.b16 %v1408
        %v1695 = vunpack.c.l.b16 %v1409
        %v1696 = vunpack.c.h.b16 %v1409
        %v1697 = vunpack.c.l.b16 %v1410
        %v1698 = vunpack.c.h.b16 %v1410
        %v1699 = vunpack.c.l.b16 %v1411
        %v1700 = vunpack.c.h.b16 %v1411
        %v1701 = vunpack.c.l.b16 %v1412
        %v1702 = vunpack.c.h.b16 %v1412
        %v1703 = vunpack.c.l.b16 %v1413
        %v1704 = vunpack.c.h.b16 %v1413
        %v1705 = vunpack.c.l.b16 %v1414
        %v1706 = vunpack.c.h.b16 %v1414
        %v1707 = vunpack.c.l.b16 %v1415
        %v1708 = vunpack.c.h.b16 %v1415
        %v1709 = vunpack.c.l.b16 %v1416
        %v1710 = vunpack.c.h.b16 %v1416
        %v1711 = vunpack.c.l.b16 %v1417
        %v1712 = vunpack.c.h.b16 %v1417
        %v1713 = vunpack.c.l.b16 %v1418
        %v1714 = vunpack.c.h.b16 %v1418
        %v1715 = vunpack.c.l.b16 %v1419
        %v1716 = vunpack.c.h.b16 %v1419
        %v1717 = vunpack.c.l.b16 %v1420
        %v1718 = vunpack.c.h.b16 %v1420
        %v1719 = vunpack.c.l.b16 %v1421
        %v1720 = vunpack.c.h.b16 %v1421
        %v1721 = vunpack.c.l.b16 %v1422
        %v1722 = vunpack.c.h.b16 %v1422
        %v1723 = vunpack.c.l.b16 %v1423
        %v1724 = vunpack.c.h.b16 %v1423
        %v1725 = vunpack.c.l.b16 %v1424
        %v1726 = vunpack.c.h.b16 %v1424
        %v1727 = vunpack.c.l.b16 %v1425
        %v1728 = vunpack.c.h.b16 %v1425
        %v1729 = vunpack.c.l.b16 %v1426
        %v1730 = vunpack.c.h.b16 %v1426
        %v1731 = vunpack.c.l.b16 %v1427
        %v1732 = vunpack.c.h.b16 %v1427
        %v1733 = vunpack.c.l.b16 %v1428
        %v1734 = vunpack.c.h.b16 %v1428
        %v1735 = vunpack.c.l.b16 %v1429
        %v1736 = vunpack.c.h.b16 %v1429
        %v1737 = vunpack.c.l.b16 %v1430
        %v1738 = vunpack.c.h.b16 %v1430
        %v1739 = vunpack.c.l.b16 %v1431
        %v1740 = vunpack.c.h.b16 %v1431
        %v1741 = vunpack.c.l.b16 %v1432
        %v1742 = vunpack.c.h.b16 %v1432
        %v1743 = vunpack.c.l.b16 %v1433
        %v1744 = vunpack.c.h.b16 %v1433
        %v1745 = vunpack.c.l.b16 %v1434
        %v1746 = vunpack.c.h.b16 %v1434
        %v1747 = vunpack.c.l.b16 %v1435
        %v1748 = vunpack.c.h.b16 %v1435
        %v1749 = vunpack.c.l.b16 %v1436
        %v1750 = vunpack.c.h.b16 %v1436
        %v1751 = vunpack.c.l.b16 %v1437
        %v1752 = vunpack.c.h.b16 %v1437
        %v1753 = vunpack.c.l.b16 %v1438
        %v1754 = vunpack.c.h.b16 %v1438
        %v1755 = vunpack.c.l.b16 %v1439
        %v1756 = vunpack.c.h.b16 %v1439
        %v1757 = vunpack.c.l.b16 %v1440
        %v1758 = vunpack.c.h.b16 %v1440
        %v1759 = vunpack.c.l.b16 %v1441
        %v1760 = vunpack.c.h.b16 %v1441
        %v1761 = vunpack.c.l.b16 %v1442
        %v1762 = vunpack.c.h.b16 %v1442
        %v1763 = vunpack.c.l.b16 %v1443
        %v1764 = vunpack.c.h.b16 %v1443
        %v1765 = vunpack.c.l.b16 %v1444
        %v1766 = vunpack.c.h.b16 %v1444
        %v1767 = vunpack.c.l.b16 %v1445
        %v1768 = vunpack.c.h.b16 %v1445
        %v1769 = vunpack.c.l.b16 %v1446
        %v1770 = vunpack.c.h.b16 %v1446
        %v1771 = vunpack.c.l.b16 %v1447
        %v1772 = vunpack.c.h.b16 %v1447
        %v1773 = vunpack.c.l.b16 %v1448
        %v1774 = vunpack.c.h.b16 %v1448
        %v1775 = vunpack.c.l.b16 %v1449
        %v1776 = vunpack.c.h.b16 %v1449
        %v1777 = vunpack.c.l.b16 %v1450
        %v1778 = vunpack.c.h.b16 %v1450
        %v1779 = vunpack.c.l.b16 %v1451
        %v1780 = vunpack.c.h.b16 %v1451
        %v1781 = vunpack.c.l.b16 %v1452
        %v1782 = vunpack.c.h.b16 %v1452
        %v1783 = vunpack.c.l.b16 %v1453
        %v1784 = vunpack.c.h.b16 %v1453
        %v1785 = vunpack.c.l.b16 %v1454
        %v1786 = vunpack.c.h.b16 %v1454
        %v1787 = vunpack.c.l.b16 %v1455
        %v1788 = vunpack.c.h.b16 %v1455
        %v1789 = vunpack.c.l.b16 %v1456
        %v1790 = vunpack.c.h.b16 %v1456
        %v1791 = vunpack.c.l.b16 %v1457
        %v1792 = vunpack.c.h.b16 %v1457
        %v1793 = vunpack.c.l.b16 %v1458
        %v1794 = vunpack.c.h.b16 %v1458
        %v1795 = vunpack.c.l.b16 %v1459
        %v1796 = vunpack.c.h.b16 %v1459
        %v1797 = vunpack.c.l.b16 %v1460
        %v1798 = vunpack.c.h.b16 %v1460
        %v1799 = vunpack.c.l.b16 %v1461
        %v1800 = vunpack.c.h.b16 %v1461
        %v1801 = vunpack.c.l.b16 %v1462
        %v1802 = vunpack.c.h.b16 %v1462
        %v1803 = vunpack.c.l.b16 %v1463
        %v1804 = vunpack.c.h.b16 %v1463
        %v1805 = vunpack.c.l.b16 %v1464
        %v1806 = vunpack.c.h.b16 %v1464
        %v1807 = vunpack.c.l.b16 %v1465
        %v1808 = vunpack.c.h.b16 %v1465
        %v1809 = vunpack.c.l.b16 %v1466
        %v1810 = vunpack.c.h.b16 %v1466
        %v1811 = vunpack.c.l.b16 %v1467
        %v1812 = vunpack.c.h.b16 %v1467
        %v1813 = vunpack.c.l.b16 %v1468
        %v1814 = vunpack.c.h.b16 %v1468
        %v1815 = vunpack.c.l.b16 %v1469
        %v1816 = vunpack.c.h.b16 %v1469
        %v1817 = vunpack.c.l.b16 %v1470
        %v1818 = vunpack.c.h.b16 %v1470
        %v1819 = vunpack.c.l.b16 %v1471
        %v1820 = vunpack.c.h.b16 %v1471
        %v1821 = vunpack.c.l.b16 %v1472
        %v1822 = vunpack.c.h.b16 %v1472
        %v1823 = vunpack.c.l.b16 %v1473
        %v1824 = vunpack.c.h.b16 %v1473
        %v1825 = vunpack.c.l.b16 %v1474
        %v1826 = vunpack.c.h.b16 %v1474
        %v1827 = vunpack.c.l.b16 %v1475
        %v1828 = vunpack.c.h.b16 %v1475
        %v1829 = vunpack.c.l.b16 %v1476
        %v1830 = vunpack.c.h.b16 %v1476
        %v1831 = vunpack.c.l.b16 %v1477
        %v1832 = vunpack.c.h.b16 %v1477
        %v1833 = vunpack.c.l.b16 %v1478
        %v1834 = vunpack.c.h.b16 %v1478
        %v1835 = vunpack.c.l.b16 %v1479
        %v1836 = vunpack.c.h.b16 %v1479
        %v1837 = vunpack.c.l.b16 %v1480
        %v1838 = vunpack.c.h.b16 %v1480
        %v1839 = vunpack.c.l.b16 %v1481
        %v1840 = vunpack.c.h.b16 %v1481
        %v1841 = vunpack.c.l.b16 %v1482
        %v1842 = vunpack.c.h.b16 %v1482
        %v1843 = vunpack.c.l.b16 %v1483
        %v1844 = vunpack.c.h.b16 %v1483
        %v1845 = vunpack.c.l.b16 %v1484
        %v1846 = vunpack.c.h.b16 %v1484
        %v1847 = vunpack.c.l.b16 %v1485
        %v1848 = vunpack.c.h.b16 %v1485
        %v1849 = vunpack.c.l.b16 %v1486
        %v1850 = vunpack.c.h.b16 %v1486
        %v1851 = vunpack.c.l.b16 %v1487
        %v1852 = vunpack.c.h.b16 %v1487
        %v1853 = vunpack.c.l.b16 %v1488
        %v1854 = vunpack.c.h.b16 %v1488
        %v1855 = vunpack.c.l.b16 %v1489
        %v1856 = vunpack.c.h.b16 %v1489
        %v1857 = vunpack.c.l.b16 %v1490
        %v1858 = vunpack.c.h.b16 %v1490
        %v1859 = vunpack.c.l.b16 %v1491
        %v1860 = vunpack.c.h.b16 %v1491
        %v1861 = vunpack.c.l.b16 %v1492
        %v1862 = vunpack.c.h.b16 %v1492
        %v1863 = vunpack.c.l.b16 %v1493
        %v1864 = vunpack.c.h.b16 %v1493
        %v1865 = vunpack.c.l.b16 %v1494
        %v1866 = vunpack.c.h.b16 %v1494
        %v1867 = vunpack.c.l.b16 %v1495
        %v1868 = vunpack.c.h.b16 %v1495
        %v1869 = vunpack.c.l.b16 %v1496
        %v1870 = vunpack.c.h.b16 %v1496
        %v1871 = vunpack.c.l.b16 %v1497
        %v1872 = vunpack.c.h.b16 %v1497
        %v1873 = vunpack.c.l.b16 %v1498
        %v1874 = vunpack.c.h.b16 %v1498
        %v1875 = vunpack.c.l.b16 %v1499
        %v1876 = vunpack.c.h.b16 %v1499
        %v1877 = vunpack.c.l.b16 %v1500
        %v1878 = vunpack.c.h.b16 %v1500
        %v1879 = vunpack.c.l.b16 %v1501
        %v1880 = vunpack.c.h.b16 %v1501
        %v1881 = vunpack.c.l.b16 %v1502
        %v1882 = vunpack.c.h.b16 %v1502
        %v1883 = vunpack.c.l.b16 %v1503
        %v1884 = vunpack.c.h.b16 %v1503
        %v1885 = vunpack.c.l.b16 %v1504
        %v1886 = vunpack.c.h.b16 %v1504
        %v1887 = vunpack.c.l.b16 %v1505
        %v1888 = vunpack.c.h.b16 %v1505
        %v1889 = vunpack.c.l.b16 %v1506
        %v1890 = vunpack.c.h.b16 %v1506
        %v1891 = vpack.c.b16 %v1639, %v1635
        %v1892 = vpack.c.b16 %v1640, %v1636
        %v1893 = vpack.c.b16 %v1641, %v1637
        %v1894 = vpack.c.b16 %v1642, %v1638
        %v1895 = vpack.c.b16 %v1647, %v1643
        %v1896 = vpack.c.b16 %v1648, %v1644
        %v1897 = vpack.c.b16 %v1649, %v1645
        %v1898 = vpack.c.b16 %v1650, %v1646
        %v1899 = vpack.c.b16 %v1655, %v1651
        %v1900 = vpack.c.b16 %v1656, %v1652
        %v1901 = vpack.c.b16 %v1657, %v1653
        %v1902 = vpack.c.b16 %v1658, %v1654
        %v1903 = vpack.c.b16 %v1663, %v1659
        %v1904 = vpack.c.b16 %v1664, %v1660
        %v1905 = vpack.c.b16 %v1665, %v1661
        %v1906 = vpack.c.b16 %v1666, %v1662
        %v1907 = vpack.c.b16 %v1671, %v1667
        %v1908 = vpack.c.b16 %v1672, %v1668
        %v1909 = vpack.c.b16 %v1673, %v1669
        %v1910 = vpack.c.b16 %v1674, %v1670
        %v1911 = vpack.c.b16 %v1679, %v1675
        %v1912 = vpack.c.b16 %v1680, %v1676
        %v1913 = vpack.c.b16 %v1681, %v1677
        %v1914 = vpack.c.b16 %v1682, %v1678
        %v1915 = vpack.c.b16 %v1687, %v1683
        %v1916 = vpack.c.b16 %v1688, %v1684
        %v1917 = vpack.c.b16 %v1689, %v1685
        %v1918 = vpack.c.b16 %v1690, %v1686
        %v1919 = vpack.c.b16 %v1695, %v1691
        %v1920 = vpack.c.b16 %v1696, %v1692
        %v1921 = vpack.c.b16 %v1697, %v1693
        %v1922 = vpack.c.b16 %v1698, %v1694
        %v1923 = vpack.c.b16 %v1703, %v1699
        %v1924 = vpack.c.b16 %v1704, %v1700
        %v1925 = vpack.c.b16 %v1705, %v1701
        %v1926 = vpack.c.b16 %v1706, %v1702
        %v1927 = vpack.c.b16 %v1711, %v1707
        %v1928 = vpack.c.b16 %v1712, %v1708
        %v1929 = vpack.c.b16 %v1713, %v1709
        %v1930 = vpack.c.b16 %v1714, %v1710
        %v1931 = vpack.c.b16 %v1719, %v1715
        %v1932 = vpack.c.b16 %v1720, %v1716
        %v1933 = vpack.c.b16 %v1721, %v1717
        %v1934 = vpack.c.b16 %v1722, %v1718
        %v1935 = vpack.c.b16 %v1727, %v1723
        %v1936 = vpack.c.b16 %v1728, %v1724
        %v1937 = vpack.c.b16 %v1729, %v1725
        %v1938 = vpack.c.b16 %v1730, %v1726
        %v1939 = vpack.c.b16 %v1735, %v1731
        %v1940 = vpack.c.b16 %v1736, %v1732
        %v1941 = vpack.c.b16 %v1737, %v1733
        %v1942 = vpack.c.b16 %v1738, %v1734
        %v1943 = vpack.c.b16 %v1743, %v1739
        %v1944 = vpack.c.b16 %v1744, %v1740
        %v1945 = vpack.c.b16 %v1745, %v1741
        %v1946 = vpack.c.b16 %v1746, %v1742
        %v1947 = vpack.c.b16 %v1751, %v1747
        %v1948 = vpack.c.b16 %v1752, %v1748
        %v1949 = vpack.c.b16 %v1753, %v1749
        %v1950 = vpack.c.b16 %v1754, %v1750
        %v1951 = vpack.c.b16 %v1759, %v1755
        %v1952 = vpack.c.b16 %v1760, %v1756
        %v1953 = vpack.c.b16 %v1761, %v1757
        %v1954 = vpack.c.b16 %v1762, %v1758
        %v1955 = vpack.c.b16 %v1767, %v1763
        %v1956 = vpack.c.b16 %v1768, %v1764
        %v1957 = vpack.c.b16 %v1769, %v1765
        %v1958 = vpack.c.b16 %v1770, %v1766
        %v1959 = vpack.c.b16 %v1775, %v1771
        %v1960 = vpack.c.b16 %v1776, %v1772
        %v1961 = vpack.c.b16 %v1777, %v1773
        %v1962 = vpack.c.b16 %v1778, %v1774
        %v1963 = vpack.c.b16 %v1783, %v1779
        %v1964 = vpack.c.b16 %v1784, %v1780
        %v1965 = vpack.c.b16 %v1785, %v1781
        %v1966 = vpack.c.b16 %v1786, %v1782
        %v1967 = vpack.c.b16 %v1791, %v1787
        %v1968 = vpack.c.b16 %v1792, %v1788
        %v1969 = vpack.c.b16 %v1793, %v1789
        %v1970 = vpack.c.b16 %v1794, %v1790
        %v1971 = vpack.c.b16 %v1799, %v1795
        %v1972 = vpack.c.b16 %v1800, %v1796
        %v1973 = vpack.c.b16 %v1801, %v1797
        %v1974 = vpack.c.b16 %v1802, %v1798
        %v1975 = vpack.c.b16 %v1807, %v1803
        %v1976 = vpack.c.b16 %v1808, %v1804
        %v1977 = vpack.c.b16 %v1809, %v1805
        %v1978 = vpack.c.b16 %v1810, %v1806
        %v1979 = vpack.c.b16 %v1815, %v1811
        %v1980 = vpack.c.b16 %v1816, %v1812
        %v1981 = vpack.c.b16 %v1817, %v1813
        %v1982 = vpack.c.b16 %v1818, %v1814
        %v1983 = vpack.c.b16 %v1823, %v1819
        %v1984 = vpack.c.b16 %v1824, %v1820
        %v1985 = vpack.c.b16 %v1825, %v1821
        %v1986 = vpack.c.b16 %v1826, %v1822
        %v1987 = vpack.c.b16 %v1831, %v1827
        %v1988 = vpack.c.b16 %v1832, %v1828
        %v1989 = vpack.c.b16 %v1833, %v1829
        %v1990 = vpack.c.b16 %v1834, %v1830
        %v1991 = vpack.c.b16 %v1839, %v1835
        %v1992 = vpack.c.b16 %v1840, %v1836
        %v1993 = vpack.c.b16 %v1841, %v1837
        %v1994 = vpack.c.b16 %v1842, %v1838
        %v1995 = vpack.c.b16 %v1847, %v1843
        %v1996 = vpack.c.b16 %v1848, %v1844
        %v1997 = vpack.c.b16 %v1849, %v1845
        %v1998 = vpack.c.b16 %v1850, %v1846
        %v1999 = vpack.c.b16 %v1855, %v1851
        %v2000 = vpack.c.b16 %v1856, %v1852
        %v2001 = vpack.c.b16 %v1857, %v1853
        %v2002 = vpack.c.b16 %v1858, %v1854
        %v2003 = vpack.c.b16 %v1863, %v1859
        %v2004 = vpack.c.b16 %v1864, %v1860
        %v2005 = vpack.c.b16 %v1865, %v1861
        %v2006 = vpack.c.b16 %v1866, %v1862
        %v2007 = vpack.c.b16 %v1871, %v1867
        %v2008 = vpack.c.b16 %v1872, %v1868
        %v2009 = vpack.c.b16 %v1873, %v1869
        %v2010 = vpack.c.b16 %v1874, %v1870
        %v2011 = vpack.c.b16 %v1879, %v1875
        %v2012 = vpack.c.b16 %v1880, %v1876
        %v2013 = vpack.c.b16 %v1881, %v1877
        %v2014 = vpack.c.b16 %v1882, %v1878
        %v2015 = vpack.c.b16 %v1887, %v1883
        %v2016 = vpack.c.b16 %v1888, %v1884
        %v2017 = vpack.c.b16 %v1889, %v1885
        %v2018 = vpack.c.b16 %v1890, %v1886
        %2147 = vmatprep.subr.bf16.mxu0 %v1892
        %2148 = vmatpush1.bf16.msra.mxu0 %v1891
        %2149 = vmatprep.subr.bf16.mxu0 %v1896
        %2150 = vmatpush1.bf16.msra.mxu0 %v1895
        %2151 = vmatprep.subr.bf16.mxu0 %v1900
        %2152 = vmatpush1.bf16.msra.mxu0 %v1899
        %2153 = vmatprep.subr.bf16.mxu0 %v1904
        %2154 = vmatpush1.bf16.msra.mxu0 %v1903
        %2155 = vmatprep.subr.bf16.mxu0 %v1908
        %2156 = vmatpush1.bf16.msra.mxu0 %v1907
        %2157 = vmatprep.subr.bf16.mxu0 %v1912
        %2158 = vmatpush1.bf16.msra.mxu0 %v1911
        %2159 = vmatprep.subr.bf16.mxu0 %v1916
        %2160 = vmatpush1.bf16.msra.mxu0 %v1915
        %2161 = vmatprep.subr.bf16.mxu0 %v1920
        %2162 = vmatpush1.bf16.msra.mxu0 %v1919
        %2163 = vmatprep.subr.bf16.mxu0 %v1924
        %2164 = vmatpush1.bf16.msra.mxu0 %v1923
        %2165 = vmatprep.subr.bf16.mxu0 %v1928
        %2166 = vmatpush1.bf16.msra.mxu0 %v1927
        %2167 = vmatprep.subr.bf16.mxu0 %v1932
        %2168 = vmatpush1.bf16.msra.mxu0 %v1931
        %2169 = vmatprep.subr.bf16.mxu0 %v1936
        %2170 = vmatpush1.bf16.msra.mxu0 %v1935
        %2171 = vmatprep.subr.bf16.mxu0 %v1940
        %2172 = vmatpush1.bf16.msra.mxu0 %v1939
        %2173 = vmatprep.subr.bf16.mxu0 %v1944
        %2174 = vmatpush1.bf16.msra.mxu0 %v1943
        %2175 = vmatprep.subr.bf16.mxu0 %v1948
        %2176 = vmatpush1.bf16.msra.mxu0 %v1947
        %2177 = vmatprep.subr.bf16.mxu0 %v1952
        %2178 = vmatpush1.bf16.msra.mxu0 %v1951
        %2179 = vmatprep.mubr.bf16.mxu0 %v1348
        %2180 = vmatmul.mubr.bf16.gmra.mrb[0].mxu0 %v1347
        %v2181 = vpop.f32.mrb[0].mxu0
        %v2182 = vadd.f32 0.0, %v2181
        %v2183 = vpop.f32.mrb[0].mxu0
        %v2184 = vadd.f32 0.0, %v2183
        %v2185 = vpop.f32.mrb[0].mxu0
        %v2186 = vadd.f32 0.0, %v2185
        %v2187 = vpop.f32.mrb[0].mxu0
        %v2188 = vadd.f32 0.0, %v2187
        %2189 = vmatprep.mubr.bf16.mxu0 %v1352
        %2190 = vmatmul.mubr.bf16.gmra.mrb[0].mxu0 %v1351
        %v2191 = vpop.f32.mrb[0].mxu0
        %v2192 = vadd.f32 0.0, %v2191
        %v2193 = vpop.f32.mrb[0].mxu0
        %v2194 = vadd.f32 0.0, %v2193
        %v2195 = vpop.f32.mrb[0].mxu0
        %v2196 = vadd.f32 0.0, %v2195
        %v2197 = vpop.f32.mrb[0].mxu0
        %v2198 = vadd.f32 0.0, %v2197
        %2199 = vmatprep.mubr.bf16.mxu0 %v1356
        %2200 = vmatmul.mubr.bf16.gmra.mrb[0].mxu0 %v1355
        %v2201 = vpop.f32.mrb[0].mxu0
        %v2202 = vadd.f32 0.0, %v2201
        %v2203 = vpop.f32.mrb[0].mxu0
        %v2204 = vadd.f32 0.0, %v2203
        %v2205 = vpop.f32.mrb[0].mxu0
        %v2206 = vadd.f32 0.0, %v2205
        %v2207 = vpop.f32.mrb[0].mxu0
        %v2208 = vadd.f32 0.0, %v2207
        %2209 = vmatprep.mubr.bf16.mxu0 %v1360
        %2210 = vmatmul.mubr.bf16.gmra.mrb[0].mxu0 %v1359
        %v2211 = vpop.f32.mrb[0].mxu0
        %v2212 = vadd.f32 0.0, %v2211
        %v2213 = vpop.f32.mrb[0].mxu0
        %v2214 = vadd.f32 0.0, %v2213
        %v2215 = vpop.f32.mrb[0].mxu0
        %v2216 = vadd.f32 0.0, %v2215
        %v2217 = vpop.f32.mrb[0].mxu0
        %v2218 = vadd.f32 0.0, %v2217
        %2219 = vmatprep.mubr.bf16.mxu0 %v1364
        %2220 = vmatmul.mubr.bf16.gmra.mrb[0].mxu0 %v1363
        %v2221 = vpop.f32.mrb[0].mxu0
        %v2222 = vadd.f32 0.0, %v2221
        %v2223 = vpop.f32.mrb[0].mxu0
        %v2224 = vadd.f32 0.0, %v2223
        %v2225 = vpop.f32.mrb[0].mxu0
        %v2226 = vadd.f32 0.0, %v2225
        %v2227 = vpop.f32.mrb[0].mxu0
        %v2228 = vadd.f32 0.0, %v2227
        %2229 = vmatprep.mubr.bf16.mxu0 %v1368
        %2230 = vmatmul.mubr.bf16.gmra.mrb[0].mxu0 %v1367
        %v2231 = vpop.f32.mrb[0].mxu0
        %v2232 = vadd.f32 0.0, %v2231
        %v2233 = vpop.f32.mrb[0].mxu0
        %v2234 = vadd.f32 0.0, %v2233
        %v2235 = vpop.f32.mrb[0].mxu0
        %v2236 = vadd.f32 0.0, %v2235
        %v2237 = vpop.f32.mrb[0].mxu0
        %v2238 = vadd.f32 0.0, %v2237
        %2239 = vmatprep.mubr.bf16.mxu0 %v1372
        %2240 = vmatmul.mubr.bf16.gmra.mrb[0].mxu0 %v1371
        %v2241 = vpop.f32.mrb[0].mxu0
        %v2242 = vadd.f32 0.0, %v2241
        %v2243 = vpop.f32.mrb[0].mxu0
        %v2244 = vadd.f32 0.0, %v2243
        %v2245 = vpop.f32.mrb[0].mxu0
        %v2246 = vadd.f32 0.0, %v2245
        %v2247 = vpop.f32.mrb[0].mxu0
        %v2248 = vadd.f32 0.0, %v2247
        %2249 = vmatprep.mubr.bf16.mxu0 %v1376
        %2250 = vmatmul.mubr.bf16.gmra.mrb[0].mxu0 %v1375
        %v2251 = vpop.f32.mrb[0].mxu0
        %v2252 = vadd.f32 0.0, %v2251
        %v2253 = vpop.f32.mrb[0].mxu0
        %v2254 = vadd.f32 0.0, %v2253
        %v2255 = vpop.f32.mrb[0].mxu0
        %v2256 = vadd.f32 0.0, %v2255
        %v2257 = vpop.f32.mrb[0].mxu0
        %v2258 = vadd.f32 0.0, %v2257
        %2259 = vdwg.mxu0
        %2260 = vmatprep.subr.bf16.mxu0 %v1956
        %2261 = vmatpush1.bf16.msra.mxu0 %v1955
        %2262 = vmatprep.subr.bf16.mxu0 %v1960
        %2263 = vmatpush1.bf16.msra.mxu0 %v1959
        %2264 = vmatprep.subr.bf16.mxu0 %v1964
        %2265 = vmatpush1.bf16.msra.mxu0 %v1963
        %2266 = vmatprep.subr.bf16.mxu0 %v1968
        %2267 = vmatpush1.bf16.msra.mxu0 %v1967
        %2268 = vmatprep.subr.bf16.mxu0 %v1972
        %2269 = vmatpush1.bf16.msra.mxu0 %v1971
        %2270 = vmatprep.subr.bf16.mxu0 %v1976
        %2271 = vmatpush1.bf16.msra.mxu0 %v1975
        %2272 = vmatprep.subr.bf16.mxu0 %v1980
        %2273 = vmatpush1.bf16.msra.mxu0 %v1979
        %2274 = vmatprep.subr.bf16.mxu0 %v1984
        %2275 = vmatpush1.bf16.msra.mxu0 %v1983
        %2276 = vmatprep.subr.bf16.mxu0 %v1988
        %2277 = vmatpush1.bf16.msra.mxu0 %v1987
        %2278 = vmatprep.subr.bf16.mxu0 %v1992
        %2279 = vmatpush1.bf16.msra.mxu0 %v1991
        %2280 = vmatprep.subr.bf16.mxu0 %v1996
        %2281 = vmatpush1.bf16.msra.mxu0 %v1995
        %2282 = vmatprep.subr.bf16.mxu0 %v2000
        %2283 = vmatpush1.bf16.msra.mxu0 %v1999
        %2284 = vmatprep.subr.bf16.mxu0 %v2004
        %2285 = vmatpush1.bf16.msra.mxu0 %v2003
        %2286 = vmatprep.subr.bf16.mxu0 %v2008
        %2287 = vmatpush1.bf16.msra.mxu0 %v2007
        %2288 = vmatprep.subr.bf16.mxu0 %v2012
        %2289 = vmatpush1.bf16.msra.mxu0 %v2011
        %2290 = vmatprep.subr.bf16.mxu0 %v2016
        %2291 = vmatpush1.bf16.msra.mxu0 %v2015
        %2292 = vmatprep.mubr.bf16.mxu0 %v1350
        %2293 = vmatmul.mubr.bf16.gmra.mrb[0].mxu0 %v1349
        %v2294 = vpop.f32.mrb[0].mxu0
        %v2295 = vadd.f32 %v2182, %v2294
        %v2296 = vpop.f32.mrb[0].mxu0
        %v2297 = vadd.f32 %v2184, %v2296
        %v2298 = vpop.f32.mrb[0].mxu0
        %v2299 = vadd.f32 %v2186, %v2298
        %v2300 = vpop.f32.mrb[0].mxu0
        %v2301 = vadd.f32 %v2188, %v2300
        %2302 = vmatprep.mubr.bf16.mxu0 %v1354
        %2303 = vmatmul.mubr.bf16.gmra.mrb[0].mxu0 %v1353
        %v2304 = vpop.f32.mrb[0].mxu0
        %v2305 = vadd.f32 %v2192, %v2304
        %v2306 = vpop.f32.mrb[0].mxu0
        %v2307 = vadd.f32 %v2194, %v2306
        %v2308 = vpop.f32.mrb[0].mxu0
        %v2309 = vadd.f32 %v2196, %v2308
        %v2310 = vpop.f32.mrb[0].mxu0
        %v2311 = vadd.f32 %v2198, %v2310
        %2312 = vmatprep.mubr.bf16.mxu0 %v1358
        %2313 = vmatmul.mubr.bf16.gmra.mrb[0].mxu0 %v1357
        %v2314 = vpop.f32.mrb[0].mxu0
        %v2315 = vadd.f32 %v2202, %v2314
        %v2316 = vpop.f32.mrb[0].mxu0
        %v2317 = vadd.f32 %v2204, %v2316
        %v2318 = vpop.f32.mrb[0].mxu0
        %v2319 = vadd.f32 %v2206, %v2318
        %v2320 = vpop.f32.mrb[0].mxu0
        %v2321 = vadd.f32 %v2208, %v2320
        %2322 = vmatprep.mubr.bf16.mxu0 %v1362
        %2323 = vmatmul.mubr.bf16.gmra.mrb[0].mxu0 %v1361
        %v2324 = vpop.f32.mrb[0].mxu0
        %v2325 = vadd.f32 %v2212, %v2324
        %v2326 = vpop.f32.mrb[0].mxu0
        %v2327 = vadd.f32 %v2214, %v2326
        %v2328 = vpop.f32.mrb[0].mxu0
        %v2329 = vadd.f32 %v2216, %v2328
        %v2330 = vpop.f32.mrb[0].mxu0
        %v2331 = vadd.f32 %v2218, %v2330
        %2332 = vmatprep.mubr.bf16.mxu0 %v1366
        %2333 = vmatmul.mubr.bf16.gmra.mrb[0].mxu0 %v1365
        %v2334 = vpop.f32.mrb[0].mxu0
        %v2335 = vadd.f32 %v2222, %v2334
        %v2336 = vpop.f32.mrb[0].mxu0
        %v2337 = vadd.f32 %v2224, %v2336
        %v2338 = vpop.f32.mrb[0].mxu0
        %v2339 = vadd.f32 %v2226, %v2338
        %v2340 = vpop.f32.mrb[0].mxu0
        %v2341 = vadd.f32 %v2228, %v2340
        %2342 = vmatprep.mubr.bf16.mxu0 %v1370
        %2343 = vmatmul.mubr.bf16.gmra.mrb[0].mxu0 %v1369
        %v2344 = vpop.f32.mrb[0].mxu0
        %v2345 = vadd.f32 %v2232, %v2344
        %v2346 = vpop.f32.mrb[0].mxu0
        %v2347 = vadd.f32 %v2234, %v2346
        %v2348 = vpop.f32.mrb[0].mxu0
        %v2349 = vadd.f32 %v2236, %v2348
        %v2350 = vpop.f32.mrb[0].mxu0
        %v2351 = vadd.f32 %v2238, %v2350
        %2352 = vmatprep.mubr.bf16.mxu0 %v1374
        %2353 = vmatmul.mubr.bf16.gmra.mrb[0].mxu0 %v1373
        %v2354 = vpop.f32.mrb[0].mxu0
        %v2355 = vadd.f32 %v2242, %v2354
        %v2356 = vpop.f32.mrb[0].mxu0
        %v2357 = vadd.f32 %v2244, %v2356
        %v2358 = vpop.f32.mrb[0].mxu0
        %v2359 = vadd.f32 %v2246, %v2358
        %v2360 = vpop.f32.mrb[0].mxu0
        %v2361 = vadd.f32 %v2248, %v2360
        %2362 = vmatprep.mubr.bf16.mxu0 %v1378
        %2363 = vmatmul.mubr.bf16.gmra.mrb[0].mxu0 %v1377
        %v2364 = vpop.f32.mrb[0].mxu0
        %v2365 = vadd.f32 %v2252, %v2364
        %v2366 = vpop.f32.mrb[0].mxu0
        %v2367 = vadd.f32 %v2254, %v2366
        %v2368 = vpop.f32.mrb[0].mxu0
        %v2369 = vadd.f32 %v2256, %v2368
        %v2370 = vpop.f32.mrb[0].mxu0
        %v2371 = vadd.f32 %v2258, %v2370
        %2372 = vdwg.mxu0
        %2373 = vmatprep.subr.bf16.mxu0 %v1894
        %2374 = vmatpush1.bf16.msra.mxu0 %v1893
        %2375 = vmatprep.subr.bf16.mxu0 %v1898
        %2376 = vmatpush1.bf16.msra.mxu0 %v1897
        %2377 = vmatprep.subr.bf16.mxu0 %v1902
        %2378 = vmatpush1.bf16.msra.mxu0 %v1901
        %2379 = vmatprep.subr.bf16.mxu0 %v1906
        %2380 = vmatpush1.bf16.msra.mxu0 %v1905
        %2381 = vmatprep.subr.bf16.mxu0 %v1910
        %2382 = vmatpush1.bf16.msra.mxu0 %v1909
        %2383 = vmatprep.subr.bf16.mxu0 %v1914
        %2384 = vmatpush1.bf16.msra.mxu0 %v1913
        %2385 = vmatprep.subr.bf16.mxu0 %v1918
        %2386 = vmatpush1.bf16.msra.mxu0 %v1917
        %2387 = vmatprep.subr.bf16.mxu0 %v1922
        %2388 = vmatpush1.bf16.msra.mxu0 %v1921
        %2389 = vmatprep.subr.bf16.mxu0 %v1926
        %2390 = vmatpush1.bf16.msra.mxu0 %v1925
        %2391 = vmatprep.subr.bf16.mxu0 %v1930
        %2392 = vmatpush1.bf16.msra.mxu0 %v1929
        %2393 = vmatprep.subr.bf16.mxu0 %v1934
        %2394 = vmatpush1.bf16.msra.mxu0 %v1933
        %2395 = vmatprep.subr.bf16.mxu0 %v1938
        %2396 = vmatpush1.bf16.msra.mxu0 %v1937
        %2397 = vmatprep.subr.bf16.mxu0 %v1942
        %2398 = vmatpush1.bf16.msra.mxu0 %v1941
        %2399 = vmatprep.subr.bf16.mxu0 %v1946
        %2400 = vmatpush1.bf16.msra.mxu0 %v1945
        %2401 = vmatprep.subr.bf16.mxu0 %v1950
        %2402 = vmatpush1.bf16.msra.mxu0 %v1949
        %2403 = vmatprep.subr.bf16.mxu0 %v1954
        %2404 = vmatpush1.bf16.msra.mxu0 %v1953
        %2405 = vmatprep.mubr.bf16.mxu0 %v1348
        %2406 = vmatmul.mubr.bf16.gmra.mrb[0].mxu0 %v1347
        %v2407 = vpop.f32.mrb[0].mxu0
        %v2408 = vadd.f32 0.0, %v2407
        %v2409 = vpop.f32.mrb[0].mxu0
        %v2410 = vadd.f32 0.0, %v2409
        %v2411 = vpop.f32.mrb[0].mxu0
        %v2412 = vadd.f32 0.0, %v2411
        %v2413 = vpop.f32.mrb[0].mxu0
        %v2414 = vadd.f32 0.0, %v2413
        %2415 = vmatprep.mubr.bf16.mxu0 %v1352
        %2416 = vmatmul.mubr.bf16.gmra.mrb[0].mxu0 %v1351
        %v2417 = vpop.f32.mrb[0].mxu0
        %v2418 = vadd.f32 0.0, %v2417
        %v2419 = vpop.f32.mrb[0].mxu0
        %v2420 = vadd.f32 0.0, %v2419
        %v2421 = vpop.f32.mrb[0].mxu0
        %v2422 = vadd.f32 0.0, %v2421
        %v2423 = vpop.f32.mrb[0].mxu0
        %v2424 = vadd.f32 0.0, %v2423
        %2425 = vmatprep.mubr.bf16.mxu0 %v1356
        %2426 = vmatmul.mubr.bf16.gmra.mrb[0].mxu0 %v1355
        %v2427 = vpop.f32.mrb[0].mxu0
        %v2428 = vadd.f32 0.0, %v2427
        %v2429 = vpop.f32.mrb[0].mxu0
        %v2430 = vadd.f32 0.0, %v2429
        %v2431 = vpop.f32.mrb[0].mxu0
        %v2432 = vadd.f32 0.0, %v2431
        %v2433 = vpop.f32.mrb[0].mxu0
        %v2434 = vadd.f32 0.0, %v2433
        %2435 = vmatprep.mubr.bf16.mxu0 %v1360
        %2436 = vmatmul.mubr.bf16.gmra.mrb[0].mxu0 %v1359
        %v2437 = vpop.f32.mrb[0].mxu0
        %v2438 = vadd.f32 0.0, %v2437
        %v2439 = vpop.f32.mrb[0].mxu0
        %v2440 = vadd.f32 0.0, %v2439
        %v2441 = vpop.f32.mrb[0].mxu0
        %v2442 = vadd.f32 0.0, %v2441
        %v2443 = vpop.f32.mrb[0].mxu0
        %v2444 = vadd.f32 0.0, %v2443
        %2445 = vmatprep.mubr.bf16.mxu0 %v1364
        %2446 = vmatmul.mubr.bf16.gmra.mrb[0].mxu0 %v1363
        %v2447 = vpop.f32.mrb[0].mxu0
        %v2448 = vadd.f32 0.0, %v2447
        %v2449 = vpop.f32.mrb[0].mxu0
        %v2450 = vadd.f32 0.0, %v2449
        %v2451 = vpop.f32.mrb[0].mxu0
        %v2452 = vadd.f32 0.0, %v2451
        %v2453 = vpop.f32.mrb[0].mxu0
        %v2454 = vadd.f32 0.0, %v2453
        %2455 = vmatprep.mubr.bf16.mxu0 %v1368
        %2456 = vmatmul.mubr.bf16.gmra.mrb[0].mxu0 %v1367
        %v2457 = vpop.f32.mrb[0].mxu0
        %v2458 = vadd.f32 0.0, %v2457
        %v2459 = vpop.f32.mrb[0].mxu0
        %v2460 = vadd.f32 0.0, %v2459
        %v2461 = vpop.f32.mrb[0].mxu0
        %v2462 = vadd.f32 0.0, %v2461
        %v2463 = vpop.f32.mrb[0].mxu0
        %v2464 = vadd.f32 0.0, %v2463
        %2465 = vmatprep.mubr.bf16.mxu0 %v1372
        %2466 = vmatmul.mubr.bf16.gmra.mrb[0].mxu0 %v1371
        %v2467 = vpop.f32.mrb[0].mxu0
        %v2468 = vadd.f32 0.0, %v2467
        %v2469 = vpop.f32.mrb[0].mxu0
        %v2470 = vadd.f32 0.0, %v2469
        %v2471 = vpop.f32.mrb[0].mxu0
        %v2472 = vadd.f32 0.0, %v2471
        %v2473 = vpop.f32.mrb[0].mxu0
        %v2474 = vadd.f32 0.0, %v2473
        %2475 = vmatprep.mubr.bf16.mxu0 %v1376
        %2476 = vmatmul.mubr.bf16.gmra.mrb[0].mxu0 %v1375
        %v2477 = vpop.f32.mrb[0].mxu0
        %v2478 = vadd.f32 0.0, %v2477
        %v2479 = vpop.f32.mrb[0].mxu0
        %v2480 = vadd.f32 0.0, %v2479
        %v2481 = vpop.f32.mrb[0].mxu0
        %v2482 = vadd.f32 0.0, %v2481
        %v2483 = vpop.f32.mrb[0].mxu0
        %v2484 = vadd.f32 0.0, %v2483
        %2485 = vdwg.mxu0
        %2486 = vmatprep.subr.bf16.mxu0 %v1958
        %2487 = vmatpush1.bf16.msra.mxu0 %v1957
        %2488 = vmatprep.subr.bf16.mxu0 %v1962
        %2489 = vmatpush1.bf16.msra.mxu0 %v1961
        %2490 = vmatprep.subr.bf16.mxu0 %v1966
        %2491 = vmatpush1.bf16.msra.mxu0 %v1965
        %2492 = vmatprep.subr.bf16.mxu0 %v1970
        %2493 = vmatpush1.bf16.msra.mxu0 %v1969
        %2494 = vmatprep.subr.bf16.mxu0 %v1974
        %2495 = vmatpush1.bf16.msra.mxu0 %v1973
        %2496 = vmatprep.subr.bf16.mxu0 %v1978
        %2497 = vmatpush1.bf16.msra.mxu0 %v1977
        %2498 = vmatprep.subr.bf16.mxu0 %v1982
        %2499 = vmatpush1.bf16.msra.mxu0 %v1981
        %2500 = vmatprep.subr.bf16.mxu0 %v1986
        %2501 = vmatpush1.bf16.msra.mxu0 %v1985
        %2502 = vmatprep.subr.bf16.mxu0 %v1990
        %2503 = vmatpush1.bf16.msra.mxu0 %v1989
        %2504 = vmatprep.subr.bf16.mxu0 %v1994
        %2505 = vmatpush1.bf16.msra.mxu0 %v1993
        %2506 = vmatprep.subr.bf16.mxu0 %v1998
        %2507 = vmatpush1.bf16.msra.mxu0 %v1997
        %2508 = vmatprep.subr.bf16.mxu0 %v2002
        %2509 = vmatpush1.bf16.msra.mxu0 %v2001
        %2510 = vmatprep.subr.bf16.mxu0 %v2006
        %2511 = vmatpush1.bf16.msra.mxu0 %v2005
        %2512 = vmatprep.subr.bf16.mxu0 %v2010
        %2513 = vmatpush1.bf16.msra.mxu0 %v2009
        %2514 = vmatprep.subr.bf16.mxu0 %v2014
        %2515 = vmatpush1.bf16.msra.mxu0 %v2013
        %2516 = vmatprep.subr.bf16.mxu0 %v2018
        %2517 = vmatpush1.bf16.msra.mxu0 %v2017
        %2518 = vmatprep.mubr.bf16.mxu0 %v1350
        %2519 = vmatmul.mubr.bf16.gmra.mrb[0].mxu0 %v1349
        %v2520 = vpop.f32.mrb[0].mxu0
        %v2521 = vadd.f32 %v2408, %v2520
        %v2522 = vpop.f32.mrb[0].mxu0
        %v2523 = vadd.f32 %v2410, %v2522
        %v2524 = vpop.f32.mrb[0].mxu0
        %v2525 = vadd.f32 %v2412, %v2524
        %v2526 = vpop.f32.mrb[0].mxu0
        %v2527 = vadd.f32 %v2414, %v2526
        %2528 = vmatprep.mubr.bf16.mxu0 %v1354
        %2529 = vmatmul.mubr.bf16.gmra.mrb[0].mxu0 %v1353
        %v2530 = vpop.f32.mrb[0].mxu0
        %v2531 = vadd.f32 %v2418, %v2530
        %v2532 = vpop.f32.mrb[0].mxu0
        %v2533 = vadd.f32 %v2420, %v2532
        %v2534 = vpop.f32.mrb[0].mxu0
        %v2535 = vadd.f32 %v2422, %v2534
        %v2536 = vpop.f32.mrb[0].mxu0
        %v2537 = vadd.f32 %v2424, %v2536
        %2538 = vmatprep.mubr.bf16.mxu0 %v1358
        %2539 = vmatmul.mubr.bf16.gmra.mrb[0].mxu0 %v1357
        %v2540 = vpop.f32.mrb[0].mxu0
        %v2541 = vadd.f32 %v2428, %v2540
        %v2542 = vpop.f32.mrb[0].mxu0
        %v2543 = vadd.f32 %v2430, %v2542
        %v2544 = vpop.f32.mrb[0].mxu0
        %v2545 = vadd.f32 %v2432, %v2544
        %v2546 = vpop.f32.mrb[0].mxu0
        %v2547 = vadd.f32 %v2434, %v2546
        %2548 = vmatprep.mubr.bf16.mxu0 %v1362
        %2549 = vmatmul.mubr.bf16.gmra.mrb[0].mxu0 %v1361
        %v2550 = vpop.f32.mrb[0].mxu0
        %v2551 = vadd.f32 %v2438, %v2550
        %v2552 = vpop.f32.mrb[0].mxu0
        %v2553 = vadd.f32 %v2440, %v2552
        %v2554 = vpop.f32.mrb[0].mxu0
        %v2555 = vadd.f32 %v2442, %v2554
        %v2556 = vpop.f32.mrb[0].mxu0
        %v2557 = vadd.f32 %v2444, %v2556
        %2558 = vmatprep.mubr.bf16.mxu0 %v1366
        %2559 = vmatmul.mubr.bf16.gmra.mrb[0].mxu0 %v1365
        %v2560 = vpop.f32.mrb[0].mxu0
        %v2561 = vadd.f32 %v2448, %v2560
        %v2562 = vpop.f32.mrb[0].mxu0
        %v2563 = vadd.f32 %v2450, %v2562
        %v2564 = vpop.f32.mrb[0].mxu0
        %v2565 = vadd.f32 %v2452, %v2564
        %v2566 = vpop.f32.mrb[0].mxu0
        %v2567 = vadd.f32 %v2454, %v2566
        %2568 = vmatprep.mubr.bf16.mxu0 %v1370
        %2569 = vmatmul.mubr.bf16.gmra.mrb[0].mxu0 %v1369
        %v2570 = vpop.f32.mrb[0].mxu0
        %v2571 = vadd.f32 %v2458, %v2570
        %v2572 = vpop.f32.mrb[0].mxu0
        %v2573 = vadd.f32 %v2460, %v2572
        %v2574 = vpop.f32.mrb[0].mxu0
        %v2575 = vadd.f32 %v2462, %v2574
        %v2576 = vpop.f32.mrb[0].mxu0
        %v2577 = vadd.f32 %v2464, %v2576
        %2578 = vmatprep.mubr.bf16.mxu0 %v1374
        %2579 = vmatmul.mubr.bf16.gmra.mrb[0].mxu0 %v1373
        %v2580 = vpop.f32.mrb[0].mxu0
        %v2581 = vadd.f32 %v2468, %v2580
        %v2582 = vpop.f32.mrb[0].mxu0
        %v2583 = vadd.f32 %v2470, %v2582
        %v2584 = vpop.f32.mrb[0].mxu0
        %v2585 = vadd.f32 %v2472, %v2584
        %v2586 = vpop.f32.mrb[0].mxu0
        %v2587 = vadd.f32 %v2474, %v2586
        %2588 = vmatprep.mubr.bf16.mxu0 %v1378
        %2589 = vmatmul.mubr.bf16.gmra.mrb[0].mxu0 %v1377
        %v2590 = vpop.f32.mrb[0].mxu0
        %v2591 = vadd.f32 %v2478, %v2590
        %v2592 = vpop.f32.mrb[0].mxu0
        %v2593 = vadd.f32 %v2480, %v2592
        %v2594 = vpop.f32.mrb[0].mxu0
        %v2595 = vadd.f32 %v2482, %v2594
        %v2596 = vpop.f32.mrb[0].mxu0
        %v2597 = vadd.f32 %v2484, %v2596
        %2598 = vdwg.mxu0
        %v2599 = vpack.c.bf16 %v1129, %v1129
        %v2600 = vpack.c.bf16 %v1136, %v1136
        %v2601 = vpack.c.bf16 %v1143, %v1143
        %v2602 = vpack.c.bf16 %v1150, %v1150
        %v2603 = vpack.c.bf16 %v1157, %v1157
        %v2604 = vpack.c.bf16 %v1164, %v1164
        %v2605 = vpack.c.bf16 %v1171, %v1171
        %v2606 = vpack.c.bf16 %v1178, %v1178
        %v2607 = vpack.c.bf16 %v1185, %v1185
        %v2608 = vpack.c.bf16 %v1192, %v1192
        %v2609 = vpack.c.bf16 %v1199, %v1199
        %v2610 = vpack.c.bf16 %v1206, %v1206
        %v2611 = vpack.c.bf16 %v1213, %v1213
        %v2612 = vpack.c.bf16 %v1220, %v1220
        %v2613 = vpack.c.bf16 %v1227, %v1227
        %v2614 = vpack.c.bf16 %v1234, %v1234
        %v2615 = vpack.c.bf16 %v1241, %v1241
        %v2616 = vpack.c.bf16 %v1248, %v1248
        %v2617 = vpack.c.bf16 %v1255, %v1255
        %v2618 = vpack.c.bf16 %v1262, %v1262
        %v2619 = vpack.c.bf16 %v1269, %v1269
        %v2620 = vpack.c.bf16 %v1276, %v1276
        %v2621 = vpack.c.bf16 %v1283, %v1283
        %v2622 = vpack.c.bf16 %v1290, %v1290
        %v2623 = vpack.c.bf16 %v1297, %v1297
        %v2624 = vpack.c.bf16 %v1304, %v1304
        %v2625 = vpack.c.bf16 %v1311, %v1311
        %v2626 = vpack.c.bf16 %v1318, %v1318
        %v2627 = vpack.c.bf16 %v1325, %v1325
        %v2628 = vpack.c.bf16 %v1332, %v1332
        %v2629 = vpack.c.bf16 %v1339, %v1339
        %v2630 = vpack.c.bf16 %v1346, %v1346
        %v2631 = vld [vmem:[#allocation11] sm:$0xff]
        %v2632 = vld [vmem:[#allocation11 + $0x8] sm:$0xff]
        %v2633 = vld [vmem:[#allocation11 + $0x10] sm:$0xff]
        %v2634 = vld [vmem:[#allocation11 + $0x18] sm:$0xff]
        %v2635 = vld [vmem:[#allocation11 + $0x20] sm:$0xff]
        %v2636 = vld [vmem:[#allocation11 + $0x28] sm:$0xff]
        %v2637 = vld [vmem:[#allocation11 + $0x30] sm:$0xff]
        %v2638 = vld [vmem:[#allocation11 + $0x38] sm:$0xff]
        %v2639 = vld [vmem:[#allocation11 + $0x40] sm:$0xff]
        %v2640 = vld [vmem:[#allocation11 + $0x48] sm:$0xff]
        %v2641 = vld [vmem:[#allocation11 + $0x50] sm:$0xff]
        %v2642 = vld [vmem:[#allocation11 + $0x58] sm:$0xff]
        %v2643 = vld [vmem:[#allocation11 + $0x60] sm:$0xff]
        %v2644 = vld [vmem:[#allocation11 + $0x68] sm:$0xff]
        %v2645 = vld [vmem:[#allocation11 + $0x70] sm:$0xff]
        %v2646 = vld [vmem:[#allocation11 + $0x78] sm:$0xff]
        %v2647 = vld [vmem:[#allocation11 + $0x80] sm:$0xff]
        %v2648 = vld [vmem:[#allocation11 + $0x88] sm:$0xff]
        %v2649 = vld [vmem:[#allocation11 + $0x90] sm:$0xff]
        %v2650 = vld [vmem:[#allocation11 + $0x98] sm:$0xff]
        %v2651 = vld [vmem:[#allocation11 + $0xa0] sm:$0xff]
        %v2652 = vld [vmem:[#allocation11 + $0xa8] sm:$0xff]
        %v2653 = vld [vmem:[#allocation11 + $0xb0] sm:$0xff]
        %v2654 = vld [vmem:[#allocation11 + $0xb8] sm:$0xff]
        %v2655 = vld [vmem:[#allocation11 + $0xc0] sm:$0xff]
        %v2656 = vld [vmem:[#allocation11 + $0xc8] sm:$0xff]
        %v2657 = vld [vmem:[#allocation11 + $0xd0] sm:$0xff]
        %v2658 = vld [vmem:[#allocation11 + $0xd8] sm:$0xff]
        %v2659 = vld [vmem:[#allocation11 + $0xe0] sm:$0xff]
        %v2660 = vld [vmem:[#allocation11 + $0xe8] sm:$0xff]
        %v2661 = vld [vmem:[#allocation11 + $0xf0] sm:$0xff]
        %v2662 = vld [vmem:[#allocation11 + $0xf8] sm:$0xff]
        %v2663 = vld [vmem:[#allocation11 + $0x100] sm:$0xff]
        %v2664 = vld [vmem:[#allocation11 + $0x108] sm:$0xff]
        %v2665 = vld [vmem:[#allocation11 + $0x110] sm:$0xff]
        %v2666 = vld [vmem:[#allocation11 + $0x118] sm:$0xff]
        %v2667 = vld [vmem:[#allocation11 + $0x120] sm:$0xff]
        %v2668 = vld [vmem:[#allocation11 + $0x128] sm:$0xff]
        %v2669 = vld [vmem:[#allocation11 + $0x130] sm:$0xff]
        %v2670 = vld [vmem:[#allocation11 + $0x138] sm:$0xff]
        %v2671 = vld [vmem:[#allocation11 + $0x140] sm:$0xff]
        %v2672 = vld [vmem:[#allocation11 + $0x148] sm:$0xff]
        %v2673 = vld [vmem:[#allocation11 + $0x150] sm:$0xff]
        %v2674 = vld [vmem:[#allocation11 + $0x158] sm:$0xff]
        %v2675 = vld [vmem:[#allocation11 + $0x160] sm:$0xff]
        %v2676 = vld [vmem:[#allocation11 + $0x168] sm:$0xff]
        %v2677 = vld [vmem:[#allocation11 + $0x170] sm:$0xff]
        %v2678 = vld [vmem:[#allocation11 + $0x178] sm:$0xff]
        %v2679 = vld [vmem:[#allocation11 + $0x180] sm:$0xff]
        %v2680 = vld [vmem:[#allocation11 + $0x188] sm:$0xff]
        %v2681 = vld [vmem:[#allocation11 + $0x190] sm:$0xff]
        %v2682 = vld [vmem:[#allocation11 + $0x198] sm:$0xff]
        %v2683 = vld [vmem:[#allocation11 + $0x1a0] sm:$0xff]
        %v2684 = vld [vmem:[#allocation11 + $0x1a8] sm:$0xff]
        %v2685 = vld [vmem:[#allocation11 + $0x1b0] sm:$0xff]
        %v2686 = vld [vmem:[#allocation11 + $0x1b8] sm:$0xff]
        %v2687 = vld [vmem:[#allocation11 + $0x1c0] sm:$0xff]
        %v2688 = vld [vmem:[#allocation11 + $0x1c8] sm:$0xff]
        %v2689 = vld [vmem:[#allocation11 + $0x1d0] sm:$0xff]
        %v2690 = vld [vmem:[#allocation11 + $0x1d8] sm:$0xff]
        %v2691 = vld [vmem:[#allocation11 + $0x1e0] sm:$0xff]
        %v2692 = vld [vmem:[#allocation11 + $0x1e8] sm:$0xff]
        %v2693 = vld [vmem:[#allocation11 + $0x1f0] sm:$0xff]
        %v2694 = vld [vmem:[#allocation11 + $0x1f8] sm:$0xff]
        %v2695 = vld [vmem:[#allocation11 + $0x200] sm:$0xff]
        %v2696 = vld [vmem:[#allocation11 + $0x208] sm:$0xff]
        %v2697 = vld [vmem:[#allocation11 + $0x210] sm:$0xff]
        %v2698 = vld [vmem:[#allocation11 + $0x218] sm:$0xff]
        %v2699 = vld [vmem:[#allocation11 + $0x220] sm:$0xff]
        %v2700 = vld [vmem:[#allocation11 + $0x228] sm:$0xff]
        %v2701 = vld [vmem:[#allocation11 + $0x230] sm:$0xff]
        %v2702 = vld [vmem:[#allocation11 + $0x238] sm:$0xff]
        %v2703 = vld [vmem:[#allocation11 + $0x240] sm:$0xff]
        %v2704 = vld [vmem:[#allocation11 + $0x248] sm:$0xff]
        %v2705 = vld [vmem:[#allocation11 + $0x250] sm:$0xff]
        %v2706 = vld [vmem:[#allocation11 + $0x258] sm:$0xff]
        %v2707 = vld [vmem:[#allocation11 + $0x260] sm:$0xff]
        %v2708 = vld [vmem:[#allocation11 + $0x268] sm:$0xff]
        %v2709 = vld [vmem:[#allocation11 + $0x270] sm:$0xff]
        %v2710 = vld [vmem:[#allocation11 + $0x278] sm:$0xff]
        %v2711 = vld [vmem:[#allocation11 + $0x280] sm:$0xff]
        %v2712 = vld [vmem:[#allocation11 + $0x288] sm:$0xff]
        %v2713 = vld [vmem:[#allocation11 + $0x290] sm:$0xff]
        %v2714 = vld [vmem:[#allocation11 + $0x298] sm:$0xff]
        %v2715 = vld [vmem:[#allocation11 + $0x2a0] sm:$0xff]
        %v2716 = vld [vmem:[#allocation11 + $0x2a8] sm:$0xff]
        %v2717 = vld [vmem:[#allocation11 + $0x2b0] sm:$0xff]
        %v2718 = vld [vmem:[#allocation11 + $0x2b8] sm:$0xff]
        %v2719 = vld [vmem:[#allocation11 + $0x2c0] sm:$0xff]
        %v2720 = vld [vmem:[#allocation11 + $0x2c8] sm:$0xff]
        %v2721 = vld [vmem:[#allocation11 + $0x2d0] sm:$0xff]
        %v2722 = vld [vmem:[#allocation11 + $0x2d8] sm:$0xff]
        %v2723 = vld [vmem:[#allocation11 + $0x2e0] sm:$0xff]
        %v2724 = vld [vmem:[#allocation11 + $0x2e8] sm:$0xff]
        %v2725 = vld [vmem:[#allocation11 + $0x2f0] sm:$0xff]
        %v2726 = vld [vmem:[#allocation11 + $0x2f8] sm:$0xff]
        %v2727 = vld [vmem:[#allocation11 + $0x300] sm:$0xff]
        %v2728 = vld [vmem:[#allocation11 + $0x308] sm:$0xff]
        %v2729 = vld [vmem:[#allocation11 + $0x310] sm:$0xff]
        %v2730 = vld [vmem:[#allocation11 + $0x318] sm:$0xff]
        %v2731 = vld [vmem:[#allocation11 + $0x320] sm:$0xff]
        %v2732 = vld [vmem:[#allocation11 + $0x328] sm:$0xff]
        %v2733 = vld [vmem:[#allocation11 + $0x330] sm:$0xff]
        %v2734 = vld [vmem:[#allocation11 + $0x338] sm:$0xff]
        %v2735 = vld [vmem:[#allocation11 + $0x340] sm:$0xff]
        %v2736 = vld [vmem:[#allocation11 + $0x348] sm:$0xff]
        %v2737 = vld [vmem:[#allocation11 + $0x350] sm:$0xff]
        %v2738 = vld [vmem:[#allocation11 + $0x358] sm:$0xff]
        %v2739 = vld [vmem:[#allocation11 + $0x360] sm:$0xff]
        %v2740 = vld [vmem:[#allocation11 + $0x368] sm:$0xff]
        %v2741 = vld [vmem:[#allocation11 + $0x370] sm:$0xff]
        %v2742 = vld [vmem:[#allocation11 + $0x378] sm:$0xff]
        %v2743 = vld [vmem:[#allocation11 + $0x380] sm:$0xff]
        %v2744 = vld [vmem:[#allocation11 + $0x388] sm:$0xff]
        %v2745 = vld [vmem:[#allocation11 + $0x390] sm:$0xff]
        %v2746 = vld [vmem:[#allocation11 + $0x398] sm:$0xff]
        %v2747 = vld [vmem:[#allocation11 + $0x3a0] sm:$0xff]
        %v2748 = vld [vmem:[#allocation11 + $0x3a8] sm:$0xff]
        %v2749 = vld [vmem:[#allocation11 + $0x3b0] sm:$0xff]
        %v2750 = vld [vmem:[#allocation11 + $0x3b8] sm:$0xff]
        %v2751 = vld [vmem:[#allocation11 + $0x3c0] sm:$0xff]
        %v2752 = vld [vmem:[#allocation11 + $0x3c8] sm:$0xff]
        %v2753 = vld [vmem:[#allocation11 + $0x3d0] sm:$0xff]
        %v2754 = vld [vmem:[#allocation11 + $0x3d8] sm:$0xff]
        %v2755 = vld [vmem:[#allocation11 + $0x3e0] sm:$0xff]
        %v2756 = vld [vmem:[#allocation11 + $0x3e8] sm:$0xff]
        %v2757 = vld [vmem:[#allocation11 + $0x3f0] sm:$0xff]
        %v2758 = vld [vmem:[#allocation11 + $0x3f8] sm:$0xff]
        %v2791 = vunpack.c.l.b16 %v2599
        %v2792 = vunpack.c.l.b16 %v2600
        %v2793 = vunpack.c.l.b16 %v2601
        %v2794 = vunpack.c.l.b16 %v2602
        %v2795 = vunpack.c.l.b16 %v2603
        %v2796 = vunpack.c.l.b16 %v2604
        %v2797 = vunpack.c.l.b16 %v2605
        %v2798 = vunpack.c.l.b16 %v2606
        %v2799 = vunpack.c.l.b16 %v2607
        %v2800 = vunpack.c.l.b16 %v2608
        %v2801 = vunpack.c.l.b16 %v2609
        %v2802 = vunpack.c.l.b16 %v2610
        %v2803 = vunpack.c.l.b16 %v2611
        %v2804 = vunpack.c.l.b16 %v2612
        %v2805 = vunpack.c.l.b16 %v2613
        %v2806 = vunpack.c.l.b16 %v2614
        %v2807 = vunpack.c.l.b16 %v2615
        %v2808 = vunpack.c.l.b16 %v2616
        %v2809 = vunpack.c.l.b16 %v2617
        %v2810 = vunpack.c.l.b16 %v2618
        %v2811 = vunpack.c.l.b16 %v2619
        %v2812 = vunpack.c.l.b16 %v2620
        %v2813 = vunpack.c.l.b16 %v2621
        %v2814 = vunpack.c.l.b16 %v2622
        %v2815 = vunpack.c.l.b16 %v2623
        %v2816 = vunpack.c.l.b16 %v2624
        %v2817 = vunpack.c.l.b16 %v2625
        %v2818 = vunpack.c.l.b16 %v2626
        %v2819 = vunpack.c.l.b16 %v2627
        %v2820 = vunpack.c.l.b16 %v2628
        %v2821 = vunpack.c.l.b16 %v2629
        %v2822 = vunpack.c.l.b16 %v2630
        %vm2823 = vcmask 1041409
        %v2824 = vsel %vm2823, %v2795, %v2791
        %vm2825 = vcmask 1042434
        %v2826 = vsel %vm2825, %v2799, %v2824
        %vm2827 = vcmask 1043459
        %v2828 = vsel %vm2827, %v2803, %v2826
        %vm2829 = vcmask 1044484
        %v2830 = vsel %vm2829, %v2807, %v2828
        %vm2831 = vcmask 1045509
        %v2832 = vsel %vm2831, %v2811, %v2830
        %vm2833 = vcmask 1046534
        %v2834 = vsel %vm2833, %v2815, %v2832
        %vm2835 = vcmask 1047559
        %v2836 = vsel %vm2835, %v2819, %v2834
        %v2837 = vsel %vm2823, %v2796, %v2792
        %v2838 = vsel %vm2825, %v2800, %v2837
        %v2839 = vsel %vm2827, %v2804, %v2838
        %v2840 = vsel %vm2829, %v2808, %v2839
        %v2841 = vsel %vm2831, %v2812, %v2840
        %v2842 = vsel %vm2833, %v2816, %v2841
        %v2843 = vsel %vm2835, %v2820, %v2842
        %v2844 = vsel %vm2823, %v2797, %v2793
        %v2845 = vsel %vm2825, %v2801, %v2844
        %v2846 = vsel %vm2827, %v2805, %v2845
        %v2847 = vsel %vm2829, %v2809, %v2846
        %v2848 = vsel %vm2831, %v2813, %v2847
        %v2849 = vsel %vm2833, %v2817, %v2848
        %v2850 = vsel %vm2835, %v2821, %v2849
        %v2851 = vsel %vm2823, %v2798, %v2794
        %v2852 = vsel %vm2825, %v2802, %v2851
        %v2853 = vsel %vm2827, %v2806, %v2852
        %v2854 = vsel %vm2829, %v2810, %v2853
        %v2855 = vsel %vm2831, %v2814, %v2854
        %v2856 = vsel %vm2833, %v2818, %v2855
        %v2857 = vsel %vm2835, %v2822, %v2856
        %v2858 = vpack.c.b16 %v2836, %v2836
        %v2859 = vpack.c.b16 %v2843, %v2843
        %v2860 = vpack.c.b16 %v2850, %v2850
        %v2861 = vpack.c.b16 %v2857, %v2857
        %v2994 = vunpack.c.l.b16 %v2631
        %v2995 = vunpack.c.h.b16 %v2631
        %v2996 = vunpack.c.l.b16 %v2632
        %v2997 = vunpack.c.h.b16 %v2632
        %v2998 = vunpack.c.l.b16 %v2633
        %v2999 = vunpack.c.h.b16 %v2633
        %v3000 = vunpack.c.l.b16 %v2634
        %v3001 = vunpack.c.h.b16 %v2634
        %v3002 = vunpack.c.l.b16 %v2635
        %v3003 = vunpack.c.h.b16 %v2635
        %v3004 = vunpack.c.l.b16 %v2636
        %v3005 = vunpack.c.h.b16 %v2636
        %v3006 = vunpack.c.l.b16 %v2637
        %v3007 = vunpack.c.h.b16 %v2637
        %v3008 = vunpack.c.l.b16 %v2638
        %v3009 = vunpack.c.h.b16 %v2638
        %v3010 = vunpack.c.l.b16 %v2639
        %v3011 = vunpack.c.h.b16 %v2639
        %v3012 = vunpack.c.l.b16 %v2640
        %v3013 = vunpack.c.h.b16 %v2640
        %v3014 = vunpack.c.l.b16 %v2641
        %v3015 = vunpack.c.h.b16 %v2641
        %v3016 = vunpack.c.l.b16 %v2642
        %v3017 = vunpack.c.h.b16 %v2642
        %v3018 = vunpack.c.l.b16 %v2643
        %v3019 = vunpack.c.h.b16 %v2643
        %v3020 = vunpack.c.l.b16 %v2644
        %v3021 = vunpack.c.h.b16 %v2644
        %v3022 = vunpack.c.l.b16 %v2645
        %v3023 = vunpack.c.h.b16 %v2645
        %v3024 = vunpack.c.l.b16 %v2646
        %v3025 = vunpack.c.h.b16 %v2646
        %v3026 = vunpack.c.l.b16 %v2647
        %v3027 = vunpack.c.h.b16 %v2647
        %v3028 = vunpack.c.l.b16 %v2648
        %v3029 = vunpack.c.h.b16 %v2648
        %v3030 = vunpack.c.l.b16 %v2649
        %v3031 = vunpack.c.h.b16 %v2649
        %v3032 = vunpack.c.l.b16 %v2650
        %v3033 = vunpack.c.h.b16 %v2650
        %v3034 = vunpack.c.l.b16 %v2651
        %v3035 = vunpack.c.h.b16 %v2651
        %v3036 = vunpack.c.l.b16 %v2652
        %v3037 = vunpack.c.h.b16 %v2652
        %v3038 = vunpack.c.l.b16 %v2653
        %v3039 = vunpack.c.h.b16 %v2653
        %v3040 = vunpack.c.l.b16 %v2654
        %v3041 = vunpack.c.h.b16 %v2654
        %v3042 = vunpack.c.l.b16 %v2655
        %v3043 = vunpack.c.h.b16 %v2655
        %v3044 = vunpack.c.l.b16 %v2656
        %v3045 = vunpack.c.h.b16 %v2656
        %v3046 = vunpack.c.l.b16 %v2657
        %v3047 = vunpack.c.h.b16 %v2657
        %v3048 = vunpack.c.l.b16 %v2658
        %v3049 = vunpack.c.h.b16 %v2658
        %v3050 = vunpack.c.l.b16 %v2659
        %v3051 = vunpack.c.h.b16 %v2659
        %v3052 = vunpack.c.l.b16 %v2660
        %v3053 = vunpack.c.h.b16 %v2660
        %v3054 = vunpack.c.l.b16 %v2661
        %v3055 = vunpack.c.h.b16 %v2661
        %v3056 = vunpack.c.l.b16 %v2662
        %v3057 = vunpack.c.h.b16 %v2662
        %v3058 = vunpack.c.l.b16 %v2663
        %v3059 = vunpack.c.h.b16 %v2663
        %v3060 = vunpack.c.l.b16 %v2664
        %v3061 = vunpack.c.h.b16 %v2664
        %v3062 = vunpack.c.l.b16 %v2665
        %v3063 = vunpack.c.h.b16 %v2665
        %v3064 = vunpack.c.l.b16 %v2666
        %v3065 = vunpack.c.h.b16 %v2666
        %v3066 = vunpack.c.l.b16 %v2667
        %v3067 = vunpack.c.h.b16 %v2667
        %v3068 = vunpack.c.l.b16 %v2668
        %v3069 = vunpack.c.h.b16 %v2668
        %v3070 = vunpack.c.l.b16 %v2669
        %v3071 = vunpack.c.h.b16 %v2669
        %v3072 = vunpack.c.l.b16 %v2670
        %v3073 = vunpack.c.h.b16 %v2670
        %v3074 = vunpack.c.l.b16 %v2671
        %v3075 = vunpack.c.h.b16 %v2671
        %v3076 = vunpack.c.l.b16 %v2672
        %v3077 = vunpack.c.h.b16 %v2672
        %v3078 = vunpack.c.l.b16 %v2673
        %v3079 = vunpack.c.h.b16 %v2673
        %v3080 = vunpack.c.l.b16 %v2674
        %v3081 = vunpack.c.h.b16 %v2674
        %v3082 = vunpack.c.l.b16 %v2675
        %v3083 = vunpack.c.h.b16 %v2675
        %v3084 = vunpack.c.l.b16 %v2676
        %v3085 = vunpack.c.h.b16 %v2676
        %v3086 = vunpack.c.l.b16 %v2677
        %v3087 = vunpack.c.h.b16 %v2677
        %v3088 = vunpack.c.l.b16 %v2678
        %v3089 = vunpack.c.h.b16 %v2678
        %v3090 = vunpack.c.l.b16 %v2679
        %v3091 = vunpack.c.h.b16 %v2679
        %v3092 = vunpack.c.l.b16 %v2680
        %v3093 = vunpack.c.h.b16 %v2680
        %v3094 = vunpack.c.l.b16 %v2681
        %v3095 = vunpack.c.h.b16 %v2681
        %v3096 = vunpack.c.l.b16 %v2682
        %v3097 = vunpack.c.h.b16 %v2682
        %v3098 = vunpack.c.l.b16 %v2683
        %v3099 = vunpack.c.h.b16 %v2683
        %v3100 = vunpack.c.l.b16 %v2684
        %v3101 = vunpack.c.h.b16 %v2684
        %v3102 = vunpack.c.l.b16 %v2685
        %v3103 = vunpack.c.h.b16 %v2685
        %v3104 = vunpack.c.l.b16 %v2686
        %v3105 = vunpack.c.h.b16 %v2686
        %v3106 = vunpack.c.l.b16 %v2687
        %v3107 = vunpack.c.h.b16 %v2687
        %v3108 = vunpack.c.l.b16 %v2688
        %v3109 = vunpack.c.h.b16 %v2688
        %v3110 = vunpack.c.l.b16 %v2689
        %v3111 = vunpack.c.h.b16 %v2689
        %v3112 = vunpack.c.l.b16 %v2690
        %v3113 = vunpack.c.h.b16 %v2690
        %v3114 = vunpack.c.l.b16 %v2691
        %v3115 = vunpack.c.h.b16 %v2691
        %v3116 = vunpack.c.l.b16 %v2692
        %v3117 = vunpack.c.h.b16 %v2692
        %v3118 = vunpack.c.l.b16 %v2693
        %v3119 = vunpack.c.h.b16 %v2693
        %v3120 = vunpack.c.l.b16 %v2694
        %v3121 = vunpack.c.h.b16 %v2694
        %v3122 = vunpack.c.l.b16 %v2695
        %v3123 = vunpack.c.h.b16 %v2695
        %v3124 = vunpack.c.l.b16 %v2696
        %v3125 = vunpack.c.h.b16 %v2696
        %v3126 = vunpack.c.l.b16 %v2697
        %v3127 = vunpack.c.h.b16 %v2697
        %v3128 = vunpack.c.l.b16 %v2698
        %v3129 = vunpack.c.h.b16 %v2698
        %v3130 = vunpack.c.l.b16 %v2699
        %v3131 = vunpack.c.h.b16 %v2699
        %v3132 = vunpack.c.l.b16 %v2700
        %v3133 = vunpack.c.h.b16 %v2700
        %v3134 = vunpack.c.l.b16 %v2701
        %v3135 = vunpack.c.h.b16 %v2701
        %v3136 = vunpack.c.l.b16 %v2702
        %v3137 = vunpack.c.h.b16 %v2702
        %v3138 = vunpack.c.l.b16 %v2703
        %v3139 = vunpack.c.h.b16 %v2703
        %v3140 = vunpack.c.l.b16 %v2704
        %v3141 = vunpack.c.h.b16 %v2704
        %v3142 = vunpack.c.l.b16 %v2705
        %v3143 = vunpack.c.h.b16 %v2705
        %v3144 = vunpack.c.l.b16 %v2706
        %v3145 = vunpack.c.h.b16 %v2706
        %v3146 = vunpack.c.l.b16 %v2707
        %v3147 = vunpack.c.h.b16 %v2707
        %v3148 = vunpack.c.l.b16 %v2708
        %v3149 = vunpack.c.h.b16 %v2708
        %v3150 = vunpack.c.l.b16 %v2709
        %v3151 = vunpack.c.h.b16 %v2709
        %v3152 = vunpack.c.l.b16 %v2710
        %v3153 = vunpack.c.h.b16 %v2710
        %v3154 = vunpack.c.l.b16 %v2711
        %v3155 = vunpack.c.h.b16 %v2711
        %v3156 = vunpack.c.l.b16 %v2712
        %v3157 = vunpack.c.h.b16 %v2712
        %v3158 = vunpack.c.l.b16 %v2713
        %v3159 = vunpack.c.h.b16 %v2713
        %v3160 = vunpack.c.l.b16 %v2714
        %v3161 = vunpack.c.h.b16 %v2714
        %v3162 = vunpack.c.l.b16 %v2715
        %v3163 = vunpack.c.h.b16 %v2715
        %v3164 = vunpack.c.l.b16 %v2716
        %v3165 = vunpack.c.h.b16 %v2716
        %v3166 = vunpack.c.l.b16 %v2717
        %v3167 = vunpack.c.h.b16 %v2717
        %v3168 = vunpack.c.l.b16 %v2718
        %v3169 = vunpack.c.h.b16 %v2718
        %v3170 = vunpack.c.l.b16 %v2719
        %v3171 = vunpack.c.h.b16 %v2719
        %v3172 = vunpack.c.l.b16 %v2720
        %v3173 = vunpack.c.h.b16 %v2720
        %v3174 = vunpack.c.l.b16 %v2721
        %v3175 = vunpack.c.h.b16 %v2721
        %v3176 = vunpack.c.l.b16 %v2722
        %v3177 = vunpack.c.h.b16 %v2722
        %v3178 = vunpack.c.l.b16 %v2723
        %v3179 = vunpack.c.h.b16 %v2723
        %v3180 = vunpack.c.l.b16 %v2724
        %v3181 = vunpack.c.h.b16 %v2724
        %v3182 = vunpack.c.l.b16 %v2725
        %v3183 = vunpack.c.h.b16 %v2725
        %v3184 = vunpack.c.l.b16 %v2726
        %v3185 = vunpack.c.h.b16 %v2726
        %v3186 = vunpack.c.l.b16 %v2727
        %v3187 = vunpack.c.h.b16 %v2727
        %v3188 = vunpack.c.l.b16 %v2728
        %v3189 = vunpack.c.h.b16 %v2728
        %v3190 = vunpack.c.l.b16 %v2729
        %v3191 = vunpack.c.h.b16 %v2729
        %v3192 = vunpack.c.l.b16 %v2730
        %v3193 = vunpack.c.h.b16 %v2730
        %v3194 = vunpack.c.l.b16 %v2731
        %v3195 = vunpack.c.h.b16 %v2731
        %v3196 = vunpack.c.l.b16 %v2732
        %v3197 = vunpack.c.h.b16 %v2732
        %v3198 = vunpack.c.l.b16 %v2733
        %v3199 = vunpack.c.h.b16 %v2733
        %v3200 = vunpack.c.l.b16 %v2734
        %v3201 = vunpack.c.h.b16 %v2734
        %v3202 = vunpack.c.l.b16 %v2735
        %v3203 = vunpack.c.h.b16 %v2735
        %v3204 = vunpack.c.l.b16 %v2736
        %v3205 = vunpack.c.h.b16 %v2736
        %v3206 = vunpack.c.l.b16 %v2737
        %v3207 = vunpack.c.h.b16 %v2737
        %v3208 = vunpack.c.l.b16 %v2738
        %v3209 = vunpack.c.h.b16 %v2738
        %v3210 = vunpack.c.l.b16 %v2739
        %v3211 = vunpack.c.h.b16 %v2739
        %v3212 = vunpack.c.l.b16 %v2740
        %v3213 = vunpack.c.h.b16 %v2740
        %v3214 = vunpack.c.l.b16 %v2741
        %v3215 = vunpack.c.h.b16 %v2741
        %v3216 = vunpack.c.l.b16 %v2742
        %v3217 = vunpack.c.h.b16 %v2742
        %v3218 = vunpack.c.l.b16 %v2743
        %v3219 = vunpack.c.h.b16 %v2743
        %v3220 = vunpack.c.l.b16 %v2744
        %v3221 = vunpack.c.h.b16 %v2744
        %v3222 = vunpack.c.l.b16 %v2745
        %v3223 = vunpack.c.h.b16 %v2745
        %v3224 = vunpack.c.l.b16 %v2746
        %v3225 = vunpack.c.h.b16 %v2746
        %v3226 = vunpack.c.l.b16 %v2747
        %v3227 = vunpack.c.h.b16 %v2747
        %v3228 = vunpack.c.l.b16 %v2748
        %v3229 = vunpack.c.h.b16 %v2748
        %v3230 = vunpack.c.l.b16 %v2749
        %v3231 = vunpack.c.h.b16 %v2749
        %v3232 = vunpack.c.l.b16 %v2750
        %v3233 = vunpack.c.h.b16 %v2750
        %v3234 = vunpack.c.l.b16 %v2751
        %v3235 = vunpack.c.h.b16 %v2751
        %v3236 = vunpack.c.l.b16 %v2752
        %v3237 = vunpack.c.h.b16 %v2752
        %v3238 = vunpack.c.l.b16 %v2753
        %v3239 = vunpack.c.h.b16 %v2753
        %v3240 = vunpack.c.l.b16 %v2754
        %v3241 = vunpack.c.h.b16 %v2754
        %v3242 = vunpack.c.l.b16 %v2755
        %v3243 = vunpack.c.h.b16 %v2755
        %v3244 = vunpack.c.l.b16 %v2756
        %v3245 = vunpack.c.h.b16 %v2756
        %v3246 = vunpack.c.l.b16 %v2757
        %v3247 = vunpack.c.h.b16 %v2757
        %v3248 = vunpack.c.l.b16 %v2758
        %v3249 = vunpack.c.h.b16 %v2758
        %v3250 = vpack.c.b16 %v2998, %v2994
        %v3251 = vpack.c.b16 %v2999, %v2995
        %v3252 = vpack.c.b16 %v3000, %v2996
        %v3253 = vpack.c.b16 %v3001, %v2997
        %v3254 = vpack.c.b16 %v3006, %v3002
        %v3255 = vpack.c.b16 %v3007, %v3003
        %v3256 = vpack.c.b16 %v3008, %v3004
        %v3257 = vpack.c.b16 %v3009, %v3005
        %v3258 = vpack.c.b16 %v3014, %v3010
        %v3259 = vpack.c.b16 %v3015, %v3011
        %v3260 = vpack.c.b16 %v3016, %v3012
        %v3261 = vpack.c.b16 %v3017, %v3013
        %v3262 = vpack.c.b16 %v3022, %v3018
        %v3263 = vpack.c.b16 %v3023, %v3019
        %v3264 = vpack.c.b16 %v3024, %v3020
        %v3265 = vpack.c.b16 %v3025, %v3021
        %v3266 = vpack.c.b16 %v3030, %v3026
        %v3267 = vpack.c.b16 %v3031, %v3027
        %v3268 = vpack.c.b16 %v3032, %v3028
        %v3269 = vpack.c.b16 %v3033, %v3029
        %v3270 = vpack.c.b16 %v3038, %v3034
        %v3271 = vpack.c.b16 %v3039, %v3035
        %v3272 = vpack.c.b16 %v3040, %v3036
        %v3273 = vpack.c.b16 %v3041, %v3037
        %v3274 = vpack.c.b16 %v3046, %v3042
        %v3275 = vpack.c.b16 %v3047, %v3043
        %v3276 = vpack.c.b16 %v3048, %v3044
        %v3277 = vpack.c.b16 %v3049, %v3045
        %v3278 = vpack.c.b16 %v3054, %v3050
        %v3279 = vpack.c.b16 %v3055, %v3051
        %v3280 = vpack.c.b16 %v3056, %v3052
        %v3281 = vpack.c.b16 %v3057, %v3053
        %v3282 = vpack.c.b16 %v3062, %v3058
        %v3283 = vpack.c.b16 %v3063, %v3059
        %v3284 = vpack.c.b16 %v3064, %v3060
        %v3285 = vpack.c.b16 %v3065, %v3061
        %v3286 = vpack.c.b16 %v3070, %v3066
        %v3287 = vpack.c.b16 %v3071, %v3067
        %v3288 = vpack.c.b16 %v3072, %v3068
        %v3289 = vpack.c.b16 %v3073, %v3069
        %v3290 = vpack.c.b16 %v3078, %v3074
        %v3291 = vpack.c.b16 %v3079, %v3075
        %v3292 = vpack.c.b16 %v3080, %v3076
        %v3293 = vpack.c.b16 %v3081, %v3077
        %v3294 = vpack.c.b16 %v3086, %v3082
        %v3295 = vpack.c.b16 %v3087, %v3083
        %v3296 = vpack.c.b16 %v3088, %v3084
        %v3297 = vpack.c.b16 %v3089, %v3085
        %v3298 = vpack.c.b16 %v3094, %v3090
        %v3299 = vpack.c.b16 %v3095, %v3091
        %v3300 = vpack.c.b16 %v3096, %v3092
        %v3301 = vpack.c.b16 %v3097, %v3093
        %v3302 = vpack.c.b16 %v3102, %v3098
        %v3303 = vpack.c.b16 %v3103, %v3099
        %v3304 = vpack.c.b16 %v3104, %v3100
        %v3305 = vpack.c.b16 %v3105, %v3101
        %v3306 = vpack.c.b16 %v3110, %v3106
        %v3307 = vpack.c.b16 %v3111, %v3107
        %v3308 = vpack.c.b16 %v3112, %v3108
        %v3309 = vpack.c.b16 %v3113, %v3109
        %v3310 = vpack.c.b16 %v3118, %v3114
        %v3311 = vpack.c.b16 %v3119, %v3115
        %v3312 = vpack.c.b16 %v3120, %v3116
        %v3313 = vpack.c.b16 %v3121, %v3117
        %v3314 = vpack.c.b16 %v3126, %v3122
        %v3315 = vpack.c.b16 %v3127, %v3123
        %v3316 = vpack.c.b16 %v3128, %v3124
        %v3317 = vpack.c.b16 %v3129, %v3125
        %v3318 = vpack.c.b16 %v3134, %v3130
        %v3319 = vpack.c.b16 %v3135, %v3131
        %v3320 = vpack.c.b16 %v3136, %v3132
        %v3321 = vpack.c.b16 %v3137, %v3133
        %v3322 = vpack.c.b16 %v3142, %v3138
        %v3323 = vpack.c.b16 %v3143, %v3139
        %v3324 = vpack.c.b16 %v3144, %v3140
        %v3325 = vpack.c.b16 %v3145, %v3141
        %v3326 = vpack.c.b16 %v3150, %v3146
        %v3327 = vpack.c.b16 %v3151, %v3147
        %v3328 = vpack.c.b16 %v3152, %v3148
        %v3329 = vpack.c.b16 %v3153, %v3149
        %v3330 = vpack.c.b16 %v3158, %v3154
        %v3331 = vpack.c.b16 %v3159, %v3155
        %v3332 = vpack.c.b16 %v3160, %v3156
        %v3333 = vpack.c.b16 %v3161, %v3157
        %v3334 = vpack.c.b16 %v3166, %v3162
        %v3335 = vpack.c.b16 %v3167, %v3163
        %v3336 = vpack.c.b16 %v3168, %v3164
        %v3337 = vpack.c.b16 %v3169, %v3165
        %v3338 = vpack.c.b16 %v3174, %v3170
        %v3339 = vpack.c.b16 %v3175, %v3171
        %v3340 = vpack.c.b16 %v3176, %v3172
        %v3341 = vpack.c.b16 %v3177, %v3173
        %v3342 = vpack.c.b16 %v3182, %v3178
        %v3343 = vpack.c.b16 %v3183, %v3179
        %v3344 = vpack.c.b16 %v3184, %v3180
        %v3345 = vpack.c.b16 %v3185, %v3181
        %v3346 = vpack.c.b16 %v3190, %v3186
        %v3347 = vpack.c.b16 %v3191, %v3187
        %v3348 = vpack.c.b16 %v3192, %v3188
        %v3349 = vpack.c.b16 %v3193, %v3189
        %v3350 = vpack.c.b16 %v3198, %v3194
        %v3351 = vpack.c.b16 %v3199, %v3195
        %v3352 = vpack.c.b16 %v3200, %v3196
        %v3353 = vpack.c.b16 %v3201, %v3197
        %v3354 = vpack.c.b16 %v3206, %v3202
        %v3355 = vpack.c.b16 %v3207, %v3203
        %v3356 = vpack.c.b16 %v3208, %v3204
        %v3357 = vpack.c.b16 %v3209, %v3205
        %v3358 = vpack.c.b16 %v3214, %v3210
        %v3359 = vpack.c.b16 %v3215, %v3211
        %v3360 = vpack.c.b16 %v3216, %v3212
        %v3361 = vpack.c.b16 %v3217, %v3213
        %v3362 = vpack.c.b16 %v3222, %v3218
        %v3363 = vpack.c.b16 %v3223, %v3219
        %v3364 = vpack.c.b16 %v3224, %v3220
        %v3365 = vpack.c.b16 %v3225, %v3221
        %v3366 = vpack.c.b16 %v3230, %v3226
        %v3367 = vpack.c.b16 %v3231, %v3227
        %v3368 = vpack.c.b16 %v3232, %v3228
        %v3369 = vpack.c.b16 %v3233, %v3229
        %v3370 = vpack.c.b16 %v3238, %v3234
        %v3371 = vpack.c.b16 %v3239, %v3235
        %v3372 = vpack.c.b16 %v3240, %v3236
        %v3373 = vpack.c.b16 %v3241, %v3237
        %v3374 = vpack.c.b16 %v3246, %v3242
        %v3375 = vpack.c.b16 %v3247, %v3243
        %v3376 = vpack.c.b16 %v3248, %v3244
        %v3377 = vpack.c.b16 %v3249, %v3245
        %3506 = vmatprep.subr.bf16.mxu0 %v3251
        %3507 = vmatpush1.bf16.msra.mxu0 %v3250
        %3508 = vmatprep.subr.bf16.mxu0 %v3255
        %3509 = vmatpush1.bf16.msra.mxu0 %v3254
        %3510 = vmatprep.subr.bf16.mxu0 %v3259
        %3511 = vmatpush1.bf16.msra.mxu0 %v3258
        %3512 = vmatprep.subr.bf16.mxu0 %v3263
        %3513 = vmatpush1.bf16.msra.mxu0 %v3262
        %3514 = vmatprep.subr.bf16.mxu0 %v3267
        %3515 = vmatpush1.bf16.msra.mxu0 %v3266
        %3516 = vmatprep.subr.bf16.mxu0 %v3271
        %3517 = vmatpush1.bf16.msra.mxu0 %v3270
        %3518 = vmatprep.subr.bf16.mxu0 %v3275
        %3519 = vmatpush1.bf16.msra.mxu0 %v3274
        %3520 = vmatprep.subr.bf16.mxu0 %v3279
        %3521 = vmatpush1.bf16.msra.mxu0 %v3278
        %3522 = vmatprep.subr.bf16.mxu0 %v3283
        %3523 = vmatpush1.bf16.msra.mxu0 %v3282
        %3524 = vmatprep.subr.bf16.mxu0 %v3287
        %3525 = vmatpush1.bf16.msra.mxu0 %v3286
        %3526 = vmatprep.subr.bf16.mxu0 %v3291
        %3527 = vmatpush1.bf16.msra.mxu0 %v3290
        %3528 = vmatprep.subr.bf16.mxu0 %v3295
        %3529 = vmatpush1.bf16.msra.mxu0 %v3294
        %3530 = vmatprep.subr.bf16.mxu0 %v3299
        %3531 = vmatpush1.bf16.msra.mxu0 %v3298
        %3532 = vmatprep.subr.bf16.mxu0 %v3303
        %3533 = vmatpush1.bf16.msra.mxu0 %v3302
        %3534 = vmatprep.subr.bf16.mxu0 %v3307
        %3535 = vmatpush1.bf16.msra.mxu0 %v3306
        %3536 = vmatprep.subr.bf16.mxu0 %v3311
        %3537 = vmatpush1.bf16.msra.mxu0 %v3310
        %3538 = vmatprep.mubr.bf16.mxu0 %v2859
        %3539 = vmatmul.mubr.bf16.gmra.mrb[0].mxu0 %v2858
        %v3540 = vpop.f32.mrb[0].mxu0
        %v3541 = vadd.f32 0.0, %v3540
        %v3542 = vpop.f32.mrb[0].mxu0
        %v3543 = vadd.f32 0.0, %v3542
        %v3544 = vpop.f32.mrb[0].mxu0
        %v3545 = vpop.f32.mrb[0].mxu0
        %3546 = vdwg.mxu0
        %3547 = vmatprep.subr.bf16.mxu0 %v3315
        %3548 = vmatpush1.bf16.msra.mxu0 %v3314
        %3549 = vmatprep.subr.bf16.mxu0 %v3319
        %3550 = vmatpush1.bf16.msra.mxu0 %v3318
        %3551 = vmatprep.subr.bf16.mxu0 %v3323
        %3552 = vmatpush1.bf16.msra.mxu0 %v3322
        %3553 = vmatprep.subr.bf16.mxu0 %v3327
        %3554 = vmatpush1.bf16.msra.mxu0 %v3326
        %3555 = vmatprep.subr.bf16.mxu0 %v3331
        %3556 = vmatpush1.bf16.msra.mxu0 %v3330
        %3557 = vmatprep.subr.bf16.mxu0 %v3335
        %3558 = vmatpush1.bf16.msra.mxu0 %v3334
        %3559 = vmatprep.subr.bf16.mxu0 %v3339
        %3560 = vmatpush1.bf16.msra.mxu0 %v3338
        %3561 = vmatprep.subr.bf16.mxu0 %v3343
        %3562 = vmatpush1.bf16.msra.mxu0 %v3342
        %3563 = vmatprep.subr.bf16.mxu0 %v3347
        %3564 = vmatpush1.bf16.msra.mxu0 %v3346
        %3565 = vmatprep.subr.bf16.mxu0 %v3351
        %3566 = vmatpush1.bf16.msra.mxu0 %v3350
        %3567 = vmatprep.subr.bf16.mxu0 %v3355
        %3568 = vmatpush1.bf16.msra.mxu0 %v3354
        %3569 = vmatprep.subr.bf16.mxu0 %v3359
        %3570 = vmatpush1.bf16.msra.mxu0 %v3358
        %3571 = vmatprep.subr.bf16.mxu0 %v3363
        %3572 = vmatpush1.bf16.msra.mxu0 %v3362
        %3573 = vmatprep.subr.bf16.mxu0 %v3367
        %3574 = vmatpush1.bf16.msra.mxu0 %v3366
        %3575 = vmatprep.subr.bf16.mxu0 %v3371
        %3576 = vmatpush1.bf16.msra.mxu0 %v3370
        %3577 = vmatprep.subr.bf16.mxu0 %v3375
        %3578 = vmatpush1.bf16.msra.mxu0 %v3374
        %3579 = vmatprep.mubr.bf16.mxu0 %v2861
        %3580 = vmatmul.mubr.bf16.gmra.mrb[0].mxu0 %v2860
        %v3581 = vpop.f32.mrb[0].mxu0
        %v3582 = vadd.f32 %v3541, %v3581
        %v3583 = vpop.f32.mrb[0].mxu0
        %v3584 = vadd.f32 %v3543, %v3583
        %v3585 = vpop.f32.mrb[0].mxu0
        %v3586 = vpop.f32.mrb[0].mxu0
        %3587 = vdwg.mxu0
        %3588 = vmatprep.subr.bf16.mxu0 %v3253
        %3589 = vmatpush1.bf16.msra.mxu0 %v3252
        %3590 = vmatprep.subr.bf16.mxu0 %v3257
        %3591 = vmatpush1.bf16.msra.mxu0 %v3256
        %3592 = vmatprep.subr.bf16.mxu0 %v3261
        %3593 = vmatpush1.bf16.msra.mxu0 %v3260
        %3594 = vmatprep.subr.bf16.mxu0 %v3265
        %3595 = vmatpush1.bf16.msra.mxu0 %v3264
        %3596 = vmatprep.subr.bf16.mxu0 %v3269
        %3597 = vmatpush1.bf16.msra.mxu0 %v3268
        %3598 = vmatprep.subr.bf16.mxu0 %v3273
        %3599 = vmatpush1.bf16.msra.mxu0 %v3272
        %3600 = vmatprep.subr.bf16.mxu0 %v3277
        %3601 = vmatpush1.bf16.msra.mxu0 %v3276
        %3602 = vmatprep.subr.bf16.mxu0 %v3281
        %3603 = vmatpush1.bf16.msra.mxu0 %v3280
        %3604 = vmatprep.subr.bf16.mxu0 %v3285
        %3605 = vmatpush1.bf16.msra.mxu0 %v3284
        %3606 = vmatprep.subr.bf16.mxu0 %v3289
        %3607 = vmatpush1.bf16.msra.mxu0 %v3288
        %3608 = vmatprep.subr.bf16.mxu0 %v3293
        %3609 = vmatpush1.bf16.msra.mxu0 %v3292
        %3610 = vmatprep.subr.bf16.mxu0 %v3297
        %3611 = vmatpush1.bf16.msra.mxu0 %v3296
        %3612 = vmatprep.subr.bf16.mxu0 %v3301
        %3613 = vmatpush1.bf16.msra.mxu0 %v3300
        %3614 = vmatprep.subr.bf16.mxu0 %v3305
        %3615 = vmatpush1.bf16.msra.mxu0 %v3304
        %3616 = vmatprep.subr.bf16.mxu0 %v3309
        %3617 = vmatpush1.bf16.msra.mxu0 %v3308
        %3618 = vmatprep.subr.bf16.mxu0 %v3313
        %3619 = vmatpush1.bf16.msra.mxu0 %v3312
        %3620 = vmatprep.mubr.bf16.mxu0 %v2859
        %3621 = vmatmul.mubr.bf16.gmra.mrb[0].mxu0 %v2858
        %v3622 = vpop.f32.mrb[0].mxu0
        %v3623 = vadd.f32 0.0, %v3622
        %v3624 = vpop.f32.mrb[0].mxu0
        %v3625 = vadd.f32 0.0, %v3624
        %v3626 = vpop.f32.mrb[0].mxu0
        %v3627 = vpop.f32.mrb[0].mxu0
        %3628 = vdwg.mxu0
        %3629 = vmatprep.subr.bf16.mxu0 %v3317
        %3630 = vmatpush1.bf16.msra.mxu0 %v3316
        %3631 = vmatprep.subr.bf16.mxu0 %v3321
        %3632 = vmatpush1.bf16.msra.mxu0 %v3320
        %3633 = vmatprep.subr.bf16.mxu0 %v3325
        %3634 = vmatpush1.bf16.msra.mxu0 %v3324
        %3635 = vmatprep.subr.bf16.mxu0 %v3329
        %3636 = vmatpush1.bf16.msra.mxu0 %v3328
        %3637 = vmatprep.subr.bf16.mxu0 %v3333
        %3638 = vmatpush1.bf16.msra.mxu0 %v3332
        %3639 = vmatprep.subr.bf16.mxu0 %v3337
        %3640 = vmatpush1.bf16.msra.mxu0 %v3336
        %3641 = vmatprep.subr.bf16.mxu0 %v3341
        %3642 = vmatpush1.bf16.msra.mxu0 %v3340
        %3643 = vmatprep.subr.bf16.mxu0 %v3345
        %3644 = vmatpush1.bf16.msra.mxu0 %v3344
        %3645 = vmatprep.subr.bf16.mxu0 %v3349
        %3646 = vmatpush1.bf16.msra.mxu0 %v3348
        %3647 = vmatprep.subr.bf16.mxu0 %v3353
        %3648 = vmatpush1.bf16.msra.mxu0 %v3352
        %3649 = vmatprep.subr.bf16.mxu0 %v3357
        %3650 = vmatpush1.bf16.msra.mxu0 %v3356
        %3651 = vmatprep.subr.bf16.mxu0 %v3361
        %3652 = vmatpush1.bf16.msra.mxu0 %v3360
        %3653 = vmatprep.subr.bf16.mxu0 %v3365
        %3654 = vmatpush1.bf16.msra.mxu0 %v3364
        %3655 = vmatprep.subr.bf16.mxu0 %v3369
        %3656 = vmatpush1.bf16.msra.mxu0 %v3368
        %3657 = vmatprep.subr.bf16.mxu0 %v3373
        %3658 = vmatpush1.bf16.msra.mxu0 %v3372
        %3659 = vmatprep.subr.bf16.mxu0 %v3377
        %3660 = vmatpush1.bf16.msra.mxu0 %v3376
        %3661 = vmatprep.mubr.bf16.mxu0 %v2861
        %3662 = vmatmul.mubr.bf16.gmra.mrb[0].mxu0 %v2860
        %v3663 = vpop.f32.mrb[0].mxu0
        %v3664 = vadd.f32 %v3623, %v3663
        %v3665 = vpop.f32.mrb[0].mxu0
        %v3666 = vadd.f32 %v3625, %v3665
        %v3667 = vpop.f32.mrb[0].mxu0
        %v3668 = vpop.f32.mrb[0].mxu0
        %3669 = vdwg.mxu0
        %v3674 = vcombine.low %v3582, %v3584
        %v3675 = vcombine.high %v3582, %v3584
        %v3676 = vcombine.low %v3664, %v3666
        %v3677 = vcombine.high %v3664, %v3666
        %v3679 = vunpack.c.l.s4 1966171168
        %v3680 = vunpack.c.0.s8 %v3679
        %v3681 = vlaneseq
        %v3682 = vshrl.u32 %v3681, 7
        %v3683 = vsub.s32 %v3680, %v3682
        %v3684 = vrot.slane %v3674, %v3683
        %v3686 = vunpack.c.l.s4 1966171168
        %v3687 = vunpack.c.0.s8 %v3686
        %v3688 = vlaneseq
        %v3689 = vshrl.u32 %v3688, 7
        %v3690 = vsub.s32 %v3687, %v3689
        %v3691 = vrot.slane %v3675, %v3690
        %v3693 = vunpack.c.l.s4 1966171168
        %v3694 = vunpack.c.0.s8 %v3693
        %v3695 = vlaneseq
        %v3696 = vshrl.u32 %v3695, 7
        %v3697 = vsub.s32 %v3694, %v3696
        %v3698 = vrot.slane %v3676, %v3697
        %v3700 = vunpack.c.l.s4 1966171168
        %v3701 = vunpack.c.0.s8 %v3700
        %v3702 = vlaneseq
        %v3703 = vshrl.u32 %v3702, 7
        %v3704 = vsub.s32 %v3701, %v3703
        %v3705 = vrot.slane %v3677, %v3704
        %v3706 = vcombine.low %v3684, %v3698
        %v3707 = vcombine.high %v3684, %v3698
        %v3708 = vcombine.low %v3691, %v3705
        %v3709 = vcombine.high %v3691, %v3705
        %v3711 = vunpack.c.l.s4 1966171168
        %v3712 = vunpack.c.0.s8 %v3711
        %v3713 = vlaneseq
        %v3714 = vshrl.u32 %v3713, 7
        %v3715 = vsub.s32 %v3712, %v3714
        %v3716 = vrot.slane %v3706, %v3715
        %v3718 = vunpack.c.l.s4 1966171168
        %v3719 = vunpack.c.0.s8 %v3718
        %v3720 = vlaneseq
        %v3721 = vshrl.u32 %v3720, 7
        %v3722 = vsub.s32 %v3719, %v3721
        %v3723 = vrot.slane %v3708, %v3722
        %v3725 = vunpack.c.l.s4 1966171168
        %v3726 = vunpack.c.0.s8 %v3725
        %v3727 = vlaneseq
        %v3728 = vshrl.u32 %v3727, 7
        %v3729 = vsub.s32 %v3726, %v3728
        %v3730 = vrot.slane %v3707, %v3729
        %v3732 = vunpack.c.l.s4 1966171168
        %v3733 = vunpack.c.0.s8 %v3732
        %v3734 = vlaneseq
        %v3735 = vshrl.u32 %v3734, 7
        %v3736 = vsub.s32 %v3733, %v3735
        %v3737 = vrot.slane %v3709, %v3736
        %v3738 = vcombine.high %v3716, %v3716
        %v3739 = vcombine.high %v3723, %v3723
        %v3740 = vcombine.high %v3730, %v3730
        %v3741 = vcombine.high %v3737, %v3737
        %v3742 = vlaneseq
        %v3743 = vshrl.u32 %v3742, 7
        %v3744 = vsub.s32 0, %v3743
        %v3745 = vrot.slane %v3716, %v3744
        %v3746 = vlaneseq
        %v3747 = vshrl.u32 %v3746, 7
        %v3748 = vsub.s32 1, %v3747
        %v3749 = vrot.slane %v3716, %v3748
        %v3750 = vlaneseq
        %v3751 = vshrl.u32 %v3750, 7
        %v3752 = vsub.s32 2, %v3751
        %v3753 = vrot.slane %v3716, %v3752
        %v3754 = vlaneseq
        %v3755 = vshrl.u32 %v3754, 7
        %v3756 = vsub.s32 3, %v3755
        %v3757 = vrot.slane %v3716, %v3756
        %v3758 = vlaneseq
        %v3759 = vshrl.u32 %v3758, 7
        %v3760 = vsub.s32 0, %v3759
        %v3761 = vrot.slane %v3730, %v3760
        %v3762 = vlaneseq
        %v3763 = vshrl.u32 %v3762, 7
        %v3764 = vsub.s32 1, %v3763
        %v3765 = vrot.slane %v3730, %v3764
        %v3766 = vlaneseq
        %v3767 = vshrl.u32 %v3766, 7
        %v3768 = vsub.s32 2, %v3767
        %v3769 = vrot.slane %v3730, %v3768
        %v3770 = vlaneseq
        %v3771 = vshrl.u32 %v3770, 7
        %v3772 = vsub.s32 3, %v3771
        %v3773 = vrot.slane %v3730, %v3772
        %v3774 = vlaneseq
        %v3775 = vshrl.u32 %v3774, 7
        %v3776 = vsub.s32 0, %v3775
        %v3777 = vrot.slane %v3738, %v3776
        %v3778 = vlaneseq
        %v3779 = vshrl.u32 %v3778, 7
        %v3780 = vsub.s32 1, %v3779
        %v3781 = vrot.slane %v3738, %v3780
        %v3782 = vlaneseq
        %v3783 = vshrl.u32 %v3782, 7
        %v3784 = vsub.s32 2, %v3783
        %v3785 = vrot.slane %v3738, %v3784
        %v3786 = vlaneseq
        %v3787 = vshrl.u32 %v3786, 7
        %v3788 = vsub.s32 3, %v3787
        %v3789 = vrot.slane %v3738, %v3788
        %v3790 = vlaneseq
        %v3791 = vshrl.u32 %v3790, 7
        %v3792 = vsub.s32 0, %v3791
        %v3793 = vrot.slane %v3740, %v3792
        %v3794 = vlaneseq
        %v3795 = vshrl.u32 %v3794, 7
        %v3796 = vsub.s32 1, %v3795
        %v3797 = vrot.slane %v3740, %v3796
        %v3798 = vlaneseq
        %v3799 = vshrl.u32 %v3798, 7
        %v3800 = vsub.s32 2, %v3799
        %v3801 = vrot.slane %v3740, %v3800
        %v3802 = vlaneseq
        %v3803 = vshrl.u32 %v3802, 7
        %v3804 = vsub.s32 3, %v3803
        %v3805 = vrot.slane %v3740, %v3804
        %v3806 = vlaneseq
        %v3807 = vshrl.u32 %v3806, 7
        %v3808 = vsub.s32 0, %v3807
        %v3809 = vrot.slane %v3723, %v3808
        %v3810 = vlaneseq
        %v3811 = vshrl.u32 %v3810, 7
        %v3812 = vsub.s32 1, %v3811
        %v3813 = vrot.slane %v3723, %v3812
        %v3814 = vlaneseq
        %v3815 = vshrl.u32 %v3814, 7
        %v3816 = vsub.s32 2, %v3815
        %v3817 = vrot.slane %v3723, %v3816
        %v3818 = vlaneseq
        %v3819 = vshrl.u32 %v3818, 7
        %v3820 = vsub.s32 3, %v3819
        %v3821 = vrot.slane %v3723, %v3820
        %v3822 = vlaneseq
        %v3823 = vshrl.u32 %v3822, 7
        %v3824 = vsub.s32 0, %v3823
        %v3825 = vrot.slane %v3737, %v3824
        %v3826 = vlaneseq
        %v3827 = vshrl.u32 %v3826, 7
        %v3828 = vsub.s32 1, %v3827
        %v3829 = vrot.slane %v3737, %v3828
        %v3830 = vlaneseq
        %v3831 = vshrl.u32 %v3830, 7
        %v3832 = vsub.s32 2, %v3831
        %v3833 = vrot.slane %v3737, %v3832
        %v3834 = vlaneseq
        %v3835 = vshrl.u32 %v3834, 7
        %v3836 = vsub.s32 3, %v3835
        %v3837 = vrot.slane %v3737, %v3836
        %v3838 = vlaneseq
        %v3839 = vshrl.u32 %v3838, 7
        %v3840 = vsub.s32 0, %v3839
        %v3841 = vrot.slane %v3739, %v3840
        %v3842 = vlaneseq
        %v3843 = vshrl.u32 %v3842, 7
        %v3844 = vsub.s32 1, %v3843
        %v3845 = vrot.slane %v3739, %v3844
        %v3846 = vlaneseq
        %v3847 = vshrl.u32 %v3846, 7
        %v3848 = vsub.s32 2, %v3847
        %v3849 = vrot.slane %v3739, %v3848
        %v3850 = vlaneseq
        %v3851 = vshrl.u32 %v3850, 7
        %v3852 = vsub.s32 3, %v3851
        %v3853 = vrot.slane %v3739, %v3852
        %v3854 = vlaneseq
        %v3855 = vshrl.u32 %v3854, 7
        %v3856 = vsub.s32 0, %v3855
        %v3857 = vrot.slane %v3741, %v3856
        %v3858 = vlaneseq
        %v3859 = vshrl.u32 %v3858, 7
        %v3860 = vsub.s32 1, %v3859
        %v3861 = vrot.slane %v3741, %v3860
        %v3862 = vlaneseq
        %v3863 = vshrl.u32 %v3862, 7
        %v3864 = vsub.s32 2, %v3863
        %v3865 = vrot.slane %v3741, %v3864
        %v3866 = vlaneseq
        %v3867 = vshrl.u32 %v3866, 7
        %v3868 = vsub.s32 3, %v3867
        %v3869 = vrot.slane %v3741, %v3868
        %v3902 = vadd.f32 %v2295, %v3745
        %v3903 = vadd.f32 %v2297, %v3749
        %v3904 = vadd.f32 %v2521, %v3753
        %v3905 = vadd.f32 %v2523, %v3757
        %v3906 = vadd.f32 %v2299, %v3745
        %v3907 = vadd.f32 %v2301, %v3749
        %v3908 = vadd.f32 %v2525, %v3753
        %v3909 = vadd.f32 %v2527, %v3757
        %v3910 = vadd.f32 %v2305, %v3761
        %v3911 = vadd.f32 %v2307, %v3765
        %v3912 = vadd.f32 %v2531, %v3769
        %v3913 = vadd.f32 %v2533, %v3773
        %v3914 = vadd.f32 %v2309, %v3761
        %v3915 = vadd.f32 %v2311, %v3765
        %v3916 = vadd.f32 %v2535, %v3769
        %v3917 = vadd.f32 %v2537, %v3773
        %v3918 = vadd.f32 %v2315, %v3777
        %v3919 = vadd.f32 %v2317, %v3781
        %v3920 = vadd.f32 %v2541, %v3785
        %v3921 = vadd.f32 %v2543, %v3789
        %v3922 = vadd.f32 %v2319, %v3777
        %v3923 = vadd.f32 %v2321, %v3781
        %v3924 = vadd.f32 %v2545, %v3785
        %v3925 = vadd.f32 %v2547, %v3789
        %v3926 = vadd.f32 %v2325, %v3793
        %v3927 = vadd.f32 %v2327, %v3797
        %v3928 = vadd.f32 %v2551, %v3801
        %v3929 = vadd.f32 %v2553, %v3805
        %v3930 = vadd.f32 %v2329, %v3793
        %v3931 = vadd.f32 %v2331, %v3797
        %v3932 = vadd.f32 %v2555, %v3801
        %v3933 = vadd.f32 %v2557, %v3805
        %v3934 = vadd.f32 %v2335, %v3809
        %v3935 = vadd.f32 %v2337, %v3813
        %v3936 = vadd.f32 %v2561, %v3817
        %v3937 = vadd.f32 %v2563, %v3821
        %v3938 = vadd.f32 %v2339, %v3809
        %v3939 = vadd.f32 %v2341, %v3813
        %v3940 = vadd.f32 %v2565, %v3817
        %v3941 = vadd.f32 %v2567, %v3821
        %v3942 = vadd.f32 %v2345, %v3825
        %v3943 = vadd.f32 %v2347, %v3829
        %v3944 = vadd.f32 %v2571, %v3833
        %v3945 = vadd.f32 %v2573, %v3837
        %v3946 = vadd.f32 %v2349, %v3825
        %v3947 = vadd.f32 %v2351, %v3829
        %v3948 = vadd.f32 %v2575, %v3833
        %v3949 = vadd.f32 %v2577, %v3837
        %v3950 = vadd.f32 %v2355, %v3841
        %v3951 = vadd.f32 %v2357, %v3845
        %v3952 = vadd.f32 %v2581, %v3849
        %v3953 = vadd.f32 %v2583, %v3853
        %v3954 = vadd.f32 %v2359, %v3841
        %v3955 = vadd.f32 %v2361, %v3845
        %v3956 = vadd.f32 %v2585, %v3849
        %v3957 = vadd.f32 %v2587, %v3853
        %v3958 = vadd.f32 %v2365, %v3857
        %v3959 = vadd.f32 %v2367, %v3861
        %v3960 = vadd.f32 %v2591, %v3865
        %v3961 = vadd.f32 %v2593, %v3869
        %v3962 = vadd.f32 %v2369, %v3857
        %v3963 = vadd.f32 %v2371, %v3861
        %v3964 = vadd.f32 %v2595, %v3865
        %v3965 = vadd.f32 %v2597, %v3869
        %v3966 = vld [vmem:[#allocation14] sm:$0xf]
        %v3968 = vlaneseq
        %v3969 = vshrl.u32 %v3968, 7
        %v3970 = vsub.s32 0, %v3969
        %v3971 = vrot.slane %v3966, %v3970
        %v3972 = vlaneseq
        %v3973 = vshrl.u32 %v3972, 7
        %v3974 = vsub.s32 1, %v3973
        %v3975 = vrot.slane %v3966, %v3974
        %v3976 = vlaneseq
        %v3977 = vshrl.u32 %v3976, 7
        %v3978 = vsub.s32 2, %v3977
        %v3979 = vrot.slane %v3966, %v3978
        %v3980 = vlaneseq
        %v3981 = vshrl.u32 %v3980, 7
        %v3982 = vsub.s32 3, %v3981
        %v3983 = vrot.slane %v3966, %v3982
        %v3988 = vadd.f32 %v3902, %v3971
        %v3989 = vadd.f32 %v3903, %v3975
        %v3990 = vadd.f32 %v3904, %v3979
        %v3991 = vadd.f32 %v3905, %v3983
        %v3992 = vadd.f32 %v3906, %v3971
        %v3993 = vadd.f32 %v3907, %v3975
        %v3994 = vadd.f32 %v3908, %v3979
        %v3995 = vadd.f32 %v3909, %v3983
        %v3996 = vadd.f32 %v3910, %v3971
        %v3997 = vadd.f32 %v3911, %v3975
        %v3998 = vadd.f32 %v3912, %v3979
        %v3999 = vadd.f32 %v3913, %v3983
        %v4000 = vadd.f32 %v3914, %v3971
        %v4001 = vadd.f32 %v3915, %v3975
        %v4002 = vadd.f32 %v3916, %v3979
        %v4003 = vadd.f32 %v3917, %v3983
        %v4004 = vadd.f32 %v3918, %v3971
        %v4005 = vadd.f32 %v3919, %v3975
        %v4006 = vadd.f32 %v3920, %v3979
        %v4007 = vadd.f32 %v3921, %v3983
        %v4008 = vadd.f32 %v3922, %v3971
        %v4009 = vadd.f32 %v3923, %v3975
        %v4010 = vadd.f32 %v3924, %v3979
        %v4011 = vadd.f32 %v3925, %v3983
        %v4012 = vadd.f32 %v3926, %v3971
        %v4013 = vadd.f32 %v3927, %v3975
        %v4014 = vadd.f32 %v3928, %v3979
        %v4015 = vadd.f32 %v3929, %v3983
        %v4016 = vadd.f32 %v3930, %v3971
        %v4017 = vadd.f32 %v3931, %v3975
        %v4018 = vadd.f32 %v3932, %v3979
        %v4019 = vadd.f32 %v3933, %v3983
        %v4020 = vadd.f32 %v3934, %v3971
        %v4021 = vadd.f32 %v3935, %v3975
        %v4022 = vadd.f32 %v3936, %v3979
        %v4023 = vadd.f32 %v3937, %v3983
        %v4024 = vadd.f32 %v3938, %v3971
        %v4025 = vadd.f32 %v3939, %v3975
        %v4026 = vadd.f32 %v3940, %v3979
        %v4027 = vadd.f32 %v3941, %v3983
        %v4028 = vadd.f32 %v3942, %v3971
        %v4029 = vadd.f32 %v3943, %v3975
        %v4030 = vadd.f32 %v3944, %v3979
        %v4031 = vadd.f32 %v3945, %v3983
        %v4032 = vadd.f32 %v3946, %v3971
        %v4033 = vadd.f32 %v3947, %v3975
        %v4034 = vadd.f32 %v3948, %v3979
        %v4035 = vadd.f32 %v3949, %v3983
        %v4036 = vadd.f32 %v3950, %v3971
        %v4037 = vadd.f32 %v3951, %v3975
        %v4038 = vadd.f32 %v3952, %v3979
        %v4039 = vadd.f32 %v3953, %v3983
        %v4040 = vadd.f32 %v3954, %v3971
        %v4041 = vadd.f32 %v3955, %v3975
        %v4042 = vadd.f32 %v3956, %v3979
        %v4043 = vadd.f32 %v3957, %v3983
        %v4044 = vadd.f32 %v3958, %v3971
        %v4045 = vadd.f32 %v3959, %v3975
        %v4046 = vadd.f32 %v3960, %v3979
        %v4047 = vadd.f32 %v3961, %v3983
        %v4048 = vadd.f32 %v3962, %v3971
        %v4049 = vadd.f32 %v3963, %v3975
        %v4050 = vadd.f32 %v3964, %v3979
        %v4051 = vadd.f32 %v3965, %v3983
        %v4052 = vmax.f32 %v3988, 0.0
        %v4053 = vmax.f32 %v3989, 0.0
        %v4054 = vmax.f32 %v3990, 0.0
        %v4055 = vmax.f32 %v3991, 0.0
        %v4056 = vmax.f32 %v3992, 0.0
        %v4057 = vmax.f32 %v3993, 0.0
        %v4058 = vmax.f32 %v3994, 0.0
        %v4059 = vmax.f32 %v3995, 0.0
        %v4060 = vmax.f32 %v3996, 0.0
        %v4061 = vmax.f32 %v3997, 0.0
        %v4062 = vmax.f32 %v3998, 0.0
        %v4063 = vmax.f32 %v3999, 0.0
        %v4064 = vmax.f32 %v4000, 0.0
        %v4065 = vmax.f32 %v4001, 0.0
        %v4066 = vmax.f32 %v4002, 0.0
        %v4067 = vmax.f32 %v4003, 0.0
        %v4068 = vmax.f32 %v4004, 0.0
        %v4069 = vmax.f32 %v4005, 0.0
        %v4070 = vmax.f32 %v4006, 0.0
        %v4071 = vmax.f32 %v4007, 0.0
        %v4072 = vmax.f32 %v4008, 0.0
        %v4073 = vmax.f32 %v4009, 0.0
        %v4074 = vmax.f32 %v4010, 0.0
        %v4075 = vmax.f32 %v4011, 0.0
        %v4076 = vmax.f32 %v4012, 0.0
        %v4077 = vmax.f32 %v4013, 0.0
        %v4078 = vmax.f32 %v4014, 0.0
        %v4079 = vmax.f32 %v4015, 0.0
        %v4080 = vmax.f32 %v4016, 0.0
        %v4081 = vmax.f32 %v4017, 0.0
        %v4082 = vmax.f32 %v4018, 0.0
        %v4083 = vmax.f32 %v4019, 0.0
        %v4084 = vmax.f32 %v4020, 0.0
        %v4085 = vmax.f32 %v4021, 0.0
        %v4086 = vmax.f32 %v4022, 0.0
        %v4087 = vmax.f32 %v4023, 0.0
        %v4088 = vmax.f32 %v4024, 0.0
        %v4089 = vmax.f32 %v4025, 0.0
        %v4090 = vmax.f32 %v4026, 0.0
        %v4091 = vmax.f32 %v4027, 0.0
        %v4092 = vmax.f32 %v4028, 0.0
        %v4093 = vmax.f32 %v4029, 0.0
        %v4094 = vmax.f32 %v4030, 0.0
        %v4095 = vmax.f32 %v4031, 0.0
        %v4096 = vmax.f32 %v4032, 0.0
        %v4097 = vmax.f32 %v4033, 0.0
        %v4098 = vmax.f32 %v4034, 0.0
        %v4099 = vmax.f32 %v4035, 0.0
        %v4100 = vmax.f32 %v4036, 0.0
        %v4101 = vmax.f32 %v4037, 0.0
        %v4102 = vmax.f32 %v4038, 0.0
        %v4103 = vmax.f32 %v4039, 0.0
        %v4104 = vmax.f32 %v4040, 0.0
        %v4105 = vmax.f32 %v4041, 0.0
        %v4106 = vmax.f32 %v4042, 0.0
        %v4107 = vmax.f32 %v4043, 0.0
        %v4108 = vmax.f32 %v4044, 0.0
        %v4109 = vmax.f32 %v4045, 0.0
        %v4110 = vmax.f32 %v4046, 0.0
        %v4111 = vmax.f32 %v4047, 0.0
        %v4112 = vmax.f32 %v4048, 0.0
        %v4113 = vmax.f32 %v4049, 0.0
        %v4114 = vmax.f32 %v4050, 0.0
        %v4115 = vmax.f32 %v4051, 0.0
        %v4116 = vpack.c.bf16 %v4056, %v4052
        %v4117 = vpack.c.bf16 %v4057, %v4053
        %v4118 = vpack.c.bf16 %v4058, %v4054
        %v4119 = vpack.c.bf16 %v4059, %v4055
        %v4120 = vpack.c.bf16 %v4064, %v4060
        %v4121 = vpack.c.bf16 %v4065, %v4061
        %v4122 = vpack.c.bf16 %v4066, %v4062
        %v4123 = vpack.c.bf16 %v4067, %v4063
        %v4124 = vpack.c.bf16 %v4072, %v4068
        %v4125 = vpack.c.bf16 %v4073, %v4069
        %v4126 = vpack.c.bf16 %v4074, %v4070
        %v4127 = vpack.c.bf16 %v4075, %v4071
        %v4128 = vpack.c.bf16 %v4080, %v4076
        %v4129 = vpack.c.bf16 %v4081, %v4077
        %v4130 = vpack.c.bf16 %v4082, %v4078
        %v4131 = vpack.c.bf16 %v4083, %v4079
        %v4132 = vpack.c.bf16 %v4088, %v4084
        %v4133 = vpack.c.bf16 %v4089, %v4085
        %v4134 = vpack.c.bf16 %v4090, %v4086
        %v4135 = vpack.c.bf16 %v4091, %v4087
        %v4136 = vpack.c.bf16 %v4096, %v4092
        %v4137 = vpack.c.bf16 %v4097, %v4093
        %v4138 = vpack.c.bf16 %v4098, %v4094
        %v4139 = vpack.c.bf16 %v4099, %v4095
        %v4140 = vpack.c.bf16 %v4104, %v4100
        %v4141 = vpack.c.bf16 %v4105, %v4101
        %v4142 = vpack.c.bf16 %v4106, %v4102
        %v4143 = vpack.c.bf16 %v4107, %v4103
        %v4144 = vpack.c.bf16 %v4112, %v4108
        %v4145 = vpack.c.bf16 %v4113, %v4109
        %v4146 = vpack.c.bf16 %v4114, %v4110
        %v4147 = vpack.c.bf16 %v4115, %v4111
        %v4148 = vld [vmem:[#allocation16] sm:$0xf]
        %v4149 = vld [vmem:[#allocation16 + $0x4] sm:$0xf]
        %v4150 = vld [vmem:[#allocation16 + $0x8] sm:$0xf]
        %v4151 = vld [vmem:[#allocation16 + $0xc] sm:$0xf]
        %v4152 = vld [vmem:[#allocation16 + $0x10] sm:$0xf]
        %v4153 = vld [vmem:[#allocation16 + $0x14] sm:$0xf]
        %v4154 = vld [vmem:[#allocation16 + $0x18] sm:$0xf]
        %v4155 = vld [vmem:[#allocation16 + $0x1c] sm:$0xf]
        %v4156 = vld [vmem:[#allocation16 + $0x20] sm:$0xf]
        %v4157 = vld [vmem:[#allocation16 + $0x24] sm:$0xf]
        %v4158 = vld [vmem:[#allocation16 + $0x28] sm:$0xf]
        %v4159 = vld [vmem:[#allocation16 + $0x2c] sm:$0xf]
        %v4160 = vld [vmem:[#allocation16 + $0x30] sm:$0xf]
        %v4161 = vld [vmem:[#allocation16 + $0x34] sm:$0xf]
        %v4162 = vld [vmem:[#allocation16 + $0x38] sm:$0xf]
        %v4163 = vld [vmem:[#allocation16 + $0x3c] sm:$0xf]
        %v4164 = vld [vmem:[#allocation16 + $0x40] sm:$0xf]
        %v4165 = vld [vmem:[#allocation16 + $0x44] sm:$0xf]
        %v4166 = vld [vmem:[#allocation16 + $0x48] sm:$0xf]
        %v4167 = vld [vmem:[#allocation16 + $0x4c] sm:$0xf]
        %v4168 = vld [vmem:[#allocation16 + $0x50] sm:$0xf]
        %v4169 = vld [vmem:[#allocation16 + $0x54] sm:$0xf]
        %v4170 = vld [vmem:[#allocation16 + $0x58] sm:$0xf]
        %v4171 = vld [vmem:[#allocation16 + $0x5c] sm:$0xf]
        %v4172 = vld [vmem:[#allocation16 + $0x60] sm:$0xf]
        %v4173 = vld [vmem:[#allocation16 + $0x64] sm:$0xf]
        %v4174 = vld [vmem:[#allocation16 + $0x68] sm:$0xf]
        %v4175 = vld [vmem:[#allocation16 + $0x6c] sm:$0xf]
        %v4176 = vld [vmem:[#allocation16 + $0x70] sm:$0xf]
        %v4177 = vld [vmem:[#allocation16 + $0x74] sm:$0xf]
        %v4178 = vld [vmem:[#allocation16 + $0x78] sm:$0xf]
        %v4179 = vld [vmem:[#allocation16 + $0x7c] sm:$0xf]
        %v4180 = vld [vmem:[#allocation16 + $0x80] sm:$0xf]
        %v4181 = vld [vmem:[#allocation16 + $0x84] sm:$0xf]
        %v4182 = vld [vmem:[#allocation16 + $0x88] sm:$0xf]
        %v4183 = vld [vmem:[#allocation16 + $0x8c] sm:$0xf]
        %v4184 = vld [vmem:[#allocation16 + $0x90] sm:$0xf]
        %v4185 = vld [vmem:[#allocation16 + $0x94] sm:$0xf]
        %v4186 = vld [vmem:[#allocation16 + $0x98] sm:$0xf]
        %v4187 = vld [vmem:[#allocation16 + $0x9c] sm:$0xf]
        %v4188 = vld [vmem:[#allocation16 + $0xa0] sm:$0xf]
        %v4189 = vld [vmem:[#allocation16 + $0xa4] sm:$0xf]
        %v4190 = vld [vmem:[#allocation16 + $0xa8] sm:$0xf]
        %v4191 = vld [vmem:[#allocation16 + $0xac] sm:$0xf]
        %v4192 = vld [vmem:[#allocation16 + $0xb0] sm:$0xf]
        %v4193 = vld [vmem:[#allocation16 + $0xb4] sm:$0xf]
        %v4194 = vld [vmem:[#allocation16 + $0xb8] sm:$0xf]
        %v4195 = vld [vmem:[#allocation16 + $0xbc] sm:$0xf]
        %v4196 = vld [vmem:[#allocation16 + $0xc0] sm:$0xf]
        %v4197 = vld [vmem:[#allocation16 + $0xc4] sm:$0xf]
        %v4198 = vld [vmem:[#allocation16 + $0xc8] sm:$0xf]
        %v4199 = vld [vmem:[#allocation16 + $0xcc] sm:$0xf]
        %v4200 = vld [vmem:[#allocation16 + $0xd0] sm:$0xf]
        %v4201 = vld [vmem:[#allocation16 + $0xd4] sm:$0xf]
        %v4202 = vld [vmem:[#allocation16 + $0xd8] sm:$0xf]
        %v4203 = vld [vmem:[#allocation16 + $0xdc] sm:$0xf]
        %v4204 = vld [vmem:[#allocation16 + $0xe0] sm:$0xf]
        %v4205 = vld [vmem:[#allocation16 + $0xe4] sm:$0xf]
        %v4206 = vld [vmem:[#allocation16 + $0xe8] sm:$0xf]
        %v4207 = vld [vmem:[#allocation16 + $0xec] sm:$0xf]
        %v4208 = vld [vmem:[#allocation16 + $0xf0] sm:$0xf]
        %v4209 = vld [vmem:[#allocation16 + $0xf4] sm:$0xf]
        %v4210 = vld [vmem:[#allocation16 + $0xf8] sm:$0xf]
        %v4211 = vld [vmem:[#allocation16 + $0xfc] sm:$0xf]
        %v4212 = vld [vmem:[#allocation17] sm:$0x1]
        %v4214 = vlaneseq
        %v4215 = vshrl.u32 %v4214, 7
        %v4216 = vsub.s32 0, %v4215
        %v4217 = vrot.slane %v4212, %v4216
        %v4283 = vunpack.c.l.b16 %v4148
        %v4284 = vunpack.c.l.b16 %v4149
        %v4285 = vunpack.c.l.b16 %v4150
        %v4286 = vunpack.c.l.b16 %v4151
        %v4287 = vunpack.c.l.b16 %v4152
        %v4288 = vunpack.c.l.b16 %v4153
        %v4289 = vunpack.c.l.b16 %v4154
        %v4290 = vunpack.c.l.b16 %v4155
        %v4291 = vunpack.c.l.b16 %v4156
        %v4292 = vunpack.c.l.b16 %v4157
        %v4293 = vunpack.c.l.b16 %v4158
        %v4294 = vunpack.c.l.b16 %v4159
        %v4295 = vunpack.c.l.b16 %v4160
        %v4296 = vunpack.c.l.b16 %v4161
        %v4297 = vunpack.c.l.b16 %v4162
        %v4298 = vunpack.c.l.b16 %v4163
        %v4299 = vunpack.c.l.b16 %v4164
        %v4300 = vunpack.c.l.b16 %v4165
        %v4301 = vunpack.c.l.b16 %v4166
        %v4302 = vunpack.c.l.b16 %v4167
        %v4303 = vunpack.c.l.b16 %v4168
        %v4304 = vunpack.c.l.b16 %v4169
        %v4305 = vunpack.c.l.b16 %v4170
        %v4306 = vunpack.c.l.b16 %v4171
        %v4307 = vunpack.c.l.b16 %v4172
        %v4308 = vunpack.c.l.b16 %v4173
        %v4309 = vunpack.c.l.b16 %v4174
        %v4310 = vunpack.c.l.b16 %v4175
        %v4311 = vunpack.c.l.b16 %v4176
        %v4312 = vunpack.c.l.b16 %v4177
        %v4313 = vunpack.c.l.b16 %v4178
        %v4314 = vunpack.c.l.b16 %v4179
        %v4315 = vunpack.c.l.b16 %v4180
        %v4316 = vunpack.c.l.b16 %v4181
        %v4317 = vunpack.c.l.b16 %v4182
        %v4318 = vunpack.c.l.b16 %v4183
        %v4319 = vunpack.c.l.b16 %v4184
        %v4320 = vunpack.c.l.b16 %v4185
        %v4321 = vunpack.c.l.b16 %v4186
        %v4322 = vunpack.c.l.b16 %v4187
        %v4323 = vunpack.c.l.b16 %v4188
        %v4324 = vunpack.c.l.b16 %v4189
        %v4325 = vunpack.c.l.b16 %v4190
        %v4326 = vunpack.c.l.b16 %v4191
        %v4327 = vunpack.c.l.b16 %v4192
        %v4328 = vunpack.c.l.b16 %v4193
        %v4329 = vunpack.c.l.b16 %v4194
        %v4330 = vunpack.c.l.b16 %v4195
        %v4331 = vunpack.c.l.b16 %v4196
        %v4332 = vunpack.c.l.b16 %v4197
        %v4333 = vunpack.c.l.b16 %v4198
        %v4334 = vunpack.c.l.b16 %v4199
        %v4335 = vunpack.c.l.b16 %v4200
        %v4336 = vunpack.c.l.b16 %v4201
        %v4337 = vunpack.c.l.b16 %v4202
        %v4338 = vunpack.c.l.b16 %v4203
        %v4339 = vunpack.c.l.b16 %v4204
        %v4340 = vunpack.c.l.b16 %v4205
        %v4341 = vunpack.c.l.b16 %v4206
        %v4342 = vunpack.c.l.b16 %v4207
        %v4343 = vunpack.c.l.b16 %v4208
        %v4344 = vunpack.c.l.b16 %v4209
        %v4345 = vunpack.c.l.b16 %v4210
        %v4346 = vunpack.c.l.b16 %v4211
        %v4347 = vpack.c.b16 %v4284, %v4283
        %v4348 = vpack.c.b16 %v4286, %v4285
        %v4349 = vpack.c.b16 %v4288, %v4287
        %v4350 = vpack.c.b16 %v4290, %v4289
        %v4351 = vpack.c.b16 %v4292, %v4291
        %v4352 = vpack.c.b16 %v4294, %v4293
        %v4353 = vpack.c.b16 %v4296, %v4295
        %v4354 = vpack.c.b16 %v4298, %v4297
        %v4355 = vpack.c.b16 %v4300, %v4299
        %v4356 = vpack.c.b16 %v4302, %v4301
        %v4357 = vpack.c.b16 %v4304, %v4303
        %v4358 = vpack.c.b16 %v4306, %v4305
        %v4359 = vpack.c.b16 %v4308, %v4307
        %v4360 = vpack.c.b16 %v4310, %v4309
        %v4361 = vpack.c.b16 %v4312, %v4311
        %v4362 = vpack.c.b16 %v4314, %v4313
        %v4363 = vpack.c.b16 %v4316, %v4315
        %v4364 = vpack.c.b16 %v4318, %v4317
        %v4365 = vpack.c.b16 %v4320, %v4319
        %v4366 = vpack.c.b16 %v4322, %v4321
        %v4367 = vpack.c.b16 %v4324, %v4323
        %v4368 = vpack.c.b16 %v4326, %v4325
        %v4369 = vpack.c.b16 %v4328, %v4327
        %v4370 = vpack.c.b16 %v4330, %v4329
        %v4371 = vpack.c.b16 %v4332, %v4331
        %v4372 = vpack.c.b16 %v4334, %v4333
        %v4373 = vpack.c.b16 %v4336, %v4335
        %v4374 = vpack.c.b16 %v4338, %v4337
        %v4375 = vpack.c.b16 %v4340, %v4339
        %v4376 = vpack.c.b16 %v4342, %v4341
        %v4377 = vpack.c.b16 %v4344, %v4343
        %v4378 = vpack.c.b16 %v4346, %v4345
        %4411 = vmatprep.subr.bf16.mxu0 0
        %4412 = vmatpush1.bf16.msra.mxu0 %v4347
        %4413 = vmatprep.subr.bf16.mxu0 0
        %4414 = vmatpush1.bf16.msra.mxu0 %v4348
        %4415 = vmatprep.subr.bf16.mxu0 0
        %4416 = vmatpush1.bf16.msra.mxu0 %v4349
        %4417 = vmatprep.subr.bf16.mxu0 0
        %4418 = vmatpush1.bf16.msra.mxu0 %v4350
        %4419 = vmatprep.subr.bf16.mxu0 0
        %4420 = vmatpush1.bf16.msra.mxu0 %v4351
        %4421 = vmatprep.subr.bf16.mxu0 0
        %4422 = vmatpush1.bf16.msra.mxu0 %v4352
        %4423 = vmatprep.subr.bf16.mxu0 0
        %4424 = vmatpush1.bf16.msra.mxu0 %v4353
        %4425 = vmatprep.subr.bf16.mxu0 0
        %4426 = vmatpush1.bf16.msra.mxu0 %v4354
        %4427 = vmatprep.subr.bf16.mxu0 0
        %4428 = vmatpush1.bf16.msra.mxu0 %v4355
        %4429 = vmatprep.subr.bf16.mxu0 0
        %4430 = vmatpush1.bf16.msra.mxu0 %v4356
        %4431 = vmatprep.subr.bf16.mxu0 0
        %4432 = vmatpush1.bf16.msra.mxu0 %v4357
        %4433 = vmatprep.subr.bf16.mxu0 0
        %4434 = vmatpush1.bf16.msra.mxu0 %v4358
        %4435 = vmatprep.subr.bf16.mxu0 0
        %4436 = vmatpush1.bf16.msra.mxu0 %v4359
        %4437 = vmatprep.subr.bf16.mxu0 0
        %4438 = vmatpush1.bf16.msra.mxu0 %v4360
        %4439 = vmatprep.subr.bf16.mxu0 0
        %4440 = vmatpush1.bf16.msra.mxu0 %v4361
        %4441 = vmatprep.subr.bf16.mxu0 0
        %4442 = vmatpush1.bf16.msra.mxu0 %v4362
        %4443 = vmatprep.mubr.bf16.mxu0 %v4117
        %4444 = vmatmul.mubr.bf16.gmra.mrb[0].mxu0 %v4116
        %v4445 = vpop.f32.mrb[0].mxu0
        %v4446 = vadd.f32 %v4217, %v4445
        %v4447 = vpop.f32.mrb[0].mxu0
        %v4448 = vpop.f32.mrb[0].mxu0
        %v4449 = vadd.f32 %v4217, %v4448
        %v4450 = vpop.f32.mrb[0].mxu0
        %4451 = vmatprep.mubr.bf16.mxu0 %v4121
        %4452 = vmatmul.mubr.bf16.gmra.mrb[0].mxu0 %v4120
        %v4453 = vpop.f32.mrb[0].mxu0
        %v4454 = vadd.f32 %v4217, %v4453
        %v4455 = vpop.f32.mrb[0].mxu0
        %v4456 = vpop.f32.mrb[0].mxu0
        %v4457 = vadd.f32 %v4217, %v4456
        %v4458 = vpop.f32.mrb[0].mxu0
        %4459 = vmatprep.mubr.bf16.mxu0 %v4125
        %4460 = vmatmul.mubr.bf16.gmra.mrb[0].mxu0 %v4124
        %v4461 = vpop.f32.mrb[0].mxu0
        %v4462 = vadd.f32 %v4217, %v4461
        %v4463 = vpop.f32.mrb[0].mxu0
        %v4464 = vpop.f32.mrb[0].mxu0
        %v4465 = vadd.f32 %v4217, %v4464
        %v4466 = vpop.f32.mrb[0].mxu0
        %4467 = vmatprep.mubr.bf16.mxu0 %v4129
        %4468 = vmatmul.mubr.bf16.gmra.mrb[0].mxu0 %v4128
        %v4469 = vpop.f32.mrb[0].mxu0
        %v4470 = vadd.f32 %v4217, %v4469
        %v4471 = vpop.f32.mrb[0].mxu0
        %v4472 = vpop.f32.mrb[0].mxu0
        %v4473 = vadd.f32 %v4217, %v4472
        %v4474 = vpop.f32.mrb[0].mxu0
        %4475 = vmatprep.mubr.bf16.mxu0 %v4133
        %4476 = vmatmul.mubr.bf16.gmra.mrb[0].mxu0 %v4132
        %v4477 = vpop.f32.mrb[0].mxu0
        %v4478 = vadd.f32 %v4217, %v4477
        %v4479 = vpop.f32.mrb[0].mxu0
        %v4480 = vpop.f32.mrb[0].mxu0
        %v4481 = vadd.f32 %v4217, %v4480
        %v4482 = vpop.f32.mrb[0].mxu0
        %4483 = vmatprep.mubr.bf16.mxu0 %v4137
        %4484 = vmatmul.mubr.bf16.gmra.mrb[0].mxu0 %v4136
        %v4485 = vpop.f32.mrb[0].mxu0
        %v4486 = vadd.f32 %v4217, %v4485
        %v4487 = vpop.f32.mrb[0].mxu0
        %v4488 = vpop.f32.mrb[0].mxu0
        %v4489 = vadd.f32 %v4217, %v4488
        %v4490 = vpop.f32.mrb[0].mxu0
        %4491 = vmatprep.mubr.bf16.mxu0 %v4141
        %4492 = vmatmul.mubr.bf16.gmra.mrb[0].mxu0 %v4140
        %v4493 = vpop.f32.mrb[0].mxu0
        %v4494 = vadd.f32 %v4217, %v4493
        %v4495 = vpop.f32.mrb[0].mxu0
        %v4496 = vpop.f32.mrb[0].mxu0
        %v4497 = vadd.f32 %v4217, %v4496
        %v4498 = vpop.f32.mrb[0].mxu0
        %4499 = vmatprep.mubr.bf16.mxu0 %v4145
        %4500 = vmatmul.mubr.bf16.gmra.mrb[0].mxu0 %v4144
        %v4501 = vpop.f32.mrb[0].mxu0
        %v4502 = vadd.f32 %v4217, %v4501
        %v4503 = vpop.f32.mrb[0].mxu0
        %v4504 = vpop.f32.mrb[0].mxu0
        %v4505 = vadd.f32 %v4217, %v4504
        %v4506 = vpop.f32.mrb[0].mxu0
        %4507 = vdwg.mxu0
        %4508 = vmatprep.subr.bf16.mxu0 0
        %4509 = vmatpush1.bf16.msra.mxu0 %v4363
        %4510 = vmatprep.subr.bf16.mxu0 0
        %4511 = vmatpush1.bf16.msra.mxu0 %v4364
        %4512 = vmatprep.subr.bf16.mxu0 0
        %4513 = vmatpush1.bf16.msra.mxu0 %v4365
        %4514 = vmatprep.subr.bf16.mxu0 0
        %4515 = vmatpush1.bf16.msra.mxu0 %v4366
        %4516 = vmatprep.subr.bf16.mxu0 0
        %4517 = vmatpush1.bf16.msra.mxu0 %v4367
        %4518 = vmatprep.subr.bf16.mxu0 0
        %4519 = vmatpush1.bf16.msra.mxu0 %v4368
        %4520 = vmatprep.subr.bf16.mxu0 0
        %4521 = vmatpush1.bf16.msra.mxu0 %v4369
        %4522 = vmatprep.subr.bf16.mxu0 0
        %4523 = vmatpush1.bf16.msra.mxu0 %v4370
        %4524 = vmatprep.subr.bf16.mxu0 0
        %4525 = vmatpush1.bf16.msra.mxu0 %v4371
        %4526 = vmatprep.subr.bf16.mxu0 0
        %4527 = vmatpush1.bf16.msra.mxu0 %v4372
        %4528 = vmatprep.subr.bf16.mxu0 0
        %4529 = vmatpush1.bf16.msra.mxu0 %v4373
        %4530 = vmatprep.subr.bf16.mxu0 0
        %4531 = vmatpush1.bf16.msra.mxu0 %v4374
        %4532 = vmatprep.subr.bf16.mxu0 0
        %4533 = vmatpush1.bf16.msra.mxu0 %v4375
        %4534 = vmatprep.subr.bf16.mxu0 0
        %4535 = vmatpush1.bf16.msra.mxu0 %v4376
        %4536 = vmatprep.subr.bf16.mxu0 0
        %4537 = vmatpush1.bf16.msra.mxu0 %v4377
        %4538 = vmatprep.subr.bf16.mxu0 0
        %4539 = vmatpush1.bf16.msra.mxu0 %v4378
        %4540 = vmatprep.mubr.bf16.mxu0 %v4119
        %4541 = vmatmul.mubr.bf16.gmra.mrb[0].mxu0 %v4118
        %v4542 = vpop.f32.mrb[0].mxu0
        %v4543 = vadd.f32 %v4446, %v4542
        %v4544 = vpop.f32.mrb[0].mxu0
        %v4545 = vpop.f32.mrb[0].mxu0
        %v4546 = vadd.f32 %v4449, %v4545
        %v4547 = vpop.f32.mrb[0].mxu0
        %4548 = vmatprep.mubr.bf16.mxu0 %v4123
        %4549 = vmatmul.mubr.bf16.gmra.mrb[0].mxu0 %v4122
        %v4550 = vpop.f32.mrb[0].mxu0
        %v4551 = vadd.f32 %v4454, %v4550
        %v4552 = vpop.f32.mrb[0].mxu0
        %v4553 = vpop.f32.mrb[0].mxu0
        %v4554 = vadd.f32 %v4457, %v4553
        %v4555 = vpop.f32.mrb[0].mxu0
        %4556 = vmatprep.mubr.bf16.mxu0 %v4127
        %4557 = vmatmul.mubr.bf16.gmra.mrb[0].mxu0 %v4126
        %v4558 = vpop.f32.mrb[0].mxu0
        %v4559 = vadd.f32 %v4462, %v4558
        %v4560 = vpop.f32.mrb[0].mxu0
        %v4561 = vpop.f32.mrb[0].mxu0
        %v4562 = vadd.f32 %v4465, %v4561
        %v4563 = vpop.f32.mrb[0].mxu0
        %4564 = vmatprep.mubr.bf16.mxu0 %v4131
        %4565 = vmatmul.mubr.bf16.gmra.mrb[0].mxu0 %v4130
        %v4566 = vpop.f32.mrb[0].mxu0
        %v4567 = vadd.f32 %v4470, %v4566
        %v4568 = vpop.f32.mrb[0].mxu0
        %v4569 = vpop.f32.mrb[0].mxu0
        %v4570 = vadd.f32 %v4473, %v4569
        %v4571 = vpop.f32.mrb[0].mxu0
        %4572 = vmatprep.mubr.bf16.mxu0 %v4135
        %4573 = vmatmul.mubr.bf16.gmra.mrb[0].mxu0 %v4134
        %v4574 = vpop.f32.mrb[0].mxu0
        %v4575 = vadd.f32 %v4478, %v4574
        %v4576 = vpop.f32.mrb[0].mxu0
        %v4577 = vpop.f32.mrb[0].mxu0
        %v4578 = vadd.f32 %v4481, %v4577
        %v4579 = vpop.f32.mrb[0].mxu0
        %4580 = vmatprep.mubr.bf16.mxu0 %v4139
        %4581 = vmatmul.mubr.bf16.gmra.mrb[0].mxu0 %v4138
        %v4582 = vpop.f32.mrb[0].mxu0
        %v4583 = vadd.f32 %v4486, %v4582
        %v4584 = vpop.f32.mrb[0].mxu0
        %v4585 = vpop.f32.mrb[0].mxu0
        %v4586 = vadd.f32 %v4489, %v4585
        %v4587 = vpop.f32.mrb[0].mxu0
        %4588 = vmatprep.mubr.bf16.mxu0 %v4143
        %4589 = vmatmul.mubr.bf16.gmra.mrb[0].mxu0 %v4142
        %v4590 = vpop.f32.mrb[0].mxu0
        %v4591 = vadd.f32 %v4494, %v4590
        %v4592 = vpop.f32.mrb[0].mxu0
        %v4593 = vpop.f32.mrb[0].mxu0
        %v4594 = vadd.f32 %v4497, %v4593
        %v4595 = vpop.f32.mrb[0].mxu0
        %4596 = vmatprep.mubr.bf16.mxu0 %v4147
        %4597 = vmatmul.mubr.bf16.gmra.mrb[0].mxu0 %v4146
        %v4598 = vpop.f32.mrb[0].mxu0
        %v4599 = vadd.f32 %v4502, %v4598
        %v4600 = vpop.f32.mrb[0].mxu0
        %v4601 = vpop.f32.mrb[0].mxu0
        %v4602 = vadd.f32 %v4505, %v4601
        %v4603 = vpop.f32.mrb[0].mxu0
        %4604 = vdwg.mxu0
        %v4605 = vmax.f32 %v4543, %v4546
        %v4606 = vrot.slane %v4605, 4
        %v4607 = vmax.f32 %v4605, %v4606
        %v4608 = vrot.slane %v4607, 2
        %v4609 = vmax.f32 %v4607, %v4608
        %v4610 = vrot.slane %v4609, 1
        %v4611 = vmax.f32 %v4609, %v4610
        %v4612 = vmax.f32 %v4551, %v4554
        %v4613 = vrot.slane %v4612, 4
        %v4614 = vmax.f32 %v4612, %v4613
        %v4615 = vrot.slane %v4614, 2
        %v4616 = vmax.f32 %v4614, %v4615
        %v4617 = vrot.slane %v4616, 1
        %v4618 = vmax.f32 %v4616, %v4617
        %v4619 = vmax.f32 %v4559, %v4562
        %v4620 = vrot.slane %v4619, 4
        %v4621 = vmax.f32 %v4619, %v4620
        %v4622 = vrot.slane %v4621, 2
        %v4623 = vmax.f32 %v4621, %v4622
        %v4624 = vrot.slane %v4623, 1
        %v4625 = vmax.f32 %v4623, %v4624
        %v4626 = vmax.f32 %v4567, %v4570
        %v4627 = vrot.slane %v4626, 4
        %v4628 = vmax.f32 %v4626, %v4627
        %v4629 = vrot.slane %v4628, 2
        %v4630 = vmax.f32 %v4628, %v4629
        %v4631 = vrot.slane %v4630, 1
        %v4632 = vmax.f32 %v4630, %v4631
        %v4633 = vmax.f32 %v4575, %v4578
        %v4634 = vrot.slane %v4633, 4
        %v4635 = vmax.f32 %v4633, %v4634
        %v4636 = vrot.slane %v4635, 2
        %v4637 = vmax.f32 %v4635, %v4636
        %v4638 = vrot.slane %v4637, 1
        %v4639 = vmax.f32 %v4637, %v4638
        %v4640 = vmax.f32 %v4583, %v4586
        %v4641 = vrot.slane %v4640, 4
        %v4642 = vmax.f32 %v4640, %v4641
        %v4643 = vrot.slane %v4642, 2
        %v4644 = vmax.f32 %v4642, %v4643
        %v4645 = vrot.slane %v4644, 1
        %v4646 = vmax.f32 %v4644, %v4645
        %v4647 = vmax.f32 %v4591, %v4594
        %v4648 = vrot.slane %v4647, 4
        %v4649 = vmax.f32 %v4647, %v4648
        %v4650 = vrot.slane %v4649, 2
        %v4651 = vmax.f32 %v4649, %v4650
        %v4652 = vrot.slane %v4651, 1
        %v4653 = vmax.f32 %v4651, %v4652
        %v4654 = vmax.f32 %v4599, %v4602
        %v4655 = vrot.slane %v4654, 4
        %v4656 = vmax.f32 %v4654, %v4655
        %v4657 = vrot.slane %v4656, 2
        %v4658 = vmax.f32 %v4656, %v4657
        %v4659 = vrot.slane %v4658, 1
        %v4660 = vmax.f32 %v4658, %v4659
        %v4669 = vsel %vm2823, %v4618, %v4611
        %v4670 = vsel %vm2825, %v4625, %v4669
        %v4671 = vsel %vm2827, %v4632, %v4670
        %v4672 = vsel %vm2829, %v4639, %v4671
        %v4673 = vsel %vm2831, %v4646, %v4672
        %v4674 = vsel %vm2833, %v4653, %v4673
        %v4675 = vsel %vm2835, %v4660, %v4674
        %4677 = vst [vmem:[%s498] sm:$0xff] %v4675
        %s4678 = sand.u32 %s255, 1
        %s4679 = scalar_lea.sflag [#allocation4], %s4678
        %s4680 = sand.u32 %s255, 1
        %s4681 = smul.addr %s4680, 8
        %s4682 = scalar_lea.vmem [#allocation19], %s4681
        // Predicated region
        $region101: #{tpu_custom_call.1} parent=59 // pred_check
          %p4683 = pneg %p265
        $region102: #{tpu_custom_call.1} parent=59 // pred_check_branch
          %4685 = sbr.rel (%p4683) target = $region104
        $region103: #{tpu_custom_call.1} parent=59 // pred_region
          %s4687 = ssub.s32 128, 128
          %4688 = vsyncadd %s4679, %s4687
          %s4689 = smul.addr %s32, 128
          %s4690 = scalar_lea.hbm %s10, %s4689
          %s4692 = sshll.u32 %s4682, 4
          %s4693 = int_to_ptr.vmem [resolvable:$true] %s4692
          %4695 = dma.vmem_to_hbm [thread:$0]  %s4693, 128, %s4690, %s4679
        $region104: #{tpu_custom_call.1} parent=59 // pred_fallthru
          _
      $region60: #{tpu_custom_call.1} parent=5 // pred_fallthru
        _
      %p4696 = scmp.le.s32.totalorder 2, %s27
      // Predicated region
      $region105: #{tpu_custom_call.1} parent=5 // pred_check
        %p4697 = pneg %p4696
      $region106: #{tpu_custom_call.1} parent=5 // pred_check_branch
        %4699 = sbr.rel (%p4697) target = $region108
      $region107: #{tpu_custom_call.1} parent=5 // pred_region
        %s4700 = ssub.s32 %s27, 2
        // Predicated region
        $region109: #{tpu_custom_call.1} parent=107 // pred_check
          %p4701 = pneg %p271
        $region110: #{tpu_custom_call.1} parent=107 // pred_check_branch
          %4703 = sbr.rel (%p4701) target = $region112
        $region111: #{tpu_custom_call.1} parent=107 // pred_region
          %s4704 = sand.u32 %s256, 1
          %s4705 = scalar_lea.sflag [#allocation4], %s4704
          %s4706 = sand.u32 %s256, 1
          %s4707 = smul.addr %s4706, 8
          %s4708 = scalar_lea.vmem [#allocation19], %s4707
          %4709 = dma.done %s4705, 128
        $region112: #{tpu_custom_call.1} parent=107 // pred_fallthru
          _
      $region108: #{tpu_custom_call.1} parent=5 // pred_fallthru
        _
    $region6: #{tpu_custom_call.1} parent=1 // loop_footer
      %s31 = sadd.s32 1, %s27
    $region7: #{tpu_custom_call.1} parent=1 // loop_footer_branch
      %26 = sbr.rel target = $region3
    $region8: #{tpu_custom_call.1} parent=1 // loop_exit
      _
    %4710 = vsyncpa [#allocation3], 1
    %s4711 = scalar_lea.sflag [#allocation3], 1
    %4712 = vsyncpa %s4711, 1
    %4713 = vsyncpa [#allocation6], 1
    %4714 = vsyncpa [#allocation9], 1
    %4715 = vsyncpa [#allocation12], 1
    %4716 = vsyncpa [#allocation15], 1
    %4717 = vsyncpa [#allocation18], 1
    %4718 = vsyncpa [#allocation4], 1
    %s4719 = scalar_lea.sflag [#allocation4], 1
    %4720 = vsyncpa %s4719, 1

</llo_original>
